<compile_context>
chip_gen: v7x
topology: tpu7x:2x2x1
jax: 0.10.0
libtpu: 0.0.40
codegen_flags: <defaults>
</compile_context>

<pallas_src>
import functools

import jax
import jax.numpy as jnp
import numpy as np
from jax.experimental import pallas as pl
from jax.experimental.pallas import tpu as pltpu

IMG = 28  # the module fixes 28x28 single-channel inputs


def _round_up(v, m):
    return ((v + m - 1) // m) * m


def _geometry(M1, M2, stride):
    """Static conv geometry + per-tap offsets into the flattened image.

    For stride==1 the flat image is the raw 784-wide row and tap (i,j) is the
    dense slice starting at i*28+j.  For stride>1 the wrapper lays the
    stride*stride polyphase components of the image out consecutively (each
    padded to Hc x Wc); tap (i,j) is then again a DENSE slice (of length
    H_out*Wc) of that buffer -> no lane-strided loads for any stride.
    """
    H_out = (IMG - M1) // stride + 1
    W_out = (IMG - M2) // stride + 1
    Hc = -(-IMG // stride)          # ceil(28/stride)
    Wc = -(-IMG // stride)
    comp = Hc * Wc                  # size of one polyphase component
    L = H_out * Wc                  # flat conv rows, pitch Wc (cols >= W_out junk)
    Lpad = _round_up(L, 128)        # lane-aligned per-channel slab width
    offs = []
    for i in range(M1):
        for j in range(M2):
            p, di = i % stride, i // stride
            q, dj = j % stride, j // stride
            offs.append((p * stride + q) * comp + di * Wc + dj)
    xlen = max(stride * stride * comp, max(offs) + L)
    return H_out, W_out, Hc, Wc, L, Lpad, tuple(offs), xlen


# ------------------------------ Pallas kernel ------------------------------

def _cnn_fused_kernel(x_ref, cw_ref, cb_ref, dw_ref, db_ref, z_ref, y_ref,
                      *, offs, L, Lpad, M3):
    # x_ref : (TB, xlen)      VMEM  flattened (polyphase) padded images
    # cw_ref: (M3, M1*M2)     SMEM  conv weights (broadcast scalars)
    # cb_ref: (M3,)           SMEM  conv bias
    # dw_ref: (M3, L, Kp)     VMEM  dense weight, pre-permuted, junk cols zeroed
    # db_ref: (1, Kp)         VMEM  dense bias (zero padded to Kp lanes)
    # z_ref : (TB, M3*Lpad)   VMEM  conv pre-activation, batch-major, 128-aligned
    # y_ref : (TB, Kp)        VMEM  dense output (K padded to 128 lanes)
    TB = x_ref.shape[0]
    Kp = dw_ref.shape[2]

    # Init each channel slab with its bias (also defines the pad stripe).
    for c in range(M3):
        z_ref[:, c * Lpad:(c + 1) * Lpad] = jnp.full((TB, Lpad), cb_ref[c],
                                                     jnp.float32)

    # Conv, tap-outer: load each shifted tap ONCE, FMA into every channel's
    # VMEM-resident accumulator (the z output block itself).
    for t, off in enumerate(offs):
        tap = x_ref[:, off:off + L]                       # dense unaligned slice
        for c in range(M3):
            z_ref[:, c * Lpad:c * Lpad + L] += cw_ref[c, t] * tap

    # ReLU + dense: per-channel (TB, L) @ (L, Kp) MXU matmuls accumulated
    # directly into the y output ref (explicit VMEM home for the accumulator).
    y_ref[...] = db_ref[...] + jnp.zeros((TB, Kp), jnp.float32)
    for c in range(M3):
        v = jnp.maximum(z_ref[:, c * Lpad:c * Lpad + L], 0.0)
        y_ref[...] += jnp.dot(v, dw_ref[c], preferred_element_type=jnp.float32)


# ------------------------------ Wrappers ------------------------------

def prepare_params(conv_w, conv_b, dense_w, dense_b, *, M1, M2, M3, K, stride):
    """One-time weight re-layout.  Keep OUTSIDE the jitted forward."""
    H_out, W_out, _, Wc, L, _, _, _ = _geometry(M1, M2, stride)
    Kp = _round_up(K, 128)

    cwf = jnp.asarray(conv_w, jnp.float32).reshape(M3, M1 * M2)
    cbf = jnp.asarray(conv_b, jnp.float32).reshape(M3)

    # dense_w: (K, F) with f = c*H_out*W_out + h*W_out + w  (torch NCHW flatten)
    dw4 = jnp.asarray(dense_w, jnp.float32).reshape(K, M3, H_out, W_out)
    dw4 = jnp.pad(dw4, ((0, Kp - K), (0, 0), (0, 0), (0, Wc - W_out)))  # zero junk cols
    dwp = jnp.transpose(dw4, (1, 2, 3, 0)).reshape(M3, L, Kp)           # (M3, L, Kp)
    dbp = jnp.pad(jnp.asarray(dense_b, jnp.float32), (0, Kp - K)).reshape(1, Kp)
    return cwf, cbf, dwp, dbp


@functools.partial(jax.jit,
                   static_argnames=("M1", "M2", "M3", "K", "stride", "batch_tile"))
def cnn_forward(x, cwf, cbf, dwp, dbp, *, M1, M2, M3, K, stride, batch_tile=128):
    """Mirrors CNN.forward: returns (y_hat (N,K), z_1 (N,M3,H,W), v_1 (N,M3,H,W))."""
    N = x.shape[0]
    H_out, W_out, Hc, Wc, L, Lpad, offs, xlen = _geometry(M1, M2, stride)
    Kp = dwp.shape[2]

    TB = min(batch_tile, _round_up(N, 8))    # don't pad tiny batches to 128
    Npad = _round_up(N, TB)

    x2 = jnp.asarray(x, jnp.float32).reshape(N, IMG * IMG)
    if stride == 1:
        xf = x2
    else:
        # Polyphase rearrangement so the kernel's taps stay dense slices.
        img = x2.reshape(N, IMG, IMG)
        comps = []
        for p in range(stride):
            for q in range(stride):
                cpq = img[:, p::stride, q::stride]
                cpq = jnp.pad(cpq, ((0, 0), (0, Hc - cpq.shape[1]),
                                    (0, Wc - cpq.shape[2])))
                comps.append(cpq.reshape(N, Hc * Wc))
        xf = jnp.concatenate(comps, axis=1)
    xf = jnp.pad(xf, ((0, Npad - N), (0, xlen - xf.shape[1])))

    kernel = functools.partial(_cnn_fused_kernel, offs=offs, L=L, Lpad=Lpad, M3=M3)

    flops = 2 * Npad * M3 * L * len(offs) + 2 * Npad * M3 * L * Kp
    bytes_accessed = 4 * (Npad * xlen + Npad * M3 * Lpad + Npad * Kp
                          + M3 * L * Kp + M3 * len(offs) + M3 + Kp)

    z_flat, y_p = pl.pallas_call(
        kernel,
        out_shape=(
            jax.ShapeDtypeStruct((Npad, M3 * Lpad), jnp.float32),   # z, batch-major
            jax.ShapeDtypeStruct((Npad, Kp), jnp.float32),          # y, K padded
        ),
        grid=(Npad // TB,),
        in_specs=[
            pl.BlockSpec((TB, xlen), lambda b: (b, 0)),             # images
            pl.BlockSpec(memory_space=pltpu.MemorySpace.SMEM),      # conv weights
            pl.BlockSpec(memory_space=pltpu.MemorySpace.SMEM),      # conv bias
            pl.BlockSpec((M3, L, Kp), lambda b: (0, 0, 0)),         # dense weight
            pl.BlockSpec((1, Kp), lambda b: (0, 0)),                # dense bias
        ],
        out_specs=(
            pl.BlockSpec((TB, M3 * Lpad), lambda b: (b, 0)),
            pl.BlockSpec((TB, Kp), lambda b: (b, 0)),
        ),
        compiler_params=pltpu.CompilerParams(
            dimension_semantics=("parallel",),
            vmem_limit_bytes=48 * 1024 * 1024),
        cost_estimate=pl.CostEstimate(
            flops=flops, transcendentals=0, bytes_accessed=bytes_accessed),
    )(xf, cwf, cbf, dwp, dbp)

    y_hat = y_p[:N, :K]
    # batch-major flat z -> NCHW: reshape + column slices only (no transpose).
    z_1 = (z_flat[:N].reshape(N, M3, Lpad)[:, :, :L]
           .reshape(N, M3, H_out, Wc)[..., :W_out])
    v_1 = jnp.maximum(z_1, 0.0)        # ReLU fused into the glue pass, not the kernel
    return y_hat, z_1, v_1


# --------------------------------- Driver ----------------------------------

def _reference(x, conv_w, conv_b, dense_w, dense_b, stride):
    N = x.shape[0]
    M3 = conv_w.shape[0]
    img = x.reshape(N, 1, IMG, IMG)
    z = jax.lax.conv_general_dilated(
        img, conv_w, window_strides=(stride, stride), padding="VALID",
        dimension_numbers=("NCHW", "OIHW", "NCHW")) + conv_b.reshape(1, M3, 1, 1)
    v = jnp.maximum(z, 0.0)
    y = v.reshape(N, -1) @ dense_w.T + dense_b
    return y, z, v


def _run_case(key, N, M1, M2, M3, K, stride):
    H_out = (IMG - M1) // stride + 1
    W_out = (IMG - M2) // stride + 1
    F = M3 * H_out * W_out
    kx, kcw, kcb, kdw, kdb = jax.random.split(key, 5)

    x = jax.random.normal(kx, (N, IMG * IMG), dtype=jnp.float32)
    conv_w = 0.1 * jax.random.normal(kcw, (M3, 1, M1, M2), dtype=jnp.float32)
    conv_b = 0.1 * jax.random.normal(kcb, (M3,), dtype=jnp.float32)
    dense_w = 0.05 * jax.random.normal(kdw, (K, F), dtype=jnp.float32)
    dense_b = 0.05 * jax.random.normal(kdb, (K,), dtype=jnp.float32)

    params = prepare_params(conv_w, conv_b, dense_w, dense_b,
                            M1=M1, M2=M2, M3=M3, K=K, stride=stride)
    y_hat, z_1, v_1 = cnn_forward(x, *params,
                                  M1=M1, M2=M2, M3=M3, K=K, stride=stride)
    jax.block_until_ready((y_hat, z_1, v_1))

    assert y_hat.shape == (N, K)
    assert z_1.shape == (N, M3, H_out, W_out)
    assert v_1.shape == (N, M3, H_out, W_out)

    y_ref, z_ref, v_ref = _reference(x, conv_w, conv_b, dense_w, dense_b, stride)
    np.testing.assert_allclose(np.asarray(z_1), np.asarray(z_ref), rtol=1e-2, atol=1e-2)
    np.testing.assert_allclose(np.asarray(v_1), np.asarray(v_ref), rtol=1e-2, atol=1e-2)
    np.testing.assert_allclose(np.asarray(y_hat), np.asarray(y_ref), rtol=5e-2, atol=5e-2)


if __name__ == "__main__":
    key = jax.random.PRNGKey(0)
    k1, k2 = jax.random.split(key)
    # Small shapes consistent with the module (28x28 single-channel images).
    _run_case(k1, N=2, M1=3, M2=3, M3=4, K=10, stride=1)
    # stride>1 (module requires (28-M) divisible by stride) -> polyphase path.
    _run_case(k2, N=5, M1=4, M2=4, M3=3, K=7, stride=2)
    print("KERNEL_OK")
</pallas_src>

<mosaic_0001>
module attributes {stable_mosaic.version = 11 : i64} {
  func.func @_cnn_fused_kernel(%arg0: i32, %arg1: memref<8x786xf32, #tpu.memory_space<vmem>>, %arg2: memref<4x9xf32, #tpu.memory_space<smem>>, %arg3: memref<4xf32, #tpu.memory_space<smem>>, %arg4: memref<4x728x128xf32, #tpu.memory_space<vmem>>, %arg5: memref<1x128xf32, #tpu.memory_space<vmem>>, %arg6: memref<8x3072xf32, #tpu.memory_space<vmem>>, %arg7: memref<8x128xf32, #tpu.memory_space<vmem>>) attributes {dimension_semantics = [#tpu.dimension_semantics<parallel>], iteration_bounds = array<i64: 1>, scalar_prefetch = 0 : i64, scratch_operands = 0 : i64, tpu.core_type = #tpu.core_type<tc>, window_params = [{transform_indices = @transform_0, window_bounds = array<i64: 8, 786>}, {transform_indices = @transform_1, window_bounds = array<i64: 4, 9>}, {transform_indices = @transform_2, window_bounds = array<i64: 4>}, {pipeline_mode = #tpu.pipeline_mode<synchronous>, transform_indices = @transform_3, window_bounds = array<i64: 4, 728, 128>}, {pipeline_mode = #tpu.pipeline_mode<synchronous>, transform_indices = @transform_4, window_bounds = array<i64: 1, 128>}, {transform_indices = @transform_5, window_bounds = array<i64: 8, 3072>}, {transform_indices = @transform_6, window_bounds = array<i64: 8, 128>}]} {
    %c0 = arith.constant 0 : index
    %0 = memref.load %arg3[%c0] : memref<4xf32, #tpu.memory_space<smem>>
    %1 = vector.broadcast %0 : f32 to vector<8x768xf32>
    %c0_0 = arith.constant 0 : index
    %c0_1 = arith.constant 0 : index
    %2 = vector.load %arg6[%c0_0, %c0_1] : memref<8x3072xf32, #tpu.memory_space<vmem>>, vector<8x768xf32>
    tpu.vector_store %arg6[%c0_0, %c0_1], %1 {strides = array<i32>} : memref<8x3072xf32, #tpu.memory_space<vmem>>, vector<8x768xf32>,
    %c1 = arith.constant 1 : index
    %3 = memref.load %arg3[%c1] : memref<4xf32, #tpu.memory_space<smem>>
    %4 = vector.broadcast %3 : f32 to vector<8x768xf32>
    %c0_2 = arith.constant 0 : index
    %c768 = arith.constant 768 : index
    %5 = vector.load %arg6[%c0_2, %c768] : memref<8x3072xf32, #tpu.memory_space<vmem>>, vector<8x768xf32>
    tpu.vector_store %arg6[%c0_2, %c768], %4 {strides = array<i32>} : memref<8x3072xf32, #tpu.memory_space<vmem>>, vector<8x768xf32>,
    %c2 = arith.constant 2 : index
    %6 = memref.load %arg3[%c2] : memref<4xf32, #tpu.memory_space<smem>>
    %7 = vector.broadcast %6 : f32 to vector<8x768xf32>
    %c0_3 = arith.constant 0 : index
    %c1536 = arith.constant 1536 : index
    %8 = vector.load %arg6[%c0_3, %c1536] : memref<8x3072xf32, #tpu.memory_space<vmem>>, vector<8x768xf32>
    tpu.vector_store %arg6[%c0_3, %c1536], %7 {strides = array<i32>} : memref<8x3072xf32, #tpu.memory_space<vmem>>, vector<8x768xf32>,
    %c3 = arith.constant 3 : index
    %9 = memref.load %arg3[%c3] : memref<4xf32, #tpu.memory_space<smem>>
    %10 = vector.broadcast %9 : f32 to vector<8x768xf32>
    %c0_4 = arith.constant 0 : index
    %c2304 = arith.constant 2304 : index
    %11 = vector.load %arg6[%c0_4, %c2304] : memref<8x3072xf32, #tpu.memory_space<vmem>>, vector<8x768xf32>
    tpu.vector_store %arg6[%c0_4, %c2304], %10 {strides = array<i32>} : memref<8x3072xf32, #tpu.memory_space<vmem>>, vector<8x768xf32>,
    %c0_5 = arith.constant 0 : index
    %c0_6 = arith.constant 0 : index
    %12 = vector.load %arg1[%c0_5, %c0_6] : memref<8x786xf32, #tpu.memory_space<vmem>>, vector<8x728xf32>
    %c0_7 = arith.constant 0 : index
    %c0_8 = arith.constant 0 : index
    %13 = vector.load %arg6[%c0_7, %c0_8] : memref<8x3072xf32, #tpu.memory_space<vmem>>, vector<8x728xf32>
    %c0_9 = arith.constant 0 : index
    %c0_10 = arith.constant 0 : index
    %14 = memref.load %arg2[%c0_9, %c0_10] : memref<4x9xf32, #tpu.memory_space<smem>>
    %15 = vector.broadcast %14 : f32 to vector<8x728xf32>
    %16 = arith.mulf %15, %12 : vector<8x728xf32>
    %17 = arith.addf %13, %16 : vector<8x728xf32>
    %c0_11 = arith.constant 0 : index
    %c0_12 = arith.constant 0 : index
    %18 = vector.load %arg6[%c0_11, %c0_12] : memref<8x3072xf32, #tpu.memory_space<vmem>>, vector<8x728xf32>
    tpu.vector_store %arg6[%c0_11, %c0_12], %17 {strides = array<i32>} : memref<8x3072xf32, #tpu.memory_space<vmem>>, vector<8x728xf32>,
    %c0_13 = arith.constant 0 : index
    %c768_14 = arith.constant 768 : index
    %19 = vector.load %arg6[%c0_13, %c768_14] : memref<8x3072xf32, #tpu.memory_space<vmem>>, vector<8x728xf32>
    %c1_15 = arith.constant 1 : index
    %c0_16 = arith.constant 0 : index
    %20 = memref.load %arg2[%c1_15, %c0_16] : memref<4x9xf32, #tpu.memory_space<smem>>
    %21 = vector.broadcast %20 : f32 to vector<8x728xf32>
    %22 = arith.mulf %21, %12 : vector<8x728xf32>
    %23 = arith.addf %19, %22 : vector<8x728xf32>
    %c0_17 = arith.constant 0 : index
    %c768_18 = arith.constant 768 : index
    %24 = vector.load %arg6[%c0_17, %c768_18] : memref<8x3072xf32, #tpu.memory_space<vmem>>, vector<8x728xf32>
    tpu.vector_store %arg6[%c0_17, %c768_18], %23 {strides = array<i32>} : memref<8x3072xf32, #tpu.memory_space<vmem>>, vector<8x728xf32>,
    %c0_19 = arith.constant 0 : index
    %c1536_20 = arith.constant 1536 : index
    %25 = vector.load %arg6[%c0_19, %c1536_20] : memref<8x3072xf32, #tpu.memory_space<vmem>>, vector<8x728xf32>
    %c2_21 = arith.constant 2 : index
    %c0_22 = arith.constant 0 : index
    %26 = memref.load %arg2[%c2_21, %c0_22] : memref<4x9xf32, #tpu.memory_space<smem>>
    %27 = vector.broadcast %26 : f32 to vector<8x728xf32>
    %28 = arith.mulf %27, %12 : vector<8x728xf32>
    %29 = arith.addf %25, %28 : vector<8x728xf32>
    %c0_23 = arith.constant 0 : index
    %c1536_24 = arith.constant 1536 : index
    %30 = vector.load %arg6[%c0_23, %c1536_24] : memref<8x3072xf32, #tpu.memory_space<vmem>>, vector<8x728xf32>
    tpu.vector_store %arg6[%c0_23, %c1536_24], %29 {strides = array<i32>} : memref<8x3072xf32, #tpu.memory_space<vmem>>, vector<8x728xf32>,
    %c0_25 = arith.constant 0 : index
    %c2304_26 = arith.constant 2304 : index
    %31 = vector.load %arg6[%c0_25, %c2304_26] : memref<8x3072xf32, #tpu.memory_space<vmem>>, vector<8x728xf32>
    %c3_27 = arith.constant 3 : index
    %c0_28 = arith.constant 0 : index
    %32 = memref.load %arg2[%c3_27, %c0_28] : memref<4x9xf32, #tpu.memory_space<smem>>
    %33 = vector.broadcast %32 : f32 to vector<8x728xf32>
    %34 = arith.mulf %33, %12 : vector<8x728xf32>
    %35 = arith.addf %31, %34 : vector<8x728xf32>
    %c0_29 = arith.constant 0 : index
    %c2304_30 = arith.constant 2304 : index
    %36 = vector.load %arg6[%c0_29, %c2304_30] : memref<8x3072xf32, #tpu.memory_space<vmem>>, vector<8x728xf32>
    tpu.vector_store %arg6[%c0_29, %c2304_30], %35 {strides = array<i32>} : memref<8x3072xf32, #tpu.memory_space<vmem>>, vector<8x728xf32>,
    %c0_31 = arith.constant 0 : index
    %c1_32 = arith.constant 1 : index
    %37 = vector.load %arg1[%c0_31, %c1_32] : memref<8x786xf32, #tpu.memory_space<vmem>>, vector<8x728xf32>
    %c0_33 = arith.constant 0 : index
    %c0_34 = arith.constant 0 : index
    %38 = vector.load %arg6[%c0_33, %c0_34] : memref<8x3072xf32, #tpu.memory_space<vmem>>, vector<8x728xf32>
    %c0_35 = arith.constant 0 : index
    %c1_36 = arith.constant 1 : index
    %39 = memref.load %arg2[%c0_35, %c1_36] : memref<4x9xf32, #tpu.memory_space<smem>>
    %40 = vector.broadcast %39 : f32 to vector<8x728xf32>
    %41 = arith.mulf %40, %37 : vector<8x728xf32>
    %42 = arith.addf %38, %41 : vector<8x728xf32>
    %c0_37 = arith.constant 0 : index
    %c0_38 = arith.constant 0 : index
    %43 = vector.load %arg6[%c0_37, %c0_38] : memref<8x3072xf32, #tpu.memory_space<vmem>>, vector<8x728xf32>
    tpu.vector_store %arg6[%c0_37, %c0_38], %42 {strides = array<i32>} : memref<8x3072xf32, #tpu.memory_space<vmem>>, vector<8x728xf32>,
    %c0_39 = arith.constant 0 : index
    %c768_40 = arith.constant 768 : index
    %44 = vector.load %arg6[%c0_39, %c768_40] : memref<8x3072xf32, #tpu.memory_space<vmem>>, vector<8x728xf32>
    %c1_41 = arith.constant 1 : index
    %c1_42 = arith.constant 1 : index
    %45 = memref.load %arg2[%c1_41, %c1_42] : memref<4x9xf32, #tpu.memory_space<smem>>
    %46 = vector.broadcast %45 : f32 to vector<8x728xf32>
    %47 = arith.mulf %46, %37 : vector<8x728xf32>
    %48 = arith.addf %44, %47 : vector<8x728xf32>
    %c0_43 = arith.constant 0 : index
    %c768_44 = arith.constant 768 : index
    %49 = vector.load %arg6[%c0_43, %c768_44] : memref<8x3072xf32, #tpu.memory_space<vmem>>, vector<8x728xf32>
    tpu.vector_store %arg6[%c0_43, %c768_44], %48 {strides = array<i32>} : memref<8x3072xf32, #tpu.memory_space<vmem>>, vector<8x728xf32>,
    %c0_45 = arith.constant 0 : index
    %c1536_46 = arith.constant 1536 : index
    %50 = vector.load %arg6[%c0_45, %c1536_46] : memref<8x3072xf32, #tpu.memory_space<vmem>>, vector<8x728xf32>
    %c2_47 = arith.constant 2 : index
    %c1_48 = arith.constant 1 : index
    %51 = memref.load %arg2[%c2_47, %c1_48] : memref<4x9xf32, #tpu.memory_space<smem>>
    %52 = vector.broadcast %51 : f32 to vector<8x728xf32>
    %53 = arith.mulf %52, %37 : vector<8x728xf32>
    %54 = arith.addf %50, %53 : vector<8x728xf32>
    %c0_49 = arith.constant 0 : index
    %c1536_50 = arith.constant 1536 : index
    %55 = vector.load %arg6[%c0_49, %c1536_50] : memref<8x3072xf32, #tpu.memory_space<vmem>>, vector<8x728xf32>
    tpu.vector_store %arg6[%c0_49, %c1536_50], %54 {strides = array<i32>} : memref<8x3072xf32, #tpu.memory_space<vmem>>, vector<8x728xf32>,
    %c0_51 = arith.constant 0 : index
    %c2304_52 = arith.constant 2304 : index
    %56 = vector.load %arg6[%c0_51, %c2304_52] : memref<8x3072xf32, #tpu.memory_space<vmem>>, vector<8x728xf32>
    %c3_53 = arith.constant 3 : index
    %c1_54 = arith.constant 1 : index
    %57 = memref.load %arg2[%c3_53, %c1_54] : memref<4x9xf32, #tpu.memory_space<smem>>
    %58 = vector.broadcast %57 : f32 to vector<8x728xf32>
    %59 = arith.mulf %58, %37 : vector<8x728xf32>
    %60 = arith.addf %56, %59 : vector<8x728xf32>
    %c0_55 = arith.constant 0 : index
    %c2304_56 = arith.constant 2304 : index
    %61 = vector.load %arg6[%c0_55, %c2304_56] : memref<8x3072xf32, #tpu.memory_space<vmem>>, vector<8x728xf32>
    tpu.vector_store %arg6[%c0_55, %c2304_56], %60 {strides = array<i32>} : memref<8x3072xf32, #tpu.memory_space<vmem>>, vector<8x728xf32>,
    %c0_57 = arith.constant 0 : index
    %c2_58 = arith.constant 2 : index
    %62 = vector.load %arg1[%c0_57, %c2_58] : memref<8x786xf32, #tpu.memory_space<vmem>>, vector<8x728xf32>
    %c0_59 = arith.constant 0 : index
    %c0_60 = arith.constant 0 : index
    %63 = vector.load %arg6[%c0_59, %c0_60] : memref<8x3072xf32, #tpu.memory_space<vmem>>, vector<8x728xf32>
    %c0_61 = arith.constant 0 : index
    %c2_62 = arith.constant 2 : index
    %64 = memref.load %arg2[%c0_61, %c2_62] : memref<4x9xf32, #tpu.memory_space<smem>>
    %65 = vector.broadcast %64 : f32 to vector<8x728xf32>
    %66 = arith.mulf %65, %62 : vector<8x728xf32>
    %67 = arith.addf %63, %66 : vector<8x728xf32>
    %c0_63 = arith.constant 0 : index
    %c0_64 = arith.constant 0 : index
    %68 = vector.load %arg6[%c0_63, %c0_64] : memref<8x3072xf32, #tpu.memory_space<vmem>>, vector<8x728xf32>
    tpu.vector_store %arg6[%c0_63, %c0_64], %67 {strides = array<i32>} : memref<8x3072xf32, #tpu.memory_space<vmem>>, vector<8x728xf32>,
    %c0_65 = arith.constant 0 : index
    %c768_66 = arith.constant 768 : index
    %69 = vector.load %arg6[%c0_65, %c768_66] : memref<8x3072xf32, #tpu.memory_space<vmem>>, vector<8x728xf32>
    %c1_67 = arith.constant 1 : index
    %c2_68 = arith.constant 2 : index
    %70 = memref.load %arg2[%c1_67, %c2_68] : memref<4x9xf32, #tpu.memory_space<smem>>
    %71 = vector.broadcast %70 : f32 to vector<8x728xf32>
    %72 = arith.mulf %71, %62 : vector<8x728xf32>
    %73 = arith.addf %69, %72 : vector<8x728xf32>
    %c0_69 = arith.constant 0 : index
    %c768_70 = arith.constant 768 : index
    %74 = vector.load %arg6[%c0_69, %c768_70] : memref<8x3072xf32, #tpu.memory_space<vmem>>, vector<8x728xf32>
    tpu.vector_store %arg6[%c0_69, %c768_70], %73 {strides = array<i32>} : memref<8x3072xf32, #tpu.memory_space<vmem>>, vector<8x728xf32>,
    %c0_71 = arith.constant 0 : index
    %c1536_72 = arith.constant 1536 : index
    %75 = vector.load %arg6[%c0_71, %c1536_72] : memref<8x3072xf32, #tpu.memory_space<vmem>>, vector<8x728xf32>
    %c2_73 = arith.constant 2 : index
    %c2_74 = arith.constant 2 : index
    %76 = memref.load %arg2[%c2_73, %c2_74] : memref<4x9xf32, #tpu.memory_space<smem>>
    %77 = vector.broadcast %76 : f32 to vector<8x728xf32>
    %78 = arith.mulf %77, %62 : vector<8x728xf32>
    %79 = arith.addf %75, %78 : vector<8x728xf32>
    %c0_75 = arith.constant 0 : index
    %c1536_76 = arith.constant 1536 : index
    %80 = vector.load %arg6[%c0_75, %c1536_76] : memref<8x3072xf32, #tpu.memory_space<vmem>>, vector<8x728xf32>
    tpu.vector_store %arg6[%c0_75, %c1536_76], %79 {strides = array<i32>} : memref<8x3072xf32, #tpu.memory_space<vmem>>, vector<8x728xf32>,
    %c0_77 = arith.constant 0 : index
    %c2304_78 = arith.constant 2304 : index
    %81 = vector.load %arg6[%c0_77, %c2304_78] : memref<8x3072xf32, #tpu.memory_space<vmem>>, vector<8x728xf32>
    %c3_79 = arith.constant 3 : index
    %c2_80 = arith.constant 2 : index
    %82 = memref.load %arg2[%c3_79, %c2_80] : memref<4x9xf32, #tpu.memory_space<smem>>
    %83 = vector.broadcast %82 : f32 to vector<8x728xf32>
    %84 = arith.mulf %83, %62 : vector<8x728xf32>
    %85 = arith.addf %81, %84 : vector<8x728xf32>
    %c0_81 = arith.constant 0 : index
    %c2304_82 = arith.constant 2304 : index
    %86 = vector.load %arg6[%c0_81, %c2304_82] : memref<8x3072xf32, #tpu.memory_space<vmem>>, vector<8x728xf32>
    tpu.vector_store %arg6[%c0_81, %c2304_82], %85 {strides = array<i32>} : memref<8x3072xf32, #tpu.memory_space<vmem>>, vector<8x728xf32>,
    %c0_83 = arith.constant 0 : index
    %c28 = arith.constant 28 : index
    %87 = vector.load %arg1[%c0_83, %c28] : memref<8x786xf32, #tpu.memory_space<vmem>>, vector<8x728xf32>
    %c0_84 = arith.constant 0 : index
    %c0_85 = arith.constant 0 : index
    %88 = vector.load %arg6[%c0_84, %c0_85] : memref<8x3072xf32, #tpu.memory_space<vmem>>, vector<8x728xf32>
    %c0_86 = arith.constant 0 : index
    %c3_87 = arith.constant 3 : index
    %89 = memref.load %arg2[%c0_86, %c3_87] : memref<4x9xf32, #tpu.memory_space<smem>>
    %90 = vector.broadcast %89 : f32 to vector<8x728xf32>
    %91 = arith.mulf %90, %87 : vector<8x728xf32>
    %92 = arith.addf %88, %91 : vector<8x728xf32>
    %c0_88 = arith.constant 0 : index
    %c0_89 = arith.constant 0 : index
    %93 = vector.load %arg6[%c0_88, %c0_89] : memref<8x3072xf32, #tpu.memory_space<vmem>>, vector<8x728xf32>
    tpu.vector_store %arg6[%c0_88, %c0_89], %92 {strides = array<i32>} : memref<8x3072xf32, #tpu.memory_space<vmem>>, vector<8x728xf32>,
    %c0_90 = arith.constant 0 : index
    %c768_91 = arith.constant 768 : index
    %94 = vector.load %arg6[%c0_90, %c768_91] : memref<8x3072xf32, #tpu.memory_space<vmem>>, vector<8x728xf32>
    %c1_92 = arith.constant 1 : index
    %c3_93 = arith.constant 3 : index
    %95 = memref.load %arg2[%c1_92, %c3_93] : memref<4x9xf32, #tpu.memory_space<smem>>
    %96 = vector.broadcast %95 : f32 to vector<8x728xf32>
    %97 = arith.mulf %96, %87 : vector<8x728xf32>
    %98 = arith.addf %94, %97 : vector<8x728xf32>
    %c0_94 = arith.constant 0 : index
    %c768_95 = arith.constant 768 : index
    %99 = vector.load %arg6[%c0_94, %c768_95] : memref<8x3072xf32, #tpu.memory_space<vmem>>, vector<8x728xf32>
    tpu.vector_store %arg6[%c0_94, %c768_95], %98 {strides = array<i32>} : memref<8x3072xf32, #tpu.memory_space<vmem>>, vector<8x728xf32>,
    %c0_96 = arith.constant 0 : index
    %c1536_97 = arith.constant 1536 : index
    %100 = vector.load %arg6[%c0_96, %c1536_97] : memref<8x3072xf32, #tpu.memory_space<vmem>>, vector<8x728xf32>
    %c2_98 = arith.constant 2 : index
    %c3_99 = arith.constant 3 : index
    %101 = memref.load %arg2[%c2_98, %c3_99] : memref<4x9xf32, #tpu.memory_space<smem>>
    %102 = vector.broadcast %101 : f32 to vector<8x728xf32>
    %103 = arith.mulf %102, %87 : vector<8x728xf32>
    %104 = arith.addf %100, %103 : vector<8x728xf32>
    %c0_100 = arith.constant 0 : index
    %c1536_101 = arith.constant 1536 : index
    %105 = vector.load %arg6[%c0_100, %c1536_101] : memref<8x3072xf32, #tpu.memory_space<vmem>>, vector<8x728xf32>
    tpu.vector_store %arg6[%c0_100, %c1536_101], %104 {strides = array<i32>} : memref<8x3072xf32, #tpu.memory_space<vmem>>, vector<8x728xf32>,
    %c0_102 = arith.constant 0 : index
    %c2304_103 = arith.constant 2304 : index
    %106 = vector.load %arg6[%c0_102, %c2304_103] : memref<8x3072xf32, #tpu.memory_space<vmem>>, vector<8x728xf32>
    %c3_104 = arith.constant 3 : index
    %c3_105 = arith.constant 3 : index
    %107 = memref.load %arg2[%c3_104, %c3_105] : memref<4x9xf32, #tpu.memory_space<smem>>
    %108 = vector.broadcast %107 : f32 to vector<8x728xf32>
    %109 = arith.mulf %108, %87 : vector<8x728xf32>
    %110 = arith.addf %106, %109 : vector<8x728xf32>
    %c0_106 = arith.constant 0 : index
    %c2304_107 = arith.constant 2304 : index
    %111 = vector.load %arg6[%c0_106, %c2304_107] : memref<8x3072xf32, #tpu.memory_space<vmem>>, vector<8x728xf32>
    tpu.vector_store %arg6[%c0_106, %c2304_107], %110 {strides = array<i32>} : memref<8x3072xf32, #tpu.memory_space<vmem>>, vector<8x728xf32>,
    %c0_108 = arith.constant 0 : index
    %c29 = arith.constant 29 : index
    %112 = vector.load %arg1[%c0_108, %c29] : memref<8x786xf32, #tpu.memory_space<vmem>>, vector<8x728xf32>
    %c0_109 = arith.constant 0 : index
    %c0_110 = arith.constant 0 : index
    %113 = vector.load %arg6[%c0_109, %c0_110] : memref<8x3072xf32, #tpu.memory_space<vmem>>, vector<8x728xf32>
    %c0_111 = arith.constant 0 : index
    %c4 = arith.constant 4 : index
    %114 = memref.load %arg2[%c0_111, %c4] : memref<4x9xf32, #tpu.memory_space<smem>>
    %115 = vector.broadcast %114 : f32 to vector<8x728xf32>
    %116 = arith.mulf %115, %112 : vector<8x728xf32>
    %117 = arith.addf %113, %116 : vector<8x728xf32>
    %c0_112 = arith.constant 0 : index
    %c0_113 = arith.constant 0 : index
    %118 = vector.load %arg6[%c0_112, %c0_113] : memref<8x3072xf32, #tpu.memory_space<vmem>>, vector<8x728xf32>
    tpu.vector_store %arg6[%c0_112, %c0_113], %117 {strides = array<i32>} : memref<8x3072xf32, #tpu.memory_space<vmem>>, vector<8x728xf32>,
    %c0_114 = arith.constant 0 : index
    %c768_115 = arith.constant 768 : index
    %119 = vector.load %arg6[%c0_114, %c768_115] : memref<8x3072xf32, #tpu.memory_space<vmem>>, vector<8x728xf32>
    %c1_116 = arith.constant 1 : index
    %c4_117 = arith.constant 4 : index
    %120 = memref.load %arg2[%c1_116, %c4_117] : memref<4x9xf32, #tpu.memory_space<smem>>
    %121 = vector.broadcast %120 : f32 to vector<8x728xf32>
    %122 = arith.mulf %121, %112 : vector<8x728xf32>
    %123 = arith.addf %119, %122 : vector<8x728xf32>
    %c0_118 = arith.constant 0 : index
    %c768_119 = arith.constant 768 : index
    %124 = vector.load %arg6[%c0_118, %c768_119] : memref<8x3072xf32, #tpu.memory_space<vmem>>, vector<8x728xf32>
    tpu.vector_store %arg6[%c0_118, %c768_119], %123 {strides = array<i32>} : memref<8x3072xf32, #tpu.memory_space<vmem>>, vector<8x728xf32>,
    %c0_120 = arith.constant 0 : index
    %c1536_121 = arith.constant 1536 : index
    %125 = vector.load %arg6[%c0_120, %c1536_121] : memref<8x3072xf32, #tpu.memory_space<vmem>>, vector<8x728xf32>
    %c2_122 = arith.constant 2 : index
    %c4_123 = arith.constant 4 : index
    %126 = memref.load %arg2[%c2_122, %c4_123] : memref<4x9xf32, #tpu.memory_space<smem>>
    %127 = vector.broadcast %126 : f32 to vector<8x728xf32>
    %128 = arith.mulf %127, %112 : vector<8x728xf32>
    %129 = arith.addf %125, %128 : vector<8x728xf32>
    %c0_124 = arith.constant 0 : index
    %c1536_125 = arith.constant 1536 : index
    %130 = vector.load %arg6[%c0_124, %c1536_125] : memref<8x3072xf32, #tpu.memory_space<vmem>>, vector<8x728xf32>
    tpu.vector_store %arg6[%c0_124, %c1536_125], %129 {strides = array<i32>} : memref<8x3072xf32, #tpu.memory_space<vmem>>, vector<8x728xf32>,
    %c0_126 = arith.constant 0 : index
    %c2304_127 = arith.constant 2304 : index
    %131 = vector.load %arg6[%c0_126, %c2304_127] : memref<8x3072xf32, #tpu.memory_space<vmem>>, vector<8x728xf32>
    %c3_128 = arith.constant 3 : index
    %c4_129 = arith.constant 4 : index
    %132 = memref.load %arg2[%c3_128, %c4_129] : memref<4x9xf32, #tpu.memory_space<smem>>
    %133 = vector.broadcast %132 : f32 to vector<8x728xf32>
    %134 = arith.mulf %133, %112 : vector<8x728xf32>
    %135 = arith.addf %131, %134 : vector<8x728xf32>
    %c0_130 = arith.constant 0 : index
    %c2304_131 = arith.constant 2304 : index
    %136 = vector.load %arg6[%c0_130, %c2304_131] : memref<8x3072xf32, #tpu.memory_space<vmem>>, vector<8x728xf32>
    tpu.vector_store %arg6[%c0_130, %c2304_131], %135 {strides = array<i32>} : memref<8x3072xf32, #tpu.memory_space<vmem>>, vector<8x728xf32>,
    %c0_132 = arith.constant 0 : index
    %c30 = arith.constant 30 : index
    %137 = vector.load %arg1[%c0_132, %c30] : memref<8x786xf32, #tpu.memory_space<vmem>>, vector<8x728xf32>
    %c0_133 = arith.constant 0 : index
    %c0_134 = arith.constant 0 : index
    %138 = vector.load %arg6[%c0_133, %c0_134] : memref<8x3072xf32, #tpu.memory_space<vmem>>, vector<8x728xf32>
    %c0_135 = arith.constant 0 : index
    %c5 = arith.constant 5 : index
    %139 = memref.load %arg2[%c0_135, %c5] : memref<4x9xf32, #tpu.memory_space<smem>>
    %140 = vector.broadcast %139 : f32 to vector<8x728xf32>
    %141 = arith.mulf %140, %137 : vector<8x728xf32>
    %142 = arith.addf %138, %141 : vector<8x728xf32>
    %c0_136 = arith.constant 0 : index
    %c0_137 = arith.constant 0 : index
    %143 = vector.load %arg6[%c0_136, %c0_137] : memref<8x3072xf32, #tpu.memory_space<vmem>>, vector<8x728xf32>
    tpu.vector_store %arg6[%c0_136, %c0_137], %142 {strides = array<i32>} : memref<8x3072xf32, #tpu.memory_space<vmem>>, vector<8x728xf32>,
    %c0_138 = arith.constant 0 : index
    %c768_139 = arith.constant 768 : index
    %144 = vector.load %arg6[%c0_138, %c768_139] : memref<8x3072xf32, #tpu.memory_space<vmem>>, vector<8x728xf32>
    %c1_140 = arith.constant 1 : index
    %c5_141 = arith.constant 5 : index
    %145 = memref.load %arg2[%c1_140, %c5_141] : memref<4x9xf32, #tpu.memory_space<smem>>
    %146 = vector.broadcast %145 : f32 to vector<8x728xf32>
    %147 = arith.mulf %146, %137 : vector<8x728xf32>
    %148 = arith.addf %144, %147 : vector<8x728xf32>
    %c0_142 = arith.constant 0 : index
    %c768_143 = arith.constant 768 : index
    %149 = vector.load %arg6[%c0_142, %c768_143] : memref<8x3072xf32, #tpu.memory_space<vmem>>, vector<8x728xf32>
    tpu.vector_store %arg6[%c0_142, %c768_143], %148 {strides = array<i32>} : memref<8x3072xf32, #tpu.memory_space<vmem>>, vector<8x728xf32>,
    %c0_144 = arith.constant 0 : index
    %c1536_145 = arith.constant 1536 : index
    %150 = vector.load %arg6[%c0_144, %c1536_145] : memref<8x3072xf32, #tpu.memory_space<vmem>>, vector<8x728xf32>
    %c2_146 = arith.constant 2 : index
    %c5_147 = arith.constant 5 : index
    %151 = memref.load %arg2[%c2_146, %c5_147] : memref<4x9xf32, #tpu.memory_space<smem>>
    %152 = vector.broadcast %151 : f32 to vector<8x728xf32>
    %153 = arith.mulf %152, %137 : vector<8x728xf32>
    %154 = arith.addf %150, %153 : vector<8x728xf32>
    %c0_148 = arith.constant 0 : index
    %c1536_149 = arith.constant 1536 : index
    %155 = vector.load %arg6[%c0_148, %c1536_149] : memref<8x3072xf32, #tpu.memory_space<vmem>>, vector<8x728xf32>
    tpu.vector_store %arg6[%c0_148, %c1536_149], %154 {strides = array<i32>} : memref<8x3072xf32, #tpu.memory_space<vmem>>, vector<8x728xf32>,
    %c0_150 = arith.constant 0 : index
    %c2304_151 = arith.constant 2304 : index
    %156 = vector.load %arg6[%c0_150, %c2304_151] : memref<8x3072xf32, #tpu.memory_space<vmem>>, vector<8x728xf32>
    %c3_152 = arith.constant 3 : index
    %c5_153 = arith.constant 5 : index
    %157 = memref.load %arg2[%c3_152, %c5_153] : memref<4x9xf32, #tpu.memory_space<smem>>
    %158 = vector.broadcast %157 : f32 to vector<8x728xf32>
    %159 = arith.mulf %158, %137 : vector<8x728xf32>
    %160 = arith.addf %156, %159 : vector<8x728xf32>
    %c0_154 = arith.constant 0 : index
    %c2304_155 = arith.constant 2304 : index
    %161 = vector.load %arg6[%c0_154, %c2304_155] : memref<8x3072xf32, #tpu.memory_space<vmem>>, vector<8x728xf32>
    tpu.vector_store %arg6[%c0_154, %c2304_155], %160 {strides = array<i32>} : memref<8x3072xf32, #tpu.memory_space<vmem>>, vector<8x728xf32>,
    %c0_156 = arith.constant 0 : index
    %c56 = arith.constant 56 : index
    %162 = vector.load %arg1[%c0_156, %c56] : memref<8x786xf32, #tpu.memory_space<vmem>>, vector<8x728xf32>
    %c0_157 = arith.constant 0 : index
    %c0_158 = arith.constant 0 : index
    %163 = vector.load %arg6[%c0_157, %c0_158] : memref<8x3072xf32, #tpu.memory_space<vmem>>, vector<8x728xf32>
    %c0_159 = arith.constant 0 : index
    %c6 = arith.constant 6 : index
    %164 = memref.load %arg2[%c0_159, %c6] : memref<4x9xf32, #tpu.memory_space<smem>>
    %165 = vector.broadcast %164 : f32 to vector<8x728xf32>
    %166 = arith.mulf %165, %162 : vector<8x728xf32>
    %167 = arith.addf %163, %166 : vector<8x728xf32>
    %c0_160 = arith.constant 0 : index
    %c0_161 = arith.constant 0 : index
    %168 = vector.load %arg6[%c0_160, %c0_161] : memref<8x3072xf32, #tpu.memory_space<vmem>>, vector<8x728xf32>
    tpu.vector_store %arg6[%c0_160, %c0_161], %167 {strides = array<i32>} : memref<8x3072xf32, #tpu.memory_space<vmem>>, vector<8x728xf32>,
    %c0_162 = arith.constant 0 : index
    %c768_163 = arith.constant 768 : index
    %169 = vector.load %arg6[%c0_162, %c768_163] : memref<8x3072xf32, #tpu.memory_space<vmem>>, vector<8x728xf32>
    %c1_164 = arith.constant 1 : index
    %c6_165 = arith.constant 6 : index
    %170 = memref.load %arg2[%c1_164, %c6_165] : memref<4x9xf32, #tpu.memory_space<smem>>
    %171 = vector.broadcast %170 : f32 to vector<8x728xf32>
    %172 = arith.mulf %171, %162 : vector<8x728xf32>
    %173 = arith.addf %169, %172 : vector<8x728xf32>
    %c0_166 = arith.constant 0 : index
    %c768_167 = arith.constant 768 : index
    %174 = vector.load %arg6[%c0_166, %c768_167] : memref<8x3072xf32, #tpu.memory_space<vmem>>, vector<8x728xf32>
    tpu.vector_store %arg6[%c0_166, %c768_167], %173 {strides = array<i32>} : memref<8x3072xf32, #tpu.memory_space<vmem>>, vector<8x728xf32>,
    %c0_168 = arith.constant 0 : index
    %c1536_169 = arith.constant 1536 : index
    %175 = vector.load %arg6[%c0_168, %c1536_169] : memref<8x3072xf32, #tpu.memory_space<vmem>>, vector<8x728xf32>
    %c2_170 = arith.constant 2 : index
    %c6_171 = arith.constant 6 : index
    %176 = memref.load %arg2[%c2_170, %c6_171] : memref<4x9xf32, #tpu.memory_space<smem>>
    %177 = vector.broadcast %176 : f32 to vector<8x728xf32>
    %178 = arith.mulf %177, %162 : vector<8x728xf32>
    %179 = arith.addf %175, %178 : vector<8x728xf32>
    %c0_172 = arith.constant 0 : index
    %c1536_173 = arith.constant 1536 : index
    %180 = vector.load %arg6[%c0_172, %c1536_173] : memref<8x3072xf32, #tpu.memory_space<vmem>>, vector<8x728xf32>
    tpu.vector_store %arg6[%c0_172, %c1536_173], %179 {strides = array<i32>} : memref<8x3072xf32, #tpu.memory_space<vmem>>, vector<8x728xf32>,
    %c0_174 = arith.constant 0 : index
    %c2304_175 = arith.constant 2304 : index
    %181 = vector.load %arg6[%c0_174, %c2304_175] : memref<8x3072xf32, #tpu.memory_space<vmem>>, vector<8x728xf32>
    %c3_176 = arith.constant 3 : index
    %c6_177 = arith.constant 6 : index
    %182 = memref.load %arg2[%c3_176, %c6_177] : memref<4x9xf32, #tpu.memory_space<smem>>
    %183 = vector.broadcast %182 : f32 to vector<8x728xf32>
    %184 = arith.mulf %183, %162 : vector<8x728xf32>
    %185 = arith.addf %181, %184 : vector<8x728xf32>
    %c0_178 = arith.constant 0 : index
    %c2304_179 = arith.constant 2304 : index
    %186 = vector.load %arg6[%c0_178, %c2304_179] : memref<8x3072xf32, #tpu.memory_space<vmem>>, vector<8x728xf32>
    tpu.vector_store %arg6[%c0_178, %c2304_179], %185 {strides = array<i32>} : memref<8x3072xf32, #tpu.memory_space<vmem>>, vector<8x728xf32>,
    %c0_180 = arith.constant 0 : index
    %c57 = arith.constant 57 : index
    %187 = vector.load %arg1[%c0_180, %c57] : memref<8x786xf32, #tpu.memory_space<vmem>>, vector<8x728xf32>
    %c0_181 = arith.constant 0 : index
    %c0_182 = arith.constant 0 : index
    %188 = vector.load %arg6[%c0_181, %c0_182] : memref<8x3072xf32, #tpu.memory_space<vmem>>, vector<8x728xf32>
    %c0_183 = arith.constant 0 : index
    %c7 = arith.constant 7 : index
    %189 = memref.load %arg2[%c0_183, %c7] : memref<4x9xf32, #tpu.memory_space<smem>>
    %190 = vector.broadcast %189 : f32 to vector<8x728xf32>
    %191 = arith.mulf %190, %187 : vector<8x728xf32>
    %192 = arith.addf %188, %191 : vector<8x728xf32>
    %c0_184 = arith.constant 0 : index
    %c0_185 = arith.constant 0 : index
    %193 = vector.load %arg6[%c0_184, %c0_185] : memref<8x3072xf32, #tpu.memory_space<vmem>>, vector<8x728xf32>
    tpu.vector_store %arg6[%c0_184, %c0_185], %192 {strides = array<i32>} : memref<8x3072xf32, #tpu.memory_space<vmem>>, vector<8x728xf32>,
    %c0_186 = arith.constant 0 : index
    %c768_187 = arith.constant 768 : index
    %194 = vector.load %arg6[%c0_186, %c768_187] : memref<8x3072xf32, #tpu.memory_space<vmem>>, vector<8x728xf32>
    %c1_188 = arith.constant 1 : index
    %c7_189 = arith.constant 7 : index
    %195 = memref.load %arg2[%c1_188, %c7_189] : memref<4x9xf32, #tpu.memory_space<smem>>
    %196 = vector.broadcast %195 : f32 to vector<8x728xf32>
    %197 = arith.mulf %196, %187 : vector<8x728xf32>
    %198 = arith.addf %194, %197 : vector<8x728xf32>
    %c0_190 = arith.constant 0 : index
    %c768_191 = arith.constant 768 : index
    %199 = vector.load %arg6[%c0_190, %c768_191] : memref<8x3072xf32, #tpu.memory_space<vmem>>, vector<8x728xf32>
    tpu.vector_store %arg6[%c0_190, %c768_191], %198 {strides = array<i32>} : memref<8x3072xf32, #tpu.memory_space<vmem>>, vector<8x728xf32>,
    %c0_192 = arith.constant 0 : index
    %c1536_193 = arith.constant 1536 : index
    %200 = vector.load %arg6[%c0_192, %c1536_193] : memref<8x3072xf32, #tpu.memory_space<vmem>>, vector<8x728xf32>
    %c2_194 = arith.constant 2 : index
    %c7_195 = arith.constant 7 : index
    %201 = memref.load %arg2[%c2_194, %c7_195] : memref<4x9xf32, #tpu.memory_space<smem>>
    %202 = vector.broadcast %201 : f32 to vector<8x728xf32>
    %203 = arith.mulf %202, %187 : vector<8x728xf32>
    %204 = arith.addf %200, %203 : vector<8x728xf32>
    %c0_196 = arith.constant 0 : index
    %c1536_197 = arith.constant 1536 : index
    %205 = vector.load %arg6[%c0_196, %c1536_197] : memref<8x3072xf32, #tpu.memory_space<vmem>>, vector<8x728xf32>
    tpu.vector_store %arg6[%c0_196, %c1536_197], %204 {strides = array<i32>} : memref<8x3072xf32, #tpu.memory_space<vmem>>, vector<8x728xf32>,
    %c0_198 = arith.constant 0 : index
    %c2304_199 = arith.constant 2304 : index
    %206 = vector.load %arg6[%c0_198, %c2304_199] : memref<8x3072xf32, #tpu.memory_space<vmem>>, vector<8x728xf32>
    %c3_200 = arith.constant 3 : index
    %c7_201 = arith.constant 7 : index
    %207 = memref.load %arg2[%c3_200, %c7_201] : memref<4x9xf32, #tpu.memory_space<smem>>
    %208 = vector.broadcast %207 : f32 to vector<8x728xf32>
    %209 = arith.mulf %208, %187 : vector<8x728xf32>
    %210 = arith.addf %206, %209 : vector<8x728xf32>
    %c0_202 = arith.constant 0 : index
    %c2304_203 = arith.constant 2304 : index
    %211 = vector.load %arg6[%c0_202, %c2304_203] : memref<8x3072xf32, #tpu.memory_space<vmem>>, vector<8x728xf32>
    tpu.vector_store %arg6[%c0_202, %c2304_203], %210 {strides = array<i32>} : memref<8x3072xf32, #tpu.memory_space<vmem>>, vector<8x728xf32>,
    %c0_204 = arith.constant 0 : index
    %c58 = arith.constant 58 : index
    %212 = vector.load %arg1[%c0_204, %c58] : memref<8x786xf32, #tpu.memory_space<vmem>>, vector<8x728xf32>
    %c0_205 = arith.constant 0 : index
    %c0_206 = arith.constant 0 : index
    %213 = vector.load %arg6[%c0_205, %c0_206] : memref<8x3072xf32, #tpu.memory_space<vmem>>, vector<8x728xf32>
    %c0_207 = arith.constant 0 : index
    %c8 = arith.constant 8 : index
    %214 = memref.load %arg2[%c0_207, %c8] : memref<4x9xf32, #tpu.memory_space<smem>>
    %215 = vector.broadcast %214 : f32 to vector<8x728xf32>
    %216 = arith.mulf %215, %212 : vector<8x728xf32>
    %217 = arith.addf %213, %216 : vector<8x728xf32>
    %c0_208 = arith.constant 0 : index
    %c0_209 = arith.constant 0 : index
    %218 = vector.load %arg6[%c0_208, %c0_209] : memref<8x3072xf32, #tpu.memory_space<vmem>>, vector<8x728xf32>
    tpu.vector_store %arg6[%c0_208, %c0_209], %217 {strides = array<i32>} : memref<8x3072xf32, #tpu.memory_space<vmem>>, vector<8x728xf32>,
    %c0_210 = arith.constant 0 : index
    %c768_211 = arith.constant 768 : index
    %219 = vector.load %arg6[%c0_210, %c768_211] : memref<8x3072xf32, #tpu.memory_space<vmem>>, vector<8x728xf32>
    %c1_212 = arith.constant 1 : index
    %c8_213 = arith.constant 8 : index
    %220 = memref.load %arg2[%c1_212, %c8_213] : memref<4x9xf32, #tpu.memory_space<smem>>
    %221 = vector.broadcast %220 : f32 to vector<8x728xf32>
    %222 = arith.mulf %221, %212 : vector<8x728xf32>
    %223 = arith.addf %219, %222 : vector<8x728xf32>
    %c0_214 = arith.constant 0 : index
    %c768_215 = arith.constant 768 : index
    %224 = vector.load %arg6[%c0_214, %c768_215] : memref<8x3072xf32, #tpu.memory_space<vmem>>, vector<8x728xf32>
    tpu.vector_store %arg6[%c0_214, %c768_215], %223 {strides = array<i32>} : memref<8x3072xf32, #tpu.memory_space<vmem>>, vector<8x728xf32>,
    %c0_216 = arith.constant 0 : index
    %c1536_217 = arith.constant 1536 : index
    %225 = vector.load %arg6[%c0_216, %c1536_217] : memref<8x3072xf32, #tpu.memory_space<vmem>>, vector<8x728xf32>
    %c2_218 = arith.constant 2 : index
    %c8_219 = arith.constant 8 : index
    %226 = memref.load %arg2[%c2_218, %c8_219] : memref<4x9xf32, #tpu.memory_space<smem>>
    %227 = vector.broadcast %226 : f32 to vector<8x728xf32>
    %228 = arith.mulf %227, %212 : vector<8x728xf32>
    %229 = arith.addf %225, %228 : vector<8x728xf32>
    %c0_220 = arith.constant 0 : index
    %c1536_221 = arith.constant 1536 : index
    %230 = vector.load %arg6[%c0_220, %c1536_221] : memref<8x3072xf32, #tpu.memory_space<vmem>>, vector<8x728xf32>
    tpu.vector_store %arg6[%c0_220, %c1536_221], %229 {strides = array<i32>} : memref<8x3072xf32, #tpu.memory_space<vmem>>, vector<8x728xf32>,
    %c0_222 = arith.constant 0 : index
    %c2304_223 = arith.constant 2304 : index
    %231 = vector.load %arg6[%c0_222, %c2304_223] : memref<8x3072xf32, #tpu.memory_space<vmem>>, vector<8x728xf32>
    %c3_224 = arith.constant 3 : index
    %c8_225 = arith.constant 8 : index
    %232 = memref.load %arg2[%c3_224, %c8_225] : memref<4x9xf32, #tpu.memory_space<smem>>
    %233 = vector.broadcast %232 : f32 to vector<8x728xf32>
    %234 = arith.mulf %233, %212 : vector<8x728xf32>
    %235 = arith.addf %231, %234 : vector<8x728xf32>
    %c0_226 = arith.constant 0 : index
    %c2304_227 = arith.constant 2304 : index
    %236 = vector.load %arg6[%c0_226, %c2304_227] : memref<8x3072xf32, #tpu.memory_space<vmem>>, vector<8x728xf32>
    tpu.vector_store %arg6[%c0_226, %c2304_227], %235 {strides = array<i32>} : memref<8x3072xf32, #tpu.memory_space<vmem>>, vector<8x728xf32>,
    %c0_228 = arith.constant 0 : index
    %c0_229 = arith.constant 0 : index
    %237 = vector.load %arg5[%c0_228, %c0_229] : memref<1x128xf32, #tpu.memory_space<vmem>>, vector<1x128xf32>
    %cst = arith.constant 0.000000e+00 : f32
    %238 = vector.broadcast %cst : f32 to vector<8x128xf32>
    %239 = vector.broadcast %237 : vector<1x128xf32> to vector<8x128xf32>
    %240 = arith.addf %239, %238 : vector<8x128xf32>
    %c0_230 = arith.constant 0 : index
    %c0_231 = arith.constant 0 : index
    %241 = vector.load %arg7[%c0_230, %c0_231] : memref<8x128xf32, #tpu.memory_space<vmem>>, vector<8x128xf32>
    tpu.vector_store %arg7[%c0_230, %c0_231], %240 {strides = array<i32>} : memref<8x128xf32, #tpu.memory_space<vmem>>, vector<8x128xf32>,
    %c0_232 = arith.constant 0 : index
    %c0_233 = arith.constant 0 : index
    %242 = vector.load %arg6[%c0_232, %c0_233] : memref<8x3072xf32, #tpu.memory_space<vmem>>, vector<8x728xf32>
    %cst_234 = arith.constant 0.000000e+00 : f32
    %243 = vector.broadcast %cst_234 : f32 to vector<8x728xf32>
    %244 = arith.maximumf %242, %243 : vector<8x728xf32>
    %c0_235 = arith.constant 0 : index
    %c0_236 = arith.constant 0 : index
    %245 = vector.load %arg7[%c0_235, %c0_236] : memref<8x128xf32, #tpu.memory_space<vmem>>, vector<8x128xf32>
    %c0_237 = arith.constant 0 : index
    %c0_238 = arith.constant 0 : index
    %c0_239 = arith.constant 0 : index
    %246 = vector.load %arg4[%c0_237, %c0_238, %c0_239] : memref<4x728x128xf32, #tpu.memory_space<vmem>>, vector<1x728x128xf32>
    %247 = vector.shape_cast %246 : vector<1x728x128xf32> to vector<728x128xf32>
    %cst_240 = arith.constant dense<0.000000e+00> : vector<8x128xf32>
    %248 = tpu.matmul %244, %247, %cst_240 {dimension_numbers = #tpu.dot_dimension_numbers<[1], [0], [0], [1], [0, 0, 1, 1], [], []>} : vector<8x728xf32>, vector<728x128xf32>, vector<8x128xf32> -> vector<8x128xf32>
    %249 = arith.addf %245, %248 : vector<8x128xf32>
    %c0_241 = arith.constant 0 : index
    %c0_242 = arith.constant 0 : index
    %250 = vector.load %arg7[%c0_241, %c0_242] : memref<8x128xf32, #tpu.memory_space<vmem>>, vector<8x128xf32>
    tpu.vector_store %arg7[%c0_241, %c0_242], %249 {strides = array<i32>} : memref<8x128xf32, #tpu.memory_space<vmem>>, vector<8x128xf32>,
    %c0_243 = arith.constant 0 : index
    %c768_244 = arith.constant 768 : index
    %251 = vector.load %arg6[%c0_243, %c768_244] : memref<8x3072xf32, #tpu.memory_space<vmem>>, vector<8x728xf32>
    %cst_245 = arith.constant 0.000000e+00 : f32
    %252 = vector.broadcast %cst_245 : f32 to vector<8x728xf32>
    %253 = arith.maximumf %251, %252 : vector<8x728xf32>
    %c0_246 = arith.constant 0 : index
    %c0_247 = arith.constant 0 : index
    %254 = vector.load %arg7[%c0_246, %c0_247] : memref<8x128xf32, #tpu.memory_space<vmem>>, vector<8x128xf32>
    %c1_248 = arith.constant 1 : index
    %c0_249 = arith.constant 0 : index
    %c0_250 = arith.constant 0 : index
    %255 = vector.load %arg4[%c1_248, %c0_249, %c0_250] : memref<4x728x128xf32, #tpu.memory_space<vmem>>, vector<1x728x128xf32>
    %256 = vector.shape_cast %255 : vector<1x728x128xf32> to vector<728x128xf32>
    %cst_251 = arith.constant dense<0.000000e+00> : vector<8x128xf32>
    %257 = tpu.matmul %253, %256, %cst_251 {dimension_numbers = #tpu.dot_dimension_numbers<[1], [0], [0], [1], [0, 0, 1, 1], [], []>} : vector<8x728xf32>, vector<728x128xf32>, vector<8x128xf32> -> vector<8x128xf32>
    %258 = arith.addf %254, %257 : vector<8x128xf32>
    %c0_252 = arith.constant 0 : index
    %c0_253 = arith.constant 0 : index
    %259 = vector.load %arg7[%c0_252, %c0_253] : memref<8x128xf32, #tpu.memory_space<vmem>>, vector<8x128xf32>
    tpu.vector_store %arg7[%c0_252, %c0_253], %258 {strides = array<i32>} : memref<8x128xf32, #tpu.memory_space<vmem>>, vector<8x128xf32>,
    %c0_254 = arith.constant 0 : index
    %c1536_255 = arith.constant 1536 : index
    %260 = vector.load %arg6[%c0_254, %c1536_255] : memref<8x3072xf32, #tpu.memory_space<vmem>>, vector<8x728xf32>
    %cst_256 = arith.constant 0.000000e+00 : f32
    %261 = vector.broadcast %cst_256 : f32 to vector<8x728xf32>
    %262 = arith.maximumf %260, %261 : vector<8x728xf32>
    %c0_257 = arith.constant 0 : index
    %c0_258 = arith.constant 0 : index
    %263 = vector.load %arg7[%c0_257, %c0_258] : memref<8x128xf32, #tpu.memory_space<vmem>>, vector<8x128xf32>
    %c2_259 = arith.constant 2 : index
    %c0_260 = arith.constant 0 : index
    %c0_261 = arith.constant 0 : index
    %264 = vector.load %arg4[%c2_259, %c0_260, %c0_261] : memref<4x728x128xf32, #tpu.memory_space<vmem>>, vector<1x728x128xf32>
    %265 = vector.shape_cast %264 : vector<1x728x128xf32> to vector<728x128xf32>
    %cst_262 = arith.constant dense<0.000000e+00> : vector<8x128xf32>
    %266 = tpu.matmul %262, %265, %cst_262 {dimension_numbers = #tpu.dot_dimension_numbers<[1], [0], [0], [1], [0, 0, 1, 1], [], []>} : vector<8x728xf32>, vector<728x128xf32>, vector<8x128xf32> -> vector<8x128xf32>
    %267 = arith.addf %263, %266 : vector<8x128xf32>
    %c0_263 = arith.constant 0 : index
    %c0_264 = arith.constant 0 : index
    %268 = vector.load %arg7[%c0_263, %c0_264] : memref<8x128xf32, #tpu.memory_space<vmem>>, vector<8x128xf32>
    tpu.vector_store %arg7[%c0_263, %c0_264], %267 {strides = array<i32>} : memref<8x128xf32, #tpu.memory_space<vmem>>, vector<8x128xf32>,
    %c0_265 = arith.constant 0 : index
    %c2304_266 = arith.constant 2304 : index
    %269 = vector.load %arg6[%c0_265, %c2304_266] : memref<8x3072xf32, #tpu.memory_space<vmem>>, vector<8x728xf32>
    %cst_267 = arith.constant 0.000000e+00 : f32
    %270 = vector.broadcast %cst_267 : f32 to vector<8x728xf32>
    %271 = arith.maximumf %269, %270 : vector<8x728xf32>
    %c0_268 = arith.constant 0 : index
    %c0_269 = arith.constant 0 : index
    %272 = vector.load %arg7[%c0_268, %c0_269] : memref<8x128xf32, #tpu.memory_space<vmem>>, vector<8x128xf32>
    %c3_270 = arith.constant 3 : index
    %c0_271 = arith.constant 0 : index
    %c0_272 = arith.constant 0 : index
    %273 = vector.load %arg4[%c3_270, %c0_271, %c0_272] : memref<4x728x128xf32, #tpu.memory_space<vmem>>, vector<1x728x128xf32>
    %274 = vector.shape_cast %273 : vector<1x728x128xf32> to vector<728x128xf32>
    %cst_273 = arith.constant dense<0.000000e+00> : vector<8x128xf32>
    %275 = tpu.matmul %271, %274, %cst_273 {dimension_numbers = #tpu.dot_dimension_numbers<[1], [0], [0], [1], [0, 0, 1, 1], [], []>} : vector<8x728xf32>, vector<728x128xf32>, vector<8x128xf32> -> vector<8x128xf32>
    %276 = arith.addf %272, %275 : vector<8x128xf32>
    %c0_274 = arith.constant 0 : index
    %c0_275 = arith.constant 0 : index
    %277 = vector.load %arg7[%c0_274, %c0_275] : memref<8x128xf32, #tpu.memory_space<vmem>>, vector<8x128xf32>
    tpu.vector_store %arg7[%c0_274, %c0_275], %276 {strides = array<i32>} : memref<8x128xf32, #tpu.memory_space<vmem>>, vector<8x128xf32>,
    return
  }
  func.func @transform_0(%arg0: i32) -> (i32, i32) {
    %c0_i32 = arith.constant 0 : i32
    %c0_i32_0 = arith.constant 0 : i32
    return %arg0, %c0_i32 : i32, i32
  }
  func.func @transform_1(%arg0: i32) -> (i32, i32) {
    %c0_i32 = arith.constant 0 : i32
    %c0_i32_0 = arith.constant 0 : i32
    %c0_i32_1 = arith.constant 0 : i32
    return %c0_i32, %c0_i32_0 : i32, i32
  }
  func.func @transform_2(%arg0: i32) -> i32 {
    %c0_i32 = arith.constant 0 : i32
    %c0_i32_0 = arith.constant 0 : i32
    return %c0_i32 : i32
  }
  func.func @transform_3(%arg0: i32) -> (i32, i32, i32) {
    %c0_i32 = arith.constant 0 : i32
    %c0_i32_0 = arith.constant 0 : i32
    %c0_i32_1 = arith.constant 0 : i32
    %c0_i32_2 = arith.constant 0 : i32
    return %c0_i32, %c0_i32_0, %c0_i32_1 : i32, i32, i32
  }
  func.func @transform_4(%arg0: i32) -> (i32, i32) {
    %c0_i32 = arith.constant 0 : i32
    %c0_i32_0 = arith.constant 0 : i32
    %c0_i32_1 = arith.constant 0 : i32
    return %c0_i32, %c0_i32_0 : i32, i32
  }
  func.func @transform_5(%arg0: i32) -> (i32, i32) {
    %c0_i32 = arith.constant 0 : i32
    %c0_i32_0 = arith.constant 0 : i32
    return %arg0, %c0_i32 : i32, i32
  }
  func.func @transform_6(%arg0: i32) -> (i32, i32) {
    %c0_i32 = arith.constant 0 : i32
    %c0_i32_0 = arith.constant 0 : i32
    return %arg0, %c0_i32 : i32, i32
  }
}

</mosaic_0001>

<llo_original>
// kernel: cnn_forward.1
$region0: #{cnn_forward.1}
  #allocation0 [shape = 'u32[]', space=smem, size = 0x4, offset = 0x4, fixed_abs, tag = 'smem constant byte address 0x4 - core index']
  #allocation1 [shape = 'u32[144,128]{1,0:T(1,128)}', space=vmem, size = 0x12000, scoped, tag = 'internal scratch']
  %s0 = inlined_call_operand.vmem [shape: f32[8,786], index: 0, kind: input, shape index: {}]
  %s1 = inlined_call_operand.hbm [shape: f32[4,9], index: 1, kind: input, shape index: {}]
  %s2 = inlined_call_operand.hbm [shape: f32[4], index: 2, kind: input, shape index: {}]
  %s3 = inlined_call_operand.hbm [shape: f32[4,728,128], index: 3, kind: input, shape index: {}]
  %s4 = inlined_call_operand.hbm [shape: f32[1,128], index: 4, kind: input, shape index: {}]
  %s5 = inlined_call_operand.vmem [shape: f32[8,3072], index: 5, kind: output, shape index: {0}]
  %s6 = inlined_call_operand.vmem [shape: f32[8,128], index: 6, kind: output, shape index: {1}]
  %7 = xla_tuple %s5, %s6
  %s8 = sld [smem:[#allocation0]]
  $region54: #{cnn_forward.1} parent=0
    _
  %s10 = ssub.s32 1, %s8
  %s11 = scalar_select 0, %s10, %s8
  $region1: #{cnn_forward.1} parent=0
    #allocation2 [shape = 'u8[2048]{0}', space=smem, size = 0x800, scoped, tag = 'input window, operand 1, single buffered']
    #allocation3 [shape = 's32[1]{0}', space=sflag, size = 0x4, scoped, tag = 'scoped memory for cnn_forward.1']
    #allocation4 [shape = 's32[1]{0}', space=sflag, size = 0x4, scoped, tag = 'scoped memory for cnn_forward.1']
    #allocation5 [shape = 'u8[512]{0}', space=smem, size = 0x200, scoped, tag = 'input window, operand 2, single buffered']
    #allocation6 [shape = 's32[1]{0}', space=sflag, size = 0x4, scoped, tag = 'scoped memory for cnn_forward.1']
    #allocation7 [shape = 'u8[1490944]{0}', space=vmem, size = 0x16c000, scoped, tag = 'input window, operand 3, single buffered']
    #allocation8 [shape = 'u8[512]{0}', space=vmem, size = 0x400, scoped, tag = 'input window, operand 4, single buffered']
    #allocation9 [shape = 's32[1]{0}', space=sflag, size = 0x4, scoped, tag = 'scoped memory for cnn_forward.1']
    %12 = vsyncpa [#allocation4], 0
    %13 = vsyncpa [#allocation6], 0
    %14 = vsyncpa [#allocation3], 0
    %15 = vsyncpa [#allocation9], 0
    // Predicated region
    $region2: #{cnn_forward.1} parent=1 // pred_check
      _
    $region3: #{cnn_forward.1} parent=1 // pred_check_branch
      %17 = sbr.rel (0) target = $region5
    $region4: #{cnn_forward.1} parent=1 // pred_region
      _
    $region5: #{cnn_forward.1} parent=1 // pred_fallthru
      _
    // Predicated region
    $region6: #{cnn_forward.1} parent=1 // pred_check
      _
    $region7: #{cnn_forward.1} parent=1 // pred_check_branch
      %19 = sbr.rel (0) target = $region9
    $region8: #{cnn_forward.1} parent=1 // pred_region
      %s21 = ssub.s32 64, 64
      %22 = vsyncadd [#allocation4], %s21
      %25 = dma.hbm_to_smem %s1, 64, [#allocation2], [#allocation4]
    $region9: #{cnn_forward.1} parent=1 // pred_fallthru
      _
    // Predicated region
    $region10: #{cnn_forward.1} parent=1 // pred_check
      _
    $region11: #{cnn_forward.1} parent=1 // pred_check_branch
      %27 = sbr.rel (0) target = $region13
    $region12: #{cnn_forward.1} parent=1 // pred_region
      %s29 = ssub.s32 16, 16
      %30 = vsyncadd [#allocation6], %s29
      %33 = dma.hbm_to_smem %s2, 16, [#allocation5], [#allocation6]
    $region13: #{cnn_forward.1} parent=1 // pred_fallthru
      _
    // Predicated region
    $region14: #{cnn_forward.1} parent=1 // pred_check
      _
    $region15: #{cnn_forward.1} parent=1 // pred_check_branch
      %35 = sbr.rel (0) target = $region17
    $region16: #{cnn_forward.1} parent=1 // pred_region
      %s37 = ssub.s32 46592, 46592
      %38 = vsyncadd [#allocation3], %s37
      %s39 = sshll.u32 [#allocation7], 4
      %s40 = int_to_ptr.vmem [resolvable:$true] %s39
      %45 = dma.hbm_to_vmem [thread:$0]  %s3, 46592, %s40, [#allocation3], 128, 128, 8
    $region17: #{cnn_forward.1} parent=1 // pred_fallthru
      _
    // Predicated region
    $region18: #{cnn_forward.1} parent=1 // pred_check
      _
    $region19: #{cnn_forward.1} parent=1 // pred_check_branch
      %47 = sbr.rel (0) target = $region21
    $region20: #{cnn_forward.1} parent=1 // pred_region
      %s49 = ssub.s32 16, 16
      %50 = vsyncadd [#allocation9], %s49
      %s52 = sshll.u32 [#allocation8], 4
      %s53 = int_to_ptr.vmem [resolvable:$true] %s52
      %55 = dma.hbm_to_vmem [thread:$0]  %s4, 16, %s53, [#allocation9]
    $region21: #{cnn_forward.1} parent=1 // pred_fallthru
      _
    // Predicated region
    $region22: #{cnn_forward.1} parent=1 // pred_check
      _
    $region23: #{cnn_forward.1} parent=1 // pred_check_branch
      %57 = sbr.rel (0) target = $region25
    $region24: #{cnn_forward.1} parent=1 // pred_region
      %58 = dma.done [#allocation4], 64
    $region25: #{cnn_forward.1} parent=1 // pred_fallthru
      _
    // Predicated region
    $region26: #{cnn_forward.1} parent=1 // pred_check
      _
    $region27: #{cnn_forward.1} parent=1 // pred_check_branch
      %60 = sbr.rel (0) target = $region29
    $region28: #{cnn_forward.1} parent=1 // pred_region
      %61 = dma.done [#allocation6], 16
    $region29: #{cnn_forward.1} parent=1 // pred_fallthru
      _
    // Predicated region
    $region30: #{cnn_forward.1} parent=1 // pred_check
      _
    $region31: #{cnn_forward.1} parent=1 // pred_check_branch
      %63 = sbr.rel (0) target = $region33
    $region32: #{cnn_forward.1} parent=1 // pred_region
      %64 = dma.done [#allocation3], 46592
    $region33: #{cnn_forward.1} parent=1 // pred_fallthru
      _
    // Predicated region
    $region34: #{cnn_forward.1} parent=1 // pred_check
      _
    $region35: #{cnn_forward.1} parent=1 // pred_check_branch
      %66 = sbr.rel (0) target = $region37
    $region36: #{cnn_forward.1} parent=1 // pred_region
      %67 = dma.done [#allocation9], 16
    $region37: #{cnn_forward.1} parent=1 // pred_fallthru
      _
    %68 = sfence
    %s69 = sld [smem:[#allocation5]]
    %v70 = vstv %s69
    %71 = vst [vmem:[%s5] sm:$0xff] %v70
    %72 = vst [vmem:[%s5 + $0x8] sm:$0xff] %v70
    %73 = vst [vmem:[%s5 + $0x10] sm:$0xff] %v70
    %74 = vst [vmem:[%s5 + $0x18] sm:$0xff] %v70
    %75 = vst [vmem:[%s5 + $0x20] sm:$0xff] %v70
    %76 = vst [vmem:[%s5 + $0x28] sm:$0xff] %v70
    %s77 = sld [smem:[#allocation5 + $0x1]]
    %v78 = vstv %s77
    %79 = vst [vmem:[%s5 + $0x30] sm:$0xff] %v78
    %80 = vst [vmem:[%s5 + $0x38] sm:$0xff] %v78
    %81 = vst [vmem:[%s5 + $0x40] sm:$0xff] %v78
    %82 = vst [vmem:[%s5 + $0x48] sm:$0xff] %v78
    %83 = vst [vmem:[%s5 + $0x50] sm:$0xff] %v78
    %84 = vst [vmem:[%s5 + $0x58] sm:$0xff] %v78
    %s85 = sld [smem:[#allocation5 + $0x2]]
    %v86 = vstv %s85
    %87 = vst [vmem:[%s5 + $0x60] sm:$0xff] %v86
    %88 = vst [vmem:[%s5 + $0x68] sm:$0xff] %v86
    %89 = vst [vmem:[%s5 + $0x70] sm:$0xff] %v86
    %90 = vst [vmem:[%s5 + $0x78] sm:$0xff] %v86
    %91 = vst [vmem:[%s5 + $0x80] sm:$0xff] %v86
    %92 = vst [vmem:[%s5 + $0x88] sm:$0xff] %v86
    %s93 = sld [smem:[#allocation5 + $0x3]]
    %v94 = vstv %s93
    %95 = vst [vmem:[%s5 + $0x90] sm:$0xff] %v94
    %96 = vst [vmem:[%s5 + $0x98] sm:$0xff] %v94
    %97 = vst [vmem:[%s5 + $0xa0] sm:$0xff] %v94
    %98 = vst [vmem:[%s5 + $0xa8] sm:$0xff] %v94
    %99 = vst [vmem:[%s5 + $0xb0] sm:$0xff] %v94
    %100 = vst [vmem:[%s5 + $0xb8] sm:$0xff] %v94
    %v101 = vld [vmem:[%s0] sm:$0xff]
    %v102 = vld [vmem:[%s0 + $0x8] sm:$0xff]
    %v103 = vld [vmem:[%s0 + $0x10] sm:$0xff]
    %v104 = vld [vmem:[%s0 + $0x18] sm:$0xff]
    %v105 = vld [vmem:[%s0 + $0x20] sm:$0xff]
    %v106 = vld [vmem:[%s0 + $0x28] sm:$0xff]
    %v107 = vld [vmem:[%s5] sm:$0xff]
    %v108 = vld [vmem:[%s5 + $0x8] sm:$0xff]
    %v109 = vld [vmem:[%s5 + $0x10] sm:$0xff]
    %v110 = vld [vmem:[%s5 + $0x18] sm:$0xff]
    %v111 = vld [vmem:[%s5 + $0x20] sm:$0xff]
    %v112 = vld [vmem:[%s5 + $0x28] sm:$0xff]
    %s113 = sld [smem:[#allocation2]]
    %v114 = vstv %s113
    %v115 = vmul.f32 %v114, %v101
    %v116 = vmul.f32 %v114, %v102
    %v117 = vmul.f32 %v114, %v103
    %v118 = vmul.f32 %v114, %v104
    %v119 = vmul.f32 %v114, %v105
    %v120 = vmul.f32 %v114, %v106
    %v121 = vadd.f32 %v107, %v115
    %v122 = vadd.f32 %v108, %v116
    %v123 = vadd.f32 %v109, %v117
    %v124 = vadd.f32 %v110, %v118
    %v125 = vadd.f32 %v111, %v119
    %v126 = vadd.f32 %v112, %v120
    %127 = vst [vmem:[%s5] sm:$0xff] %v121
    %128 = vst [vmem:[%s5 + $0x8] sm:$0xff] %v122
    %129 = vst [vmem:[%s5 + $0x10] sm:$0xff] %v123
    %130 = vst [vmem:[%s5 + $0x18] sm:$0xff] %v124
    %131 = vst [vmem:[%s5 + $0x20] sm:$0xff] %v125
    %vm132 = vcmask 719872
    %133 = vst.msk [vmem:[%s5 + $0x28] sm:$0xff] %vm132, %v126
    %v134 = vld [vmem:[%s5 + $0x30] sm:$0xff]
    %v135 = vld [vmem:[%s5 + $0x38] sm:$0xff]
    %v136 = vld [vmem:[%s5 + $0x40] sm:$0xff]
    %v137 = vld [vmem:[%s5 + $0x48] sm:$0xff]
    %v138 = vld [vmem:[%s5 + $0x50] sm:$0xff]
    %v139 = vld [vmem:[%s5 + $0x58] sm:$0xff]
    %s140 = sld [smem:[#allocation2 + $0x80]]
    %v141 = vstv %s140
    %v142 = vmul.f32 %v141, %v101
    %v143 = vmul.f32 %v141, %v102
    %v144 = vmul.f32 %v141, %v103
    %v145 = vmul.f32 %v141, %v104
    %v146 = vmul.f32 %v141, %v105
    %v147 = vmul.f32 %v141, %v106
    %v148 = vadd.f32 %v134, %v142
    %v149 = vadd.f32 %v135, %v143
    %v150 = vadd.f32 %v136, %v144
    %v151 = vadd.f32 %v137, %v145
    %v152 = vadd.f32 %v138, %v146
    %v153 = vadd.f32 %v139, %v147
    %154 = vst [vmem:[%s5 + $0x30] sm:$0xff] %v148
    %155 = vst [vmem:[%s5 + $0x38] sm:$0xff] %v149
    %156 = vst [vmem:[%s5 + $0x40] sm:$0xff] %v150
    %157 = vst [vmem:[%s5 + $0x48] sm:$0xff] %v151
    %158 = vst [vmem:[%s5 + $0x50] sm:$0xff] %v152
    %159 = vst.msk [vmem:[%s5 + $0x58] sm:$0xff] %vm132, %v153
    %v160 = vld [vmem:[%s5 + $0x60] sm:$0xff]
    %v161 = vld [vmem:[%s5 + $0x68] sm:$0xff]
    %v162 = vld [vmem:[%s5 + $0x70] sm:$0xff]
    %v163 = vld [vmem:[%s5 + $0x78] sm:$0xff]
    %v164 = vld [vmem:[%s5 + $0x80] sm:$0xff]
    %v165 = vld [vmem:[%s5 + $0x88] sm:$0xff]
    %s166 = sld [smem:[#allocation2 + $0x100]]
    %v167 = vstv %s166
    %v168 = vmul.f32 %v167, %v101
    %v169 = vmul.f32 %v167, %v102
    %v170 = vmul.f32 %v167, %v103
    %v171 = vmul.f32 %v167, %v104
    %v172 = vmul.f32 %v167, %v105
    %v173 = vmul.f32 %v167, %v106
    %v174 = vadd.f32 %v160, %v168
    %v175 = vadd.f32 %v161, %v169
    %v176 = vadd.f32 %v162, %v170
    %v177 = vadd.f32 %v163, %v171
    %v178 = vadd.f32 %v164, %v172
    %v179 = vadd.f32 %v165, %v173
    %180 = vst [vmem:[%s5 + $0x60] sm:$0xff] %v174
    %181 = vst [vmem:[%s5 + $0x68] sm:$0xff] %v175
    %182 = vst [vmem:[%s5 + $0x70] sm:$0xff] %v176
    %183 = vst [vmem:[%s5 + $0x78] sm:$0xff] %v177
    %184 = vst [vmem:[%s5 + $0x80] sm:$0xff] %v178
    %185 = vst.msk [vmem:[%s5 + $0x88] sm:$0xff] %vm132, %v179
    %v186 = vld [vmem:[%s5 + $0x90] sm:$0xff]
    %v187 = vld [vmem:[%s5 + $0x98] sm:$0xff]
    %v188 = vld [vmem:[%s5 + $0xa0] sm:$0xff]
    %v189 = vld [vmem:[%s5 + $0xa8] sm:$0xff]
    %v190 = vld [vmem:[%s5 + $0xb0] sm:$0xff]
    %v191 = vld [vmem:[%s5 + $0xb8] sm:$0xff]
    %s192 = sld [smem:[#allocation2 + $0x180]]
    %v193 = vstv %s192
    %v194 = vmul.f32 %v193, %v101
    %v195 = vmul.f32 %v193, %v102
    %v196 = vmul.f32 %v193, %v103
    %v197 = vmul.f32 %v193, %v104
    %v198 = vmul.f32 %v193, %v105
    %v199 = vmul.f32 %v193, %v106
    %v200 = vadd.f32 %v186, %v194
    %v201 = vadd.f32 %v187, %v195
    %v202 = vadd.f32 %v188, %v196
    %v203 = vadd.f32 %v189, %v197
    %v204 = vadd.f32 %v190, %v198
    %v205 = vadd.f32 %v191, %v199
    %206 = vst [vmem:[%s5 + $0x90] sm:$0xff] %v200
    %207 = vst [vmem:[%s5 + $0x98] sm:$0xff] %v201
    %208 = vst [vmem:[%s5 + $0xa0] sm:$0xff] %v202
    %209 = vst [vmem:[%s5 + $0xa8] sm:$0xff] %v203
    %210 = vst [vmem:[%s5 + $0xb0] sm:$0xff] %v204
    %211 = vst.msk [vmem:[%s5 + $0xb8] sm:$0xff] %vm132, %v205
    %v212 = vld [vmem:[%s0] sm:$0xff]
    %v213 = vld [vmem:[%s0 + $0x8] sm:$0xff]
    %v214 = vld [vmem:[%s0 + $0x10] sm:$0xff]
    %v215 = vld [vmem:[%s0 + $0x18] sm:$0xff]
    %v216 = vld [vmem:[%s0 + $0x20] sm:$0xff]
    %v217 = vld [vmem:[%s0 + $0x28] sm:$0xff]
    %v218 = vld [vmem:[%s5] sm:$0xff]
    %v219 = vld [vmem:[%s5 + $0x8] sm:$0xff]
    %v220 = vld [vmem:[%s5 + $0x10] sm:$0xff]
    %v221 = vld [vmem:[%s5 + $0x18] sm:$0xff]
    %v222 = vld [vmem:[%s5 + $0x20] sm:$0xff]
    %v223 = vld [vmem:[%s5 + $0x28] sm:$0xff]
    %s224 = sld [smem:[#allocation2 + $0x1]]
    %v225 = vstv %s224
    %v226 = vmul.f32 %v225, %v212
    %v227 = vmul.f32 %v225, %v213
    %v228 = vmul.f32 %v225, %v214
    %v229 = vmul.f32 %v225, %v215
    %v230 = vmul.f32 %v225, %v216
    %v231 = vmul.f32 %v225, %v217
    %238 = vrot.lane.b32.xlu0 %v226, 127
    %v239 = vpop.permute.xlu0 %238
    %240 = vrot.lane.b32.xlu0 %v227, 127
    %v241 = vpop.permute.xlu0 %240
    %242 = vrot.lane.b32.xlu0 %v228, 127
    %v243 = vpop.permute.xlu0 %242
    %244 = vrot.lane.b32.xlu0 %v229, 127
    %v245 = vpop.permute.xlu0 %244
    %246 = vrot.lane.b32.xlu0 %v230, 127
    %v247 = vpop.permute.xlu0 %246
    %248 = vrot.lane.b32.xlu0 %v231, 127
    %v249 = vpop.permute.xlu0 %248
    %vm250 = vcmask 1039360
    %v251 = vsel %vm250, %v239, %v241
    %v252 = vsel %vm250, %v241, %v243
    %v253 = vsel %vm250, %v243, %v245
    %v254 = vsel %vm250, %v245, %v247
    %v255 = vsel %vm250, %v247, %v249
    %v262 = vadd.f32 %v218, %v251
    %v263 = vadd.f32 %v219, %v252
    %v264 = vadd.f32 %v220, %v253
    %v265 = vadd.f32 %v221, %v254
    %v266 = vadd.f32 %v222, %v255
    %v267 = vadd.f32 %v223, %v249
    %268 = vst [vmem:[%s5] sm:$0xff] %v262
    %269 = vst [vmem:[%s5 + $0x8] sm:$0xff] %v263
    %270 = vst [vmem:[%s5 + $0x10] sm:$0xff] %v264
    %271 = vst [vmem:[%s5 + $0x18] sm:$0xff] %v265
    %272 = vst [vmem:[%s5 + $0x20] sm:$0xff] %v266
    %273 = vst.msk [vmem:[%s5 + $0x28] sm:$0xff] %vm132, %v267
    %v274 = vld [vmem:[%s5 + $0x30] sm:$0xff]
    %v275 = vld [vmem:[%s5 + $0x38] sm:$0xff]
    %v276 = vld [vmem:[%s5 + $0x40] sm:$0xff]
    %v277 = vld [vmem:[%s5 + $0x48] sm:$0xff]
    %v278 = vld [vmem:[%s5 + $0x50] sm:$0xff]
    %v279 = vld [vmem:[%s5 + $0x58] sm:$0xff]
    %s280 = sld [smem:[#allocation2 + $0x81]]
    %v281 = vstv %s280
    %v282 = vmul.f32 %v281, %v212
    %v283 = vmul.f32 %v281, %v213
    %v284 = vmul.f32 %v281, %v214
    %v285 = vmul.f32 %v281, %v215
    %v286 = vmul.f32 %v281, %v216
    %v287 = vmul.f32 %v281, %v217
    %294 = vrot.lane.b32.xlu0 %v282, 127
    %v295 = vpop.permute.xlu0 %294
    %296 = vrot.lane.b32.xlu0 %v283, 127
    %v297 = vpop.permute.xlu0 %296
    %298 = vrot.lane.b32.xlu0 %v284, 127
    %v299 = vpop.permute.xlu0 %298
    %300 = vrot.lane.b32.xlu0 %v285, 127
    %v301 = vpop.permute.xlu0 %300
    %302 = vrot.lane.b32.xlu0 %v286, 127
    %v303 = vpop.permute.xlu0 %302
    %304 = vrot.lane.b32.xlu0 %v287, 127
    %v305 = vpop.permute.xlu0 %304
    %v306 = vsel %vm250, %v295, %v297
    %v307 = vsel %vm250, %v297, %v299
    %v308 = vsel %vm250, %v299, %v301
    %v309 = vsel %vm250, %v301, %v303
    %v310 = vsel %vm250, %v303, %v305
    %v317 = vadd.f32 %v274, %v306
    %v318 = vadd.f32 %v275, %v307
    %v319 = vadd.f32 %v276, %v308
    %v320 = vadd.f32 %v277, %v309
    %v321 = vadd.f32 %v278, %v310
    %v322 = vadd.f32 %v279, %v305
    %323 = vst [vmem:[%s5 + $0x30] sm:$0xff] %v317
    %324 = vst [vmem:[%s5 + $0x38] sm:$0xff] %v318
    %325 = vst [vmem:[%s5 + $0x40] sm:$0xff] %v319
    %326 = vst [vmem:[%s5 + $0x48] sm:$0xff] %v320
    %327 = vst [vmem:[%s5 + $0x50] sm:$0xff] %v321
    %328 = vst.msk [vmem:[%s5 + $0x58] sm:$0xff] %vm132, %v322
    %v329 = vld [vmem:[%s5 + $0x60] sm:$0xff]
    %v330 = vld [vmem:[%s5 + $0x68] sm:$0xff]
    %v331 = vld [vmem:[%s5 + $0x70] sm:$0xff]
    %v332 = vld [vmem:[%s5 + $0x78] sm:$0xff]
    %v333 = vld [vmem:[%s5 + $0x80] sm:$0xff]
    %v334 = vld [vmem:[%s5 + $0x88] sm:$0xff]
    %s335 = sld [smem:[#allocation2 + $0x101]]
    %v336 = vstv %s335
    %v337 = vmul.f32 %v336, %v212
    %v338 = vmul.f32 %v336, %v213
    %v339 = vmul.f32 %v336, %v214
    %v340 = vmul.f32 %v336, %v215
    %v341 = vmul.f32 %v336, %v216
    %v342 = vmul.f32 %v336, %v217
    %349 = vrot.lane.b32.xlu0 %v337, 127
    %v350 = vpop.permute.xlu0 %349
    %351 = vrot.lane.b32.xlu0 %v338, 127
    %v352 = vpop.permute.xlu0 %351
    %353 = vrot.lane.b32.xlu0 %v339, 127
    %v354 = vpop.permute.xlu0 %353
    %355 = vrot.lane.b32.xlu0 %v340, 127
    %v356 = vpop.permute.xlu0 %355
    %357 = vrot.lane.b32.xlu0 %v341, 127
    %v358 = vpop.permute.xlu0 %357
    %359 = vrot.lane.b32.xlu0 %v342, 127
    %v360 = vpop.permute.xlu0 %359
    %v361 = vsel %vm250, %v350, %v352
    %v362 = vsel %vm250, %v352, %v354
    %v363 = vsel %vm250, %v354, %v356
    %v364 = vsel %vm250, %v356, %v358
    %v365 = vsel %vm250, %v358, %v360
    %v372 = vadd.f32 %v329, %v361
    %v373 = vadd.f32 %v330, %v362
    %v374 = vadd.f32 %v331, %v363
    %v375 = vadd.f32 %v332, %v364
    %v376 = vadd.f32 %v333, %v365
    %v377 = vadd.f32 %v334, %v360
    %378 = vst [vmem:[%s5 + $0x60] sm:$0xff] %v372
    %379 = vst [vmem:[%s5 + $0x68] sm:$0xff] %v373
    %380 = vst [vmem:[%s5 + $0x70] sm:$0xff] %v374
    %381 = vst [vmem:[%s5 + $0x78] sm:$0xff] %v375
    %382 = vst [vmem:[%s5 + $0x80] sm:$0xff] %v376
    %383 = vst.msk [vmem:[%s5 + $0x88] sm:$0xff] %vm132, %v377
    %v384 = vld [vmem:[%s5 + $0x90] sm:$0xff]
    %v385 = vld [vmem:[%s5 + $0x98] sm:$0xff]
    %v386 = vld [vmem:[%s5 + $0xa0] sm:$0xff]
    %v387 = vld [vmem:[%s5 + $0xa8] sm:$0xff]
    %v388 = vld [vmem:[%s5 + $0xb0] sm:$0xff]
    %v389 = vld [vmem:[%s5 + $0xb8] sm:$0xff]
    %s390 = sld [smem:[#allocation2 + $0x181]]
    %v391 = vstv %s390
    %v392 = vmul.f32 %v391, %v212
    %v393 = vmul.f32 %v391, %v213
    %v394 = vmul.f32 %v391, %v214
    %v395 = vmul.f32 %v391, %v215
    %v396 = vmul.f32 %v391, %v216
    %v397 = vmul.f32 %v391, %v217
    %404 = vrot.lane.b32.xlu0 %v392, 127
    %v405 = vpop.permute.xlu0 %404
    %406 = vrot.lane.b32.xlu0 %v393, 127
    %v407 = vpop.permute.xlu0 %406
    %408 = vrot.lane.b32.xlu0 %v394, 127
    %v409 = vpop.permute.xlu0 %408
    %410 = vrot.lane.b32.xlu0 %v395, 127
    %v411 = vpop.permute.xlu0 %410
    %412 = vrot.lane.b32.xlu0 %v396, 127
    %v413 = vpop.permute.xlu0 %412
    %414 = vrot.lane.b32.xlu0 %v397, 127
    %v415 = vpop.permute.xlu0 %414
    %v416 = vsel %vm250, %v405, %v407
    %v417 = vsel %vm250, %v407, %v409
    %v418 = vsel %vm250, %v409, %v411
    %v419 = vsel %vm250, %v411, %v413
    %v420 = vsel %vm250, %v413, %v415
    %v427 = vadd.f32 %v384, %v416
    %v428 = vadd.f32 %v385, %v417
    %v429 = vadd.f32 %v386, %v418
    %v430 = vadd.f32 %v387, %v419
    %v431 = vadd.f32 %v388, %v420
    %v432 = vadd.f32 %v389, %v415
    %433 = vst [vmem:[%s5 + $0x90] sm:$0xff] %v427
    %434 = vst [vmem:[%s5 + $0x98] sm:$0xff] %v428
    %435 = vst [vmem:[%s5 + $0xa0] sm:$0xff] %v429
    %436 = vst [vmem:[%s5 + $0xa8] sm:$0xff] %v430
    %437 = vst [vmem:[%s5 + $0xb0] sm:$0xff] %v431
    %438 = vst.msk [vmem:[%s5 + $0xb8] sm:$0xff] %vm132, %v432
    %v439 = vld [vmem:[%s0] sm:$0xff]
    %v440 = vld [vmem:[%s0 + $0x8] sm:$0xff]
    %v441 = vld [vmem:[%s0 + $0x10] sm:$0xff]
    %v442 = vld [vmem:[%s0 + $0x18] sm:$0xff]
    %v443 = vld [vmem:[%s0 + $0x20] sm:$0xff]
    %v444 = vld [vmem:[%s0 + $0x28] sm:$0xff]
    %v445 = vld [vmem:[%s5] sm:$0xff]
    %v446 = vld [vmem:[%s5 + $0x8] sm:$0xff]
    %v447 = vld [vmem:[%s5 + $0x10] sm:$0xff]
    %v448 = vld [vmem:[%s5 + $0x18] sm:$0xff]
    %v449 = vld [vmem:[%s5 + $0x20] sm:$0xff]
    %v450 = vld [vmem:[%s5 + $0x28] sm:$0xff]
    %s451 = sld [smem:[#allocation2 + $0x2]]
    %v452 = vstv %s451
    %v453 = vmul.f32 %v452, %v439
    %v454 = vmul.f32 %v452, %v440
    %v455 = vmul.f32 %v452, %v441
    %v456 = vmul.f32 %v452, %v442
    %v457 = vmul.f32 %v452, %v443
    %v458 = vmul.f32 %v452, %v444
    %465 = vrot.lane.b32.xlu0 %v453, 126
    %v466 = vpop.permute.xlu0 %465
    %467 = vrot.lane.b32.xlu0 %v454, 126
    %v468 = vpop.permute.xlu0 %467
    %469 = vrot.lane.b32.xlu0 %v455, 126
    %v470 = vpop.permute.xlu0 %469
    %471 = vrot.lane.b32.xlu0 %v456, 126
    %v472 = vpop.permute.xlu0 %471
    %473 = vrot.lane.b32.xlu0 %v457, 126
    %v474 = vpop.permute.xlu0 %473
    %475 = vrot.lane.b32.xlu0 %v458, 126
    %v476 = vpop.permute.xlu0 %475
    %vm477 = vcmask 1031168
    %v478 = vsel %vm477, %v466, %v468
    %v479 = vsel %vm477, %v468, %v470
    %v480 = vsel %vm477, %v470, %v472
    %v481 = vsel %vm477, %v472, %v474
    %v482 = vsel %vm477, %v474, %v476
    %v489 = vadd.f32 %v445, %v478
    %v490 = vadd.f32 %v446, %v479
    %v491 = vadd.f32 %v447, %v480
    %v492 = vadd.f32 %v448, %v481
    %v493 = vadd.f32 %v449, %v482
    %v494 = vadd.f32 %v450, %v476
    %495 = vst [vmem:[%s5] sm:$0xff] %v489
    %496 = vst [vmem:[%s5 + $0x8] sm:$0xff] %v490
    %497 = vst [vmem:[%s5 + $0x10] sm:$0xff] %v491
    %498 = vst [vmem:[%s5 + $0x18] sm:$0xff] %v492
    %499 = vst [vmem:[%s5 + $0x20] sm:$0xff] %v493
    %500 = vst.msk [vmem:[%s5 + $0x28] sm:$0xff] %vm132, %v494
    %v501 = vld [vmem:[%s5 + $0x30] sm:$0xff]
    %v502 = vld [vmem:[%s5 + $0x38] sm:$0xff]
    %v503 = vld [vmem:[%s5 + $0x40] sm:$0xff]
    %v504 = vld [vmem:[%s5 + $0x48] sm:$0xff]
    %v505 = vld [vmem:[%s5 + $0x50] sm:$0xff]
    %v506 = vld [vmem:[%s5 + $0x58] sm:$0xff]
    %s507 = sld [smem:[#allocation2 + $0x82]]
    %v508 = vstv %s507
    %v509 = vmul.f32 %v508, %v439
    %v510 = vmul.f32 %v508, %v440
    %v511 = vmul.f32 %v508, %v441
    %v512 = vmul.f32 %v508, %v442
    %v513 = vmul.f32 %v508, %v443
    %v514 = vmul.f32 %v508, %v444
    %521 = vrot.lane.b32.xlu0 %v509, 126
    %v522 = vpop.permute.xlu0 %521
    %523 = vrot.lane.b32.xlu0 %v510, 126
    %v524 = vpop.permute.xlu0 %523
    %525 = vrot.lane.b32.xlu0 %v511, 126
    %v526 = vpop.permute.xlu0 %525
    %527 = vrot.lane.b32.xlu0 %v512, 126
    %v528 = vpop.permute.xlu0 %527
    %529 = vrot.lane.b32.xlu0 %v513, 126
    %v530 = vpop.permute.xlu0 %529
    %531 = vrot.lane.b32.xlu0 %v514, 126
    %v532 = vpop.permute.xlu0 %531
    %v533 = vsel %vm477, %v522, %v524
    %v534 = vsel %vm477, %v524, %v526
    %v535 = vsel %vm477, %v526, %v528
    %v536 = vsel %vm477, %v528, %v530
    %v537 = vsel %vm477, %v530, %v532
    %v544 = vadd.f32 %v501, %v533
    %v545 = vadd.f32 %v502, %v534
    %v546 = vadd.f32 %v503, %v535
    %v547 = vadd.f32 %v504, %v536
    %v548 = vadd.f32 %v505, %v537
    %v549 = vadd.f32 %v506, %v532
    %550 = vst [vmem:[%s5 + $0x30] sm:$0xff] %v544
    %551 = vst [vmem:[%s5 + $0x38] sm:$0xff] %v545
    %552 = vst [vmem:[%s5 + $0x40] sm:$0xff] %v546
    %553 = vst [vmem:[%s5 + $0x48] sm:$0xff] %v547
    %554 = vst [vmem:[%s5 + $0x50] sm:$0xff] %v548
    %555 = vst.msk [vmem:[%s5 + $0x58] sm:$0xff] %vm132, %v549
    %v556 = vld [vmem:[%s5 + $0x60] sm:$0xff]
    %v557 = vld [vmem:[%s5 + $0x68] sm:$0xff]
    %v558 = vld [vmem:[%s5 + $0x70] sm:$0xff]
    %v559 = vld [vmem:[%s5 + $0x78] sm:$0xff]
    %v560 = vld [vmem:[%s5 + $0x80] sm:$0xff]
    %v561 = vld [vmem:[%s5 + $0x88] sm:$0xff]
    %s562 = sld [smem:[#allocation2 + $0x102]]
    %v563 = vstv %s562
    %v564 = vmul.f32 %v563, %v439
    %v565 = vmul.f32 %v563, %v440
    %v566 = vmul.f32 %v563, %v441
    %v567 = vmul.f32 %v563, %v442
    %v568 = vmul.f32 %v563, %v443
    %v569 = vmul.f32 %v563, %v444
    %576 = vrot.lane.b32.xlu0 %v564, 126
    %v577 = vpop.permute.xlu0 %576
    %578 = vrot.lane.b32.xlu0 %v565, 126
    %v579 = vpop.permute.xlu0 %578
    %580 = vrot.lane.b32.xlu0 %v566, 126
    %v581 = vpop.permute.xlu0 %580
    %582 = vrot.lane.b32.xlu0 %v567, 126
    %v583 = vpop.permute.xlu0 %582
    %584 = vrot.lane.b32.xlu0 %v568, 126
    %v585 = vpop.permute.xlu0 %584
    %586 = vrot.lane.b32.xlu0 %v569, 126
    %v587 = vpop.permute.xlu0 %586
    %v588 = vsel %vm477, %v577, %v579
    %v589 = vsel %vm477, %v579, %v581
    %v590 = vsel %vm477, %v581, %v583
    %v591 = vsel %vm477, %v583, %v585
    %v592 = vsel %vm477, %v585, %v587
    %v599 = vadd.f32 %v556, %v588
    %v600 = vadd.f32 %v557, %v589
    %v601 = vadd.f32 %v558, %v590
    %v602 = vadd.f32 %v559, %v591
    %v603 = vadd.f32 %v560, %v592
    %v604 = vadd.f32 %v561, %v587
    %605 = vst [vmem:[%s5 + $0x60] sm:$0xff] %v599
    %606 = vst [vmem:[%s5 + $0x68] sm:$0xff] %v600
    %607 = vst [vmem:[%s5 + $0x70] sm:$0xff] %v601
    %608 = vst [vmem:[%s5 + $0x78] sm:$0xff] %v602
    %609 = vst [vmem:[%s5 + $0x80] sm:$0xff] %v603
    %610 = vst.msk [vmem:[%s5 + $0x88] sm:$0xff] %vm132, %v604
    %v611 = vld [vmem:[%s5 + $0x90] sm:$0xff]
    %v612 = vld [vmem:[%s5 + $0x98] sm:$0xff]
    %v613 = vld [vmem:[%s5 + $0xa0] sm:$0xff]
    %v614 = vld [vmem:[%s5 + $0xa8] sm:$0xff]
    %v615 = vld [vmem:[%s5 + $0xb0] sm:$0xff]
    %v616 = vld [vmem:[%s5 + $0xb8] sm:$0xff]
    %s617 = sld [smem:[#allocation2 + $0x182]]
    %v618 = vstv %s617
    %v619 = vmul.f32 %v618, %v439
    %v620 = vmul.f32 %v618, %v440
    %v621 = vmul.f32 %v618, %v441
    %v622 = vmul.f32 %v618, %v442
    %v623 = vmul.f32 %v618, %v443
    %v624 = vmul.f32 %v618, %v444
    %631 = vrot.lane.b32.xlu0 %v619, 126
    %v632 = vpop.permute.xlu0 %631
    %633 = vrot.lane.b32.xlu0 %v620, 126
    %v634 = vpop.permute.xlu0 %633
    %635 = vrot.lane.b32.xlu0 %v621, 126
    %v636 = vpop.permute.xlu0 %635
    %637 = vrot.lane.b32.xlu0 %v622, 126
    %v638 = vpop.permute.xlu0 %637
    %639 = vrot.lane.b32.xlu0 %v623, 126
    %v640 = vpop.permute.xlu0 %639
    %641 = vrot.lane.b32.xlu0 %v624, 126
    %v642 = vpop.permute.xlu0 %641
    %v643 = vsel %vm477, %v632, %v634
    %v644 = vsel %vm477, %v634, %v636
    %v645 = vsel %vm477, %v636, %v638
    %v646 = vsel %vm477, %v638, %v640
    %v647 = vsel %vm477, %v640, %v642
    %v654 = vadd.f32 %v611, %v643
    %v655 = vadd.f32 %v612, %v644
    %v656 = vadd.f32 %v613, %v645
    %v657 = vadd.f32 %v614, %v646
    %v658 = vadd.f32 %v615, %v647
    %v659 = vadd.f32 %v616, %v642
    %660 = vst [vmem:[%s5 + $0x90] sm:$0xff] %v654
    %661 = vst [vmem:[%s5 + $0x98] sm:$0xff] %v655
    %662 = vst [vmem:[%s5 + $0xa0] sm:$0xff] %v656
    %663 = vst [vmem:[%s5 + $0xa8] sm:$0xff] %v657
    %664 = vst [vmem:[%s5 + $0xb0] sm:$0xff] %v658
    %665 = vst.msk [vmem:[%s5 + $0xb8] sm:$0xff] %vm132, %v659
    %v666 = vld [vmem:[%s0] sm:$0xff]
    %v667 = vld [vmem:[%s0 + $0x8] sm:$0xff]
    %v668 = vld [vmem:[%s0 + $0x10] sm:$0xff]
    %v669 = vld [vmem:[%s0 + $0x18] sm:$0xff]
    %v670 = vld [vmem:[%s0 + $0x20] sm:$0xff]
    %v671 = vld [vmem:[%s0 + $0x28] sm:$0xff]
    %v672 = vld [vmem:[%s5] sm:$0xff]
    %v673 = vld [vmem:[%s5 + $0x8] sm:$0xff]
    %v674 = vld [vmem:[%s5 + $0x10] sm:$0xff]
    %v675 = vld [vmem:[%s5 + $0x18] sm:$0xff]
    %v676 = vld [vmem:[%s5 + $0x20] sm:$0xff]
    %v677 = vld [vmem:[%s5 + $0x28] sm:$0xff]
    %s678 = sld [smem:[#allocation2 + $0x3]]
    %v679 = vstv %s678
    %v680 = vmul.f32 %v679, %v666
    %v681 = vmul.f32 %v679, %v667
    %v682 = vmul.f32 %v679, %v668
    %v683 = vmul.f32 %v679, %v669
    %v684 = vmul.f32 %v679, %v670
    %v685 = vmul.f32 %v679, %v671
    %692 = vrot.lane.b32.xlu0 %v680, 100
    %v693 = vpop.permute.xlu0 %692
    %694 = vrot.lane.b32.xlu0 %v681, 100
    %v695 = vpop.permute.xlu0 %694
    %696 = vrot.lane.b32.xlu0 %v682, 100
    %v697 = vpop.permute.xlu0 %696
    %698 = vrot.lane.b32.xlu0 %v683, 100
    %v699 = vpop.permute.xlu0 %698
    %700 = vrot.lane.b32.xlu0 %v684, 100
    %v701 = vpop.permute.xlu0 %700
    %702 = vrot.lane.b32.xlu0 %v685, 100
    %v703 = vpop.permute.xlu0 %702
    %vm704 = vcmask 818176
    %v705 = vsel %vm704, %v693, %v695
    %v706 = vsel %vm704, %v695, %v697
    %v707 = vsel %vm704, %v697, %v699
    %v708 = vsel %vm704, %v699, %v701
    %v709 = vsel %vm704, %v701, %v703
    %v716 = vadd.f32 %v672, %v705
    %v717 = vadd.f32 %v673, %v706
    %v718 = vadd.f32 %v674, %v707
    %v719 = vadd.f32 %v675, %v708
    %v720 = vadd.f32 %v676, %v709
    %v721 = vadd.f32 %v677, %v703
    %722 = vst [vmem:[%s5] sm:$0xff] %v716
    %723 = vst [vmem:[%s5 + $0x8] sm:$0xff] %v717
    %724 = vst [vmem:[%s5 + $0x10] sm:$0xff] %v718
    %725 = vst [vmem:[%s5 + $0x18] sm:$0xff] %v719
    %726 = vst [vmem:[%s5 + $0x20] sm:$0xff] %v720
    %727 = vst.msk [vmem:[%s5 + $0x28] sm:$0xff] %vm132, %v721
    %v728 = vld [vmem:[%s5 + $0x30] sm:$0xff]
    %v729 = vld [vmem:[%s5 + $0x38] sm:$0xff]
    %v730 = vld [vmem:[%s5 + $0x40] sm:$0xff]
    %v731 = vld [vmem:[%s5 + $0x48] sm:$0xff]
    %v732 = vld [vmem:[%s5 + $0x50] sm:$0xff]
    %v733 = vld [vmem:[%s5 + $0x58] sm:$0xff]
    %s734 = sld [smem:[#allocation2 + $0x83]]
    %v735 = vstv %s734
    %v736 = vmul.f32 %v735, %v666
    %v737 = vmul.f32 %v735, %v667
    %v738 = vmul.f32 %v735, %v668
    %v739 = vmul.f32 %v735, %v669
    %v740 = vmul.f32 %v735, %v670
    %v741 = vmul.f32 %v735, %v671
    %748 = vrot.lane.b32.xlu0 %v736, 100
    %v749 = vpop.permute.xlu0 %748
    %750 = vrot.lane.b32.xlu0 %v737, 100
    %v751 = vpop.permute.xlu0 %750
    %752 = vrot.lane.b32.xlu0 %v738, 100
    %v753 = vpop.permute.xlu0 %752
    %754 = vrot.lane.b32.xlu0 %v739, 100
    %v755 = vpop.permute.xlu0 %754
    %756 = vrot.lane.b32.xlu0 %v740, 100
    %v757 = vpop.permute.xlu0 %756
    %758 = vrot.lane.b32.xlu0 %v741, 100
    %v759 = vpop.permute.xlu0 %758
    %v760 = vsel %vm704, %v749, %v751
    %v761 = vsel %vm704, %v751, %v753
    %v762 = vsel %vm704, %v753, %v755
    %v763 = vsel %vm704, %v755, %v757
    %v764 = vsel %vm704, %v757, %v759
    %v771 = vadd.f32 %v728, %v760
    %v772 = vadd.f32 %v729, %v761
    %v773 = vadd.f32 %v730, %v762
    %v774 = vadd.f32 %v731, %v763
    %v775 = vadd.f32 %v732, %v764
    %v776 = vadd.f32 %v733, %v759
    %777 = vst [vmem:[%s5 + $0x30] sm:$0xff] %v771
    %778 = vst [vmem:[%s5 + $0x38] sm:$0xff] %v772
    %779 = vst [vmem:[%s5 + $0x40] sm:$0xff] %v773
    %780 = vst [vmem:[%s5 + $0x48] sm:$0xff] %v774
    %781 = vst [vmem:[%s5 + $0x50] sm:$0xff] %v775
    %782 = vst.msk [vmem:[%s5 + $0x58] sm:$0xff] %vm132, %v776
    %v783 = vld [vmem:[%s5 + $0x60] sm:$0xff]
    %v784 = vld [vmem:[%s5 + $0x68] sm:$0xff]
    %v785 = vld [vmem:[%s5 + $0x70] sm:$0xff]
    %v786 = vld [vmem:[%s5 + $0x78] sm:$0xff]
    %v787 = vld [vmem:[%s5 + $0x80] sm:$0xff]
    %v788 = vld [vmem:[%s5 + $0x88] sm:$0xff]
    %s789 = sld [smem:[#allocation2 + $0x103]]
    %v790 = vstv %s789
    %v791 = vmul.f32 %v790, %v666
    %v792 = vmul.f32 %v790, %v667
    %v793 = vmul.f32 %v790, %v668
    %v794 = vmul.f32 %v790, %v669
    %v795 = vmul.f32 %v790, %v670
    %v796 = vmul.f32 %v790, %v671
    %803 = vrot.lane.b32.xlu0 %v791, 100
    %v804 = vpop.permute.xlu0 %803
    %805 = vrot.lane.b32.xlu0 %v792, 100
    %v806 = vpop.permute.xlu0 %805
    %807 = vrot.lane.b32.xlu0 %v793, 100
    %v808 = vpop.permute.xlu0 %807
    %809 = vrot.lane.b32.xlu0 %v794, 100
    %v810 = vpop.permute.xlu0 %809
    %811 = vrot.lane.b32.xlu0 %v795, 100
    %v812 = vpop.permute.xlu0 %811
    %813 = vrot.lane.b32.xlu0 %v796, 100
    %v814 = vpop.permute.xlu0 %813
    %v815 = vsel %vm704, %v804, %v806
    %v816 = vsel %vm704, %v806, %v808
    %v817 = vsel %vm704, %v808, %v810
    %v818 = vsel %vm704, %v810, %v812
    %v819 = vsel %vm704, %v812, %v814
    %v826 = vadd.f32 %v783, %v815
    %v827 = vadd.f32 %v784, %v816
    %v828 = vadd.f32 %v785, %v817
    %v829 = vadd.f32 %v786, %v818
    %v830 = vadd.f32 %v787, %v819
    %v831 = vadd.f32 %v788, %v814
    %832 = vst [vmem:[%s5 + $0x60] sm:$0xff] %v826
    %833 = vst [vmem:[%s5 + $0x68] sm:$0xff] %v827
    %834 = vst [vmem:[%s5 + $0x70] sm:$0xff] %v828
    %835 = vst [vmem:[%s5 + $0x78] sm:$0xff] %v829
    %836 = vst [vmem:[%s5 + $0x80] sm:$0xff] %v830
    %837 = vst.msk [vmem:[%s5 + $0x88] sm:$0xff] %vm132, %v831
    %v838 = vld [vmem:[%s5 + $0x90] sm:$0xff]
    %v839 = vld [vmem:[%s5 + $0x98] sm:$0xff]
    %v840 = vld [vmem:[%s5 + $0xa0] sm:$0xff]
    %v841 = vld [vmem:[%s5 + $0xa8] sm:$0xff]
    %v842 = vld [vmem:[%s5 + $0xb0] sm:$0xff]
    %v843 = vld [vmem:[%s5 + $0xb8] sm:$0xff]
    %s844 = sld [smem:[#allocation2 + $0x183]]
    %v845 = vstv %s844
    %v846 = vmul.f32 %v845, %v666
    %v847 = vmul.f32 %v845, %v667
    %v848 = vmul.f32 %v845, %v668
    %v849 = vmul.f32 %v845, %v669
    %v850 = vmul.f32 %v845, %v670
    %v851 = vmul.f32 %v845, %v671
    %858 = vrot.lane.b32.xlu0 %v846, 100
    %v859 = vpop.permute.xlu0 %858
    %860 = vrot.lane.b32.xlu0 %v847, 100
    %v861 = vpop.permute.xlu0 %860
    %862 = vrot.lane.b32.xlu0 %v848, 100
    %v863 = vpop.permute.xlu0 %862
    %864 = vrot.lane.b32.xlu0 %v849, 100
    %v865 = vpop.permute.xlu0 %864
    %866 = vrot.lane.b32.xlu0 %v850, 100
    %v867 = vpop.permute.xlu0 %866
    %868 = vrot.lane.b32.xlu0 %v851, 100
    %v869 = vpop.permute.xlu0 %868
    %v870 = vsel %vm704, %v859, %v861
    %v871 = vsel %vm704, %v861, %v863
    %v872 = vsel %vm704, %v863, %v865
    %v873 = vsel %vm704, %v865, %v867
    %v874 = vsel %vm704, %v867, %v869
    %v881 = vadd.f32 %v838, %v870
    %v882 = vadd.f32 %v839, %v871
    %v883 = vadd.f32 %v840, %v872
    %v884 = vadd.f32 %v841, %v873
    %v885 = vadd.f32 %v842, %v874
    %v886 = vadd.f32 %v843, %v869
    %887 = vst [vmem:[%s5 + $0x90] sm:$0xff] %v881
    %888 = vst [vmem:[%s5 + $0x98] sm:$0xff] %v882
    %889 = vst [vmem:[%s5 + $0xa0] sm:$0xff] %v883
    %890 = vst [vmem:[%s5 + $0xa8] sm:$0xff] %v884
    %891 = vst [vmem:[%s5 + $0xb0] sm:$0xff] %v885
    %892 = vst.msk [vmem:[%s5 + $0xb8] sm:$0xff] %vm132, %v886
    %v893 = vld [vmem:[%s0] sm:$0xff]
    %v894 = vld [vmem:[%s0 + $0x8] sm:$0xff]
    %v895 = vld [vmem:[%s0 + $0x10] sm:$0xff]
    %v896 = vld [vmem:[%s0 + $0x18] sm:$0xff]
    %v897 = vld [vmem:[%s0 + $0x20] sm:$0xff]
    %v898 = vld [vmem:[%s0 + $0x28] sm:$0xff]
    %v899 = vld [vmem:[%s5] sm:$0xff]
    %v900 = vld [vmem:[%s5 + $0x8] sm:$0xff]
    %v901 = vld [vmem:[%s5 + $0x10] sm:$0xff]
    %v902 = vld [vmem:[%s5 + $0x18] sm:$0xff]
    %v903 = vld [vmem:[%s5 + $0x20] sm:$0xff]
    %v904 = vld [vmem:[%s5 + $0x28] sm:$0xff]
    %s905 = sld [smem:[#allocation2 + $0x4]]
    %v906 = vstv %s905
    %v907 = vmul.f32 %v906, %v893
    %v908 = vmul.f32 %v906, %v894
    %v909 = vmul.f32 %v906, %v895
    %v910 = vmul.f32 %v906, %v896
    %v911 = vmul.f32 %v906, %v897
    %v912 = vmul.f32 %v906, %v898
    %919 = vrot.lane.b32.xlu0 %v907, 99
    %v920 = vpop.permute.xlu0 %919
    %921 = vrot.lane.b32.xlu0 %v908, 99
    %v922 = vpop.permute.xlu0 %921
    %923 = vrot.lane.b32.xlu0 %v909, 99
    %v924 = vpop.permute.xlu0 %923
    %925 = vrot.lane.b32.xlu0 %v910, 99
    %v926 = vpop.permute.xlu0 %925
    %927 = vrot.lane.b32.xlu0 %v911, 99
    %v928 = vpop.permute.xlu0 %927
    %929 = vrot.lane.b32.xlu0 %v912, 99
    %v930 = vpop.permute.xlu0 %929
    %vm931 = vcmask 809984
    %v932 = vsel %vm931, %v920, %v922
    %v933 = vsel %vm931, %v922, %v924
    %v934 = vsel %vm931, %v924, %v926
    %v935 = vsel %vm931, %v926, %v928
    %v936 = vsel %vm931, %v928, %v930
    %v943 = vadd.f32 %v899, %v932
    %v944 = vadd.f32 %v900, %v933
    %v945 = vadd.f32 %v901, %v934
    %v946 = vadd.f32 %v902, %v935
    %v947 = vadd.f32 %v903, %v936
    %v948 = vadd.f32 %v904, %v930
    %949 = vst [vmem:[%s5] sm:$0xff] %v943
    %950 = vst [vmem:[%s5 + $0x8] sm:$0xff] %v944
    %951 = vst [vmem:[%s5 + $0x10] sm:$0xff] %v945
    %952 = vst [vmem:[%s5 + $0x18] sm:$0xff] %v946
    %953 = vst [vmem:[%s5 + $0x20] sm:$0xff] %v947
    %954 = vst.msk [vmem:[%s5 + $0x28] sm:$0xff] %vm132, %v948
    %v955 = vld [vmem:[%s5 + $0x30] sm:$0xff]
    %v956 = vld [vmem:[%s5 + $0x38] sm:$0xff]
    %v957 = vld [vmem:[%s5 + $0x40] sm:$0xff]
    %v958 = vld [vmem:[%s5 + $0x48] sm:$0xff]
    %v959 = vld [vmem:[%s5 + $0x50] sm:$0xff]
    %v960 = vld [vmem:[%s5 + $0x58] sm:$0xff]
    %s961 = sld [smem:[#allocation2 + $0x84]]
    %v962 = vstv %s961
    %v963 = vmul.f32 %v962, %v893
    %v964 = vmul.f32 %v962, %v894
    %v965 = vmul.f32 %v962, %v895
    %v966 = vmul.f32 %v962, %v896
    %v967 = vmul.f32 %v962, %v897
    %v968 = vmul.f32 %v962, %v898
    %975 = vrot.lane.b32.xlu0 %v963, 99
    %v976 = vpop.permute.xlu0 %975
    %977 = vrot.lane.b32.xlu0 %v964, 99
    %v978 = vpop.permute.xlu0 %977
    %979 = vrot.lane.b32.xlu0 %v965, 99
    %v980 = vpop.permute.xlu0 %979
    %981 = vrot.lane.b32.xlu0 %v966, 99
    %v982 = vpop.permute.xlu0 %981
    %983 = vrot.lane.b32.xlu0 %v967, 99
    %v984 = vpop.permute.xlu0 %983
    %985 = vrot.lane.b32.xlu0 %v968, 99
    %v986 = vpop.permute.xlu0 %985
    %v987 = vsel %vm931, %v976, %v978
    %v988 = vsel %vm931, %v978, %v980
    %v989 = vsel %vm931, %v980, %v982
    %v990 = vsel %vm931, %v982, %v984
    %v991 = vsel %vm931, %v984, %v986
    %v998 = vadd.f32 %v955, %v987
    %v999 = vadd.f32 %v956, %v988
    %v1000 = vadd.f32 %v957, %v989
    %v1001 = vadd.f32 %v958, %v990
    %v1002 = vadd.f32 %v959, %v991
    %v1003 = vadd.f32 %v960, %v986
    %1004 = vst [vmem:[%s5 + $0x30] sm:$0xff] %v998
    %1005 = vst [vmem:[%s5 + $0x38] sm:$0xff] %v999
    %1006 = vst [vmem:[%s5 + $0x40] sm:$0xff] %v1000
    %1007 = vst [vmem:[%s5 + $0x48] sm:$0xff] %v1001
    %1008 = vst [vmem:[%s5 + $0x50] sm:$0xff] %v1002
    %1009 = vst.msk [vmem:[%s5 + $0x58] sm:$0xff] %vm132, %v1003
    %v1010 = vld [vmem:[%s5 + $0x60] sm:$0xff]
    %v1011 = vld [vmem:[%s5 + $0x68] sm:$0xff]
    %v1012 = vld [vmem:[%s5 + $0x70] sm:$0xff]
    %v1013 = vld [vmem:[%s5 + $0x78] sm:$0xff]
    %v1014 = vld [vmem:[%s5 + $0x80] sm:$0xff]
    %v1015 = vld [vmem:[%s5 + $0x88] sm:$0xff]
    %s1016 = sld [smem:[#allocation2 + $0x104]]
    %v1017 = vstv %s1016
    %v1018 = vmul.f32 %v1017, %v893
    %v1019 = vmul.f32 %v1017, %v894
    %v1020 = vmul.f32 %v1017, %v895
    %v1021 = vmul.f32 %v1017, %v896
    %v1022 = vmul.f32 %v1017, %v897
    %v1023 = vmul.f32 %v1017, %v898
    %1030 = vrot.lane.b32.xlu0 %v1018, 99
    %v1031 = vpop.permute.xlu0 %1030
    %1032 = vrot.lane.b32.xlu0 %v1019, 99
    %v1033 = vpop.permute.xlu0 %1032
    %1034 = vrot.lane.b32.xlu0 %v1020, 99
    %v1035 = vpop.permute.xlu0 %1034
    %1036 = vrot.lane.b32.xlu0 %v1021, 99
    %v1037 = vpop.permute.xlu0 %1036
    %1038 = vrot.lane.b32.xlu0 %v1022, 99
    %v1039 = vpop.permute.xlu0 %1038
    %1040 = vrot.lane.b32.xlu0 %v1023, 99
    %v1041 = vpop.permute.xlu0 %1040
    %v1042 = vsel %vm931, %v1031, %v1033
    %v1043 = vsel %vm931, %v1033, %v1035
    %v1044 = vsel %vm931, %v1035, %v1037
    %v1045 = vsel %vm931, %v1037, %v1039
    %v1046 = vsel %vm931, %v1039, %v1041
    %v1053 = vadd.f32 %v1010, %v1042
    %v1054 = vadd.f32 %v1011, %v1043
    %v1055 = vadd.f32 %v1012, %v1044
    %v1056 = vadd.f32 %v1013, %v1045
    %v1057 = vadd.f32 %v1014, %v1046
    %v1058 = vadd.f32 %v1015, %v1041
    %1059 = vst [vmem:[%s5 + $0x60] sm:$0xff] %v1053
    %1060 = vst [vmem:[%s5 + $0x68] sm:$0xff] %v1054
    %1061 = vst [vmem:[%s5 + $0x70] sm:$0xff] %v1055
    %1062 = vst [vmem:[%s5 + $0x78] sm:$0xff] %v1056
    %1063 = vst [vmem:[%s5 + $0x80] sm:$0xff] %v1057
    %1064 = vst.msk [vmem:[%s5 + $0x88] sm:$0xff] %vm132, %v1058
    %v1065 = vld [vmem:[%s5 + $0x90] sm:$0xff]
    %v1066 = vld [vmem:[%s5 + $0x98] sm:$0xff]
    %v1067 = vld [vmem:[%s5 + $0xa0] sm:$0xff]
    %v1068 = vld [vmem:[%s5 + $0xa8] sm:$0xff]
    %v1069 = vld [vmem:[%s5 + $0xb0] sm:$0xff]
    %v1070 = vld [vmem:[%s5 + $0xb8] sm:$0xff]
    %s1071 = sld [smem:[#allocation2 + $0x184]]
    %v1072 = vstv %s1071
    %v1073 = vmul.f32 %v1072, %v893
    %v1074 = vmul.f32 %v1072, %v894
    %v1075 = vmul.f32 %v1072, %v895
    %v1076 = vmul.f32 %v1072, %v896
    %v1077 = vmul.f32 %v1072, %v897
    %v1078 = vmul.f32 %v1072, %v898
    %1085 = vrot.lane.b32.xlu0 %v1073, 99
    %v1086 = vpop.permute.xlu0 %1085
    %1087 = vrot.lane.b32.xlu0 %v1074, 99
    %v1088 = vpop.permute.xlu0 %1087
    %1089 = vrot.lane.b32.xlu0 %v1075, 99
    %v1090 = vpop.permute.xlu0 %1089
    %1091 = vrot.lane.b32.xlu0 %v1076, 99
    %v1092 = vpop.permute.xlu0 %1091
    %1093 = vrot.lane.b32.xlu0 %v1077, 99
    %v1094 = vpop.permute.xlu0 %1093
    %1095 = vrot.lane.b32.xlu0 %v1078, 99
    %v1096 = vpop.permute.xlu0 %1095
    %v1097 = vsel %vm931, %v1086, %v1088
    %v1098 = vsel %vm931, %v1088, %v1090
    %v1099 = vsel %vm931, %v1090, %v1092
    %v1100 = vsel %vm931, %v1092, %v1094
    %v1101 = vsel %vm931, %v1094, %v1096
    %v1108 = vadd.f32 %v1065, %v1097
    %v1109 = vadd.f32 %v1066, %v1098
    %v1110 = vadd.f32 %v1067, %v1099
    %v1111 = vadd.f32 %v1068, %v1100
    %v1112 = vadd.f32 %v1069, %v1101
    %v1113 = vadd.f32 %v1070, %v1096
    %1114 = vst [vmem:[%s5 + $0x90] sm:$0xff] %v1108
    %1115 = vst [vmem:[%s5 + $0x98] sm:$0xff] %v1109
    %1116 = vst [vmem:[%s5 + $0xa0] sm:$0xff] %v1110
    %1117 = vst [vmem:[%s5 + $0xa8] sm:$0xff] %v1111
    %1118 = vst [vmem:[%s5 + $0xb0] sm:$0xff] %v1112
    %1119 = vst.msk [vmem:[%s5 + $0xb8] sm:$0xff] %vm132, %v1113
    %v1120 = vld [vmem:[%s0] sm:$0xff]
    %v1121 = vld [vmem:[%s0 + $0x8] sm:$0xff]
    %v1122 = vld [vmem:[%s0 + $0x10] sm:$0xff]
    %v1123 = vld [vmem:[%s0 + $0x18] sm:$0xff]
    %v1124 = vld [vmem:[%s0 + $0x20] sm:$0xff]
    %v1125 = vld [vmem:[%s0 + $0x28] sm:$0xff]
    %v1126 = vld [vmem:[%s5] sm:$0xff]
    %v1127 = vld [vmem:[%s5 + $0x8] sm:$0xff]
    %v1128 = vld [vmem:[%s5 + $0x10] sm:$0xff]
    %v1129 = vld [vmem:[%s5 + $0x18] sm:$0xff]
    %v1130 = vld [vmem:[%s5 + $0x20] sm:$0xff]
    %v1131 = vld [vmem:[%s5 + $0x28] sm:$0xff]
    %s1132 = sld [smem:[#allocation2 + $0x5]]
    %v1133 = vstv %s1132
    %v1134 = vmul.f32 %v1133, %v1120
    %v1135 = vmul.f32 %v1133, %v1121
    %v1136 = vmul.f32 %v1133, %v1122
    %v1137 = vmul.f32 %v1133, %v1123
    %v1138 = vmul.f32 %v1133, %v1124
    %v1139 = vmul.f32 %v1133, %v1125
    %1146 = vrot.lane.b32.xlu0 %v1134, 98
    %v1147 = vpop.permute.xlu0 %1146
    %1148 = vrot.lane.b32.xlu0 %v1135, 98
    %v1149 = vpop.permute.xlu0 %1148
    %1150 = vrot.lane.b32.xlu0 %v1136, 98
    %v1151 = vpop.permute.xlu0 %1150
    %1152 = vrot.lane.b32.xlu0 %v1137, 98
    %v1153 = vpop.permute.xlu0 %1152
    %1154 = vrot.lane.b32.xlu0 %v1138, 98
    %v1155 = vpop.permute.xlu0 %1154
    %1156 = vrot.lane.b32.xlu0 %v1139, 98
    %v1157 = vpop.permute.xlu0 %1156
    %vm1158 = vcmask 801792
    %v1159 = vsel %vm1158, %v1147, %v1149
    %v1160 = vsel %vm1158, %v1149, %v1151
    %v1161 = vsel %vm1158, %v1151, %v1153
    %v1162 = vsel %vm1158, %v1153, %v1155
    %v1163 = vsel %vm1158, %v1155, %v1157
    %v1170 = vadd.f32 %v1126, %v1159
    %v1171 = vadd.f32 %v1127, %v1160
    %v1172 = vadd.f32 %v1128, %v1161
    %v1173 = vadd.f32 %v1129, %v1162
    %v1174 = vadd.f32 %v1130, %v1163
    %v1175 = vadd.f32 %v1131, %v1157
    %1176 = vst [vmem:[%s5] sm:$0xff] %v1170
    %1177 = vst [vmem:[%s5 + $0x8] sm:$0xff] %v1171
    %1178 = vst [vmem:[%s5 + $0x10] sm:$0xff] %v1172
    %1179 = vst [vmem:[%s5 + $0x18] sm:$0xff] %v1173
    %1180 = vst [vmem:[%s5 + $0x20] sm:$0xff] %v1174
    %1181 = vst.msk [vmem:[%s5 + $0x28] sm:$0xff] %vm132, %v1175
    %v1182 = vld [vmem:[%s5 + $0x30] sm:$0xff]
    %v1183 = vld [vmem:[%s5 + $0x38] sm:$0xff]
    %v1184 = vld [vmem:[%s5 + $0x40] sm:$0xff]
    %v1185 = vld [vmem:[%s5 + $0x48] sm:$0xff]
    %v1186 = vld [vmem:[%s5 + $0x50] sm:$0xff]
    %v1187 = vld [vmem:[%s5 + $0x58] sm:$0xff]
    %s1188 = sld [smem:[#allocation2 + $0x85]]
    %v1189 = vstv %s1188
    %v1190 = vmul.f32 %v1189, %v1120
    %v1191 = vmul.f32 %v1189, %v1121
    %v1192 = vmul.f32 %v1189, %v1122
    %v1193 = vmul.f32 %v1189, %v1123
    %v1194 = vmul.f32 %v1189, %v1124
    %v1195 = vmul.f32 %v1189, %v1125
    %1202 = vrot.lane.b32.xlu0 %v1190, 98
    %v1203 = vpop.permute.xlu0 %1202
    %1204 = vrot.lane.b32.xlu0 %v1191, 98
    %v1205 = vpop.permute.xlu0 %1204
    %1206 = vrot.lane.b32.xlu0 %v1192, 98
    %v1207 = vpop.permute.xlu0 %1206
    %1208 = vrot.lane.b32.xlu0 %v1193, 98
    %v1209 = vpop.permute.xlu0 %1208
    %1210 = vrot.lane.b32.xlu0 %v1194, 98
    %v1211 = vpop.permute.xlu0 %1210
    %1212 = vrot.lane.b32.xlu0 %v1195, 98
    %v1213 = vpop.permute.xlu0 %1212
    %v1214 = vsel %vm1158, %v1203, %v1205
    %v1215 = vsel %vm1158, %v1205, %v1207
    %v1216 = vsel %vm1158, %v1207, %v1209
    %v1217 = vsel %vm1158, %v1209, %v1211
    %v1218 = vsel %vm1158, %v1211, %v1213
    %v1225 = vadd.f32 %v1182, %v1214
    %v1226 = vadd.f32 %v1183, %v1215
    %v1227 = vadd.f32 %v1184, %v1216
    %v1228 = vadd.f32 %v1185, %v1217
    %v1229 = vadd.f32 %v1186, %v1218
    %v1230 = vadd.f32 %v1187, %v1213
    %1231 = vst [vmem:[%s5 + $0x30] sm:$0xff] %v1225
    %1232 = vst [vmem:[%s5 + $0x38] sm:$0xff] %v1226
    %1233 = vst [vmem:[%s5 + $0x40] sm:$0xff] %v1227
    %1234 = vst [vmem:[%s5 + $0x48] sm:$0xff] %v1228
    %1235 = vst [vmem:[%s5 + $0x50] sm:$0xff] %v1229
    %1236 = vst.msk [vmem:[%s5 + $0x58] sm:$0xff] %vm132, %v1230
    %v1237 = vld [vmem:[%s5 + $0x60] sm:$0xff]
    %v1238 = vld [vmem:[%s5 + $0x68] sm:$0xff]
    %v1239 = vld [vmem:[%s5 + $0x70] sm:$0xff]
    %v1240 = vld [vmem:[%s5 + $0x78] sm:$0xff]
    %v1241 = vld [vmem:[%s5 + $0x80] sm:$0xff]
    %v1242 = vld [vmem:[%s5 + $0x88] sm:$0xff]
    %s1243 = sld [smem:[#allocation2 + $0x105]]
    %v1244 = vstv %s1243
    %v1245 = vmul.f32 %v1244, %v1120
    %v1246 = vmul.f32 %v1244, %v1121
    %v1247 = vmul.f32 %v1244, %v1122
    %v1248 = vmul.f32 %v1244, %v1123
    %v1249 = vmul.f32 %v1244, %v1124
    %v1250 = vmul.f32 %v1244, %v1125
    %1257 = vrot.lane.b32.xlu0 %v1245, 98
    %v1258 = vpop.permute.xlu0 %1257
    %1259 = vrot.lane.b32.xlu0 %v1246, 98
    %v1260 = vpop.permute.xlu0 %1259
    %1261 = vrot.lane.b32.xlu0 %v1247, 98
    %v1262 = vpop.permute.xlu0 %1261
    %1263 = vrot.lane.b32.xlu0 %v1248, 98
    %v1264 = vpop.permute.xlu0 %1263
    %1265 = vrot.lane.b32.xlu0 %v1249, 98
    %v1266 = vpop.permute.xlu0 %1265
    %1267 = vrot.lane.b32.xlu0 %v1250, 98
    %v1268 = vpop.permute.xlu0 %1267
    %v1269 = vsel %vm1158, %v1258, %v1260
    %v1270 = vsel %vm1158, %v1260, %v1262
    %v1271 = vsel %vm1158, %v1262, %v1264
    %v1272 = vsel %vm1158, %v1264, %v1266
    %v1273 = vsel %vm1158, %v1266, %v1268
    %v1280 = vadd.f32 %v1237, %v1269
    %v1281 = vadd.f32 %v1238, %v1270
    %v1282 = vadd.f32 %v1239, %v1271
    %v1283 = vadd.f32 %v1240, %v1272
    %v1284 = vadd.f32 %v1241, %v1273
    %v1285 = vadd.f32 %v1242, %v1268
    %1286 = vst [vmem:[%s5 + $0x60] sm:$0xff] %v1280
    %1287 = vst [vmem:[%s5 + $0x68] sm:$0xff] %v1281
    %1288 = vst [vmem:[%s5 + $0x70] sm:$0xff] %v1282
    %1289 = vst [vmem:[%s5 + $0x78] sm:$0xff] %v1283
    %1290 = vst [vmem:[%s5 + $0x80] sm:$0xff] %v1284
    %1291 = vst.msk [vmem:[%s5 + $0x88] sm:$0xff] %vm132, %v1285
    %v1292 = vld [vmem:[%s5 + $0x90] sm:$0xff]
    %v1293 = vld [vmem:[%s5 + $0x98] sm:$0xff]
    %v1294 = vld [vmem:[%s5 + $0xa0] sm:$0xff]
    %v1295 = vld [vmem:[%s5 + $0xa8] sm:$0xff]
    %v1296 = vld [vmem:[%s5 + $0xb0] sm:$0xff]
    %v1297 = vld [vmem:[%s5 + $0xb8] sm:$0xff]
    %s1298 = sld [smem:[#allocation2 + $0x185]]
    %v1299 = vstv %s1298
    %v1300 = vmul.f32 %v1299, %v1120
    %v1301 = vmul.f32 %v1299, %v1121
    %v1302 = vmul.f32 %v1299, %v1122
    %v1303 = vmul.f32 %v1299, %v1123
    %v1304 = vmul.f32 %v1299, %v1124
    %v1305 = vmul.f32 %v1299, %v1125
    %1312 = vrot.lane.b32.xlu0 %v1300, 98
    %v1313 = vpop.permute.xlu0 %1312
    %1314 = vrot.lane.b32.xlu0 %v1301, 98
    %v1315 = vpop.permute.xlu0 %1314
    %1316 = vrot.lane.b32.xlu0 %v1302, 98
    %v1317 = vpop.permute.xlu0 %1316
    %1318 = vrot.lane.b32.xlu0 %v1303, 98
    %v1319 = vpop.permute.xlu0 %1318
    %1320 = vrot.lane.b32.xlu0 %v1304, 98
    %v1321 = vpop.permute.xlu0 %1320
    %1322 = vrot.lane.b32.xlu0 %v1305, 98
    %v1323 = vpop.permute.xlu0 %1322
    %v1324 = vsel %vm1158, %v1313, %v1315
    %v1325 = vsel %vm1158, %v1315, %v1317
    %v1326 = vsel %vm1158, %v1317, %v1319
    %v1327 = vsel %vm1158, %v1319, %v1321
    %v1328 = vsel %vm1158, %v1321, %v1323
    %v1335 = vadd.f32 %v1292, %v1324
    %v1336 = vadd.f32 %v1293, %v1325
    %v1337 = vadd.f32 %v1294, %v1326
    %v1338 = vadd.f32 %v1295, %v1327
    %v1339 = vadd.f32 %v1296, %v1328
    %v1340 = vadd.f32 %v1297, %v1323
    %1341 = vst [vmem:[%s5 + $0x90] sm:$0xff] %v1335
    %1342 = vst [vmem:[%s5 + $0x98] sm:$0xff] %v1336
    %1343 = vst [vmem:[%s5 + $0xa0] sm:$0xff] %v1337
    %1344 = vst [vmem:[%s5 + $0xa8] sm:$0xff] %v1338
    %1345 = vst [vmem:[%s5 + $0xb0] sm:$0xff] %v1339
    %1346 = vst.msk [vmem:[%s5 + $0xb8] sm:$0xff] %vm132, %v1340
    %v1347 = vld [vmem:[%s0] sm:$0xff]
    %v1348 = vld [vmem:[%s0 + $0x8] sm:$0xff]
    %v1349 = vld [vmem:[%s0 + $0x10] sm:$0xff]
    %v1350 = vld [vmem:[%s0 + $0x18] sm:$0xff]
    %v1351 = vld [vmem:[%s0 + $0x20] sm:$0xff]
    %v1352 = vld [vmem:[%s0 + $0x28] sm:$0xff]
    %v1353 = vld [vmem:[%s0 + $0x30] sm:$0xff]
    %v1354 = vld [vmem:[%s5] sm:$0xff]
    %v1355 = vld [vmem:[%s5 + $0x8] sm:$0xff]
    %v1356 = vld [vmem:[%s5 + $0x10] sm:$0xff]
    %v1357 = vld [vmem:[%s5 + $0x18] sm:$0xff]
    %v1358 = vld [vmem:[%s5 + $0x20] sm:$0xff]
    %v1359 = vld [vmem:[%s5 + $0x28] sm:$0xff]
    %s1360 = sld [smem:[#allocation2 + $0x6]]
    %v1361 = vstv %s1360
    %v1362 = vmul.f32 %v1361, %v1347
    %v1363 = vmul.f32 %v1361, %v1348
    %v1364 = vmul.f32 %v1361, %v1349
    %v1365 = vmul.f32 %v1361, %v1350
    %v1366 = vmul.f32 %v1361, %v1351
    %v1367 = vmul.f32 %v1361, %v1352
    %v1368 = vmul.f32 %v1361, %v1353
    %1376 = vrot.lane.b32.xlu0 %v1362, 72
    %v1377 = vpop.permute.xlu0 %1376
    %1378 = vrot.lane.b32.xlu0 %v1363, 72
    %v1379 = vpop.permute.xlu0 %1378
    %1380 = vrot.lane.b32.xlu0 %v1364, 72
    %v1381 = vpop.permute.xlu0 %1380
    %1382 = vrot.lane.b32.xlu0 %v1365, 72
    %v1383 = vpop.permute.xlu0 %1382
    %1384 = vrot.lane.b32.xlu0 %v1366, 72
    %v1385 = vpop.permute.xlu0 %1384
    %1386 = vrot.lane.b32.xlu0 %v1367, 72
    %v1387 = vpop.permute.xlu0 %1386
    %1388 = vrot.lane.b32.xlu0 %v1368, 72
    %v1389 = vpop.permute.xlu0 %1388
    %vm1390 = vcmask 588800
    %v1391 = vsel %vm1390, %v1377, %v1379
    %v1392 = vsel %vm1390, %v1379, %v1381
    %v1393 = vsel %vm1390, %v1381, %v1383
    %v1394 = vsel %vm1390, %v1383, %v1385
    %v1395 = vsel %vm1390, %v1385, %v1387
    %v1396 = vsel %vm1390, %v1387, %v1389
    %v1403 = vadd.f32 %v1354, %v1391
    %v1404 = vadd.f32 %v1355, %v1392
    %v1405 = vadd.f32 %v1356, %v1393
    %v1406 = vadd.f32 %v1357, %v1394
    %v1407 = vadd.f32 %v1358, %v1395
    %v1408 = vadd.f32 %v1359, %v1396
    %1409 = vst [vmem:[%s5] sm:$0xff] %v1403
    %1410 = vst [vmem:[%s5 + $0x8] sm:$0xff] %v1404
    %1411 = vst [vmem:[%s5 + $0x10] sm:$0xff] %v1405
    %1412 = vst [vmem:[%s5 + $0x18] sm:$0xff] %v1406
    %1413 = vst [vmem:[%s5 + $0x20] sm:$0xff] %v1407
    %1414 = vst.msk [vmem:[%s5 + $0x28] sm:$0xff] %vm132, %v1408
    %v1415 = vld [vmem:[%s5 + $0x30] sm:$0xff]
    %v1416 = vld [vmem:[%s5 + $0x38] sm:$0xff]
    %v1417 = vld [vmem:[%s5 + $0x40] sm:$0xff]
    %v1418 = vld [vmem:[%s5 + $0x48] sm:$0xff]
    %v1419 = vld [vmem:[%s5 + $0x50] sm:$0xff]
    %v1420 = vld [vmem:[%s5 + $0x58] sm:$0xff]
    %s1421 = sld [smem:[#allocation2 + $0x86]]
    %v1422 = vstv %s1421
    %v1423 = vmul.f32 %v1422, %v1347
    %v1424 = vmul.f32 %v1422, %v1348
    %v1425 = vmul.f32 %v1422, %v1349
    %v1426 = vmul.f32 %v1422, %v1350
    %v1427 = vmul.f32 %v1422, %v1351
    %v1428 = vmul.f32 %v1422, %v1352
    %v1429 = vmul.f32 %v1422, %v1353
    %1437 = vrot.lane.b32.xlu0 %v1423, 72
    %v1438 = vpop.permute.xlu0 %1437
    %1439 = vrot.lane.b32.xlu0 %v1424, 72
    %v1440 = vpop.permute.xlu0 %1439
    %1441 = vrot.lane.b32.xlu0 %v1425, 72
    %v1442 = vpop.permute.xlu0 %1441
    %1443 = vrot.lane.b32.xlu0 %v1426, 72
    %v1444 = vpop.permute.xlu0 %1443
    %1445 = vrot.lane.b32.xlu0 %v1427, 72
    %v1446 = vpop.permute.xlu0 %1445
    %1447 = vrot.lane.b32.xlu0 %v1428, 72
    %v1448 = vpop.permute.xlu0 %1447
    %1449 = vrot.lane.b32.xlu0 %v1429, 72
    %v1450 = vpop.permute.xlu0 %1449
    %v1451 = vsel %vm1390, %v1438, %v1440
    %v1452 = vsel %vm1390, %v1440, %v1442
    %v1453 = vsel %vm1390, %v1442, %v1444
    %v1454 = vsel %vm1390, %v1444, %v1446
    %v1455 = vsel %vm1390, %v1446, %v1448
    %v1456 = vsel %vm1390, %v1448, %v1450
    %v1463 = vadd.f32 %v1415, %v1451
    %v1464 = vadd.f32 %v1416, %v1452
    %v1465 = vadd.f32 %v1417, %v1453
    %v1466 = vadd.f32 %v1418, %v1454
    %v1467 = vadd.f32 %v1419, %v1455
    %v1468 = vadd.f32 %v1420, %v1456
    %1469 = vst [vmem:[%s5 + $0x30] sm:$0xff] %v1463
    %1470 = vst [vmem:[%s5 + $0x38] sm:$0xff] %v1464
    %1471 = vst [vmem:[%s5 + $0x40] sm:$0xff] %v1465
    %1472 = vst [vmem:[%s5 + $0x48] sm:$0xff] %v1466
    %1473 = vst [vmem:[%s5 + $0x50] sm:$0xff] %v1467
    %1474 = vst.msk [vmem:[%s5 + $0x58] sm:$0xff] %vm132, %v1468
    %v1475 = vld [vmem:[%s5 + $0x60] sm:$0xff]
    %v1476 = vld [vmem:[%s5 + $0x68] sm:$0xff]
    %v1477 = vld [vmem:[%s5 + $0x70] sm:$0xff]
    %v1478 = vld [vmem:[%s5 + $0x78] sm:$0xff]
    %v1479 = vld [vmem:[%s5 + $0x80] sm:$0xff]
    %v1480 = vld [vmem:[%s5 + $0x88] sm:$0xff]
    %s1481 = sld [smem:[#allocation2 + $0x106]]
    %v1482 = vstv %s1481
    %v1483 = vmul.f32 %v1482, %v1347
    %v1484 = vmul.f32 %v1482, %v1348
    %v1485 = vmul.f32 %v1482, %v1349
    %v1486 = vmul.f32 %v1482, %v1350
    %v1487 = vmul.f32 %v1482, %v1351
    %v1488 = vmul.f32 %v1482, %v1352
    %v1489 = vmul.f32 %v1482, %v1353
    %1497 = vrot.lane.b32.xlu0 %v1483, 72
    %v1498 = vpop.permute.xlu0 %1497
    %1499 = vrot.lane.b32.xlu0 %v1484, 72
    %v1500 = vpop.permute.xlu0 %1499
    %1501 = vrot.lane.b32.xlu0 %v1485, 72
    %v1502 = vpop.permute.xlu0 %1501
    %1503 = vrot.lane.b32.xlu0 %v1486, 72
    %v1504 = vpop.permute.xlu0 %1503
    %1505 = vrot.lane.b32.xlu0 %v1487, 72
    %v1506 = vpop.permute.xlu0 %1505
    %1507 = vrot.lane.b32.xlu0 %v1488, 72
    %v1508 = vpop.permute.xlu0 %1507
    %1509 = vrot.lane.b32.xlu0 %v1489, 72
    %v1510 = vpop.permute.xlu0 %1509
    %v1511 = vsel %vm1390, %v1498, %v1500
    %v1512 = vsel %vm1390, %v1500, %v1502
    %v1513 = vsel %vm1390, %v1502, %v1504
    %v1514 = vsel %vm1390, %v1504, %v1506
    %v1515 = vsel %vm1390, %v1506, %v1508
    %v1516 = vsel %vm1390, %v1508, %v1510
    %v1523 = vadd.f32 %v1475, %v1511
    %v1524 = vadd.f32 %v1476, %v1512
    %v1525 = vadd.f32 %v1477, %v1513
    %v1526 = vadd.f32 %v1478, %v1514
    %v1527 = vadd.f32 %v1479, %v1515
    %v1528 = vadd.f32 %v1480, %v1516
    %1529 = vst [vmem:[%s5 + $0x60] sm:$0xff] %v1523
    %1530 = vst [vmem:[%s5 + $0x68] sm:$0xff] %v1524
    %1531 = vst [vmem:[%s5 + $0x70] sm:$0xff] %v1525
    %1532 = vst [vmem:[%s5 + $0x78] sm:$0xff] %v1526
    %1533 = vst [vmem:[%s5 + $0x80] sm:$0xff] %v1527
    %1534 = vst.msk [vmem:[%s5 + $0x88] sm:$0xff] %vm132, %v1528
    %v1535 = vld [vmem:[%s5 + $0x90] sm:$0xff]
    %v1536 = vld [vmem:[%s5 + $0x98] sm:$0xff]
    %v1537 = vld [vmem:[%s5 + $0xa0] sm:$0xff]
    %v1538 = vld [vmem:[%s5 + $0xa8] sm:$0xff]
    %v1539 = vld [vmem:[%s5 + $0xb0] sm:$0xff]
    %v1540 = vld [vmem:[%s5 + $0xb8] sm:$0xff]
    %s1541 = sld [smem:[#allocation2 + $0x186]]
    %v1542 = vstv %s1541
    %v1543 = vmul.f32 %v1542, %v1347
    %v1544 = vmul.f32 %v1542, %v1348
    %v1545 = vmul.f32 %v1542, %v1349
    %v1546 = vmul.f32 %v1542, %v1350
    %v1547 = vmul.f32 %v1542, %v1351
    %v1548 = vmul.f32 %v1542, %v1352
    %v1549 = vmul.f32 %v1542, %v1353
    %1557 = vrot.lane.b32.xlu0 %v1543, 72
    %v1558 = vpop.permute.xlu0 %1557
    %1559 = vrot.lane.b32.xlu0 %v1544, 72
    %v1560 = vpop.permute.xlu0 %1559
    %1561 = vrot.lane.b32.xlu0 %v1545, 72
    %v1562 = vpop.permute.xlu0 %1561
    %1563 = vrot.lane.b32.xlu0 %v1546, 72
    %v1564 = vpop.permute.xlu0 %1563
    %1565 = vrot.lane.b32.xlu0 %v1547, 72
    %v1566 = vpop.permute.xlu0 %1565
    %1567 = vrot.lane.b32.xlu0 %v1548, 72
    %v1568 = vpop.permute.xlu0 %1567
    %1569 = vrot.lane.b32.xlu0 %v1549, 72
    %v1570 = vpop.permute.xlu0 %1569
    %v1571 = vsel %vm1390, %v1558, %v1560
    %v1572 = vsel %vm1390, %v1560, %v1562
    %v1573 = vsel %vm1390, %v1562, %v1564
    %v1574 = vsel %vm1390, %v1564, %v1566
    %v1575 = vsel %vm1390, %v1566, %v1568
    %v1576 = vsel %vm1390, %v1568, %v1570
    %v1583 = vadd.f32 %v1535, %v1571
    %v1584 = vadd.f32 %v1536, %v1572
    %v1585 = vadd.f32 %v1537, %v1573
    %v1586 = vadd.f32 %v1538, %v1574
    %v1587 = vadd.f32 %v1539, %v1575
    %v1588 = vadd.f32 %v1540, %v1576
    %1589 = vst [vmem:[%s5 + $0x90] sm:$0xff] %v1583
    %1590 = vst [vmem:[%s5 + $0x98] sm:$0xff] %v1584
    %1591 = vst [vmem:[%s5 + $0xa0] sm:$0xff] %v1585
    %1592 = vst [vmem:[%s5 + $0xa8] sm:$0xff] %v1586
    %1593 = vst [vmem:[%s5 + $0xb0] sm:$0xff] %v1587
    %1594 = vst.msk [vmem:[%s5 + $0xb8] sm:$0xff] %vm132, %v1588
    %v1595 = vld [vmem:[%s0] sm:$0xff]
    %v1596 = vld [vmem:[%s0 + $0x8] sm:$0xff]
    %v1597 = vld [vmem:[%s0 + $0x10] sm:$0xff]
    %v1598 = vld [vmem:[%s0 + $0x18] sm:$0xff]
    %v1599 = vld [vmem:[%s0 + $0x20] sm:$0xff]
    %v1600 = vld [vmem:[%s0 + $0x28] sm:$0xff]
    %v1601 = vld [vmem:[%s0 + $0x30] sm:$0xff]
    %v1602 = vld [vmem:[%s5] sm:$0xff]
    %v1603 = vld [vmem:[%s5 + $0x8] sm:$0xff]
    %v1604 = vld [vmem:[%s5 + $0x10] sm:$0xff]
    %v1605 = vld [vmem:[%s5 + $0x18] sm:$0xff]
    %v1606 = vld [vmem:[%s5 + $0x20] sm:$0xff]
    %v1607 = vld [vmem:[%s5 + $0x28] sm:$0xff]
    %s1608 = sld [smem:[#allocation2 + $0x7]]
    %v1609 = vstv %s1608
    %v1610 = vmul.f32 %v1609, %v1595
    %v1611 = vmul.f32 %v1609, %v1596
    %v1612 = vmul.f32 %v1609, %v1597
    %v1613 = vmul.f32 %v1609, %v1598
    %v1614 = vmul.f32 %v1609, %v1599
    %v1615 = vmul.f32 %v1609, %v1600
    %v1616 = vmul.f32 %v1609, %v1601
    %1624 = vrot.lane.b32.xlu0 %v1610, 71
    %v1625 = vpop.permute.xlu0 %1624
    %1626 = vrot.lane.b32.xlu0 %v1611, 71
    %v1627 = vpop.permute.xlu0 %1626
    %1628 = vrot.lane.b32.xlu0 %v1612, 71
    %v1629 = vpop.permute.xlu0 %1628
    %1630 = vrot.lane.b32.xlu0 %v1613, 71
    %v1631 = vpop.permute.xlu0 %1630
    %1632 = vrot.lane.b32.xlu0 %v1614, 71
    %v1633 = vpop.permute.xlu0 %1632
    %1634 = vrot.lane.b32.xlu0 %v1615, 71
    %v1635 = vpop.permute.xlu0 %1634
    %1636 = vrot.lane.b32.xlu0 %v1616, 71
    %v1637 = vpop.permute.xlu0 %1636
    %vm1638 = vcmask 580608
    %v1639 = vsel %vm1638, %v1625, %v1627
    %v1640 = vsel %vm1638, %v1627, %v1629
    %v1641 = vsel %vm1638, %v1629, %v1631
    %v1642 = vsel %vm1638, %v1631, %v1633
    %v1643 = vsel %vm1638, %v1633, %v1635
    %v1644 = vsel %vm1638, %v1635, %v1637
    %v1651 = vadd.f32 %v1602, %v1639
    %v1652 = vadd.f32 %v1603, %v1640
    %v1653 = vadd.f32 %v1604, %v1641
    %v1654 = vadd.f32 %v1605, %v1642
    %v1655 = vadd.f32 %v1606, %v1643
    %v1656 = vadd.f32 %v1607, %v1644
    %1657 = vst [vmem:[%s5] sm:$0xff] %v1651
    %1658 = vst [vmem:[%s5 + $0x8] sm:$0xff] %v1652
    %1659 = vst [vmem:[%s5 + $0x10] sm:$0xff] %v1653
    %1660 = vst [vmem:[%s5 + $0x18] sm:$0xff] %v1654
    %1661 = vst [vmem:[%s5 + $0x20] sm:$0xff] %v1655
    %1662 = vst.msk [vmem:[%s5 + $0x28] sm:$0xff] %vm132, %v1656
    %v1663 = vld [vmem:[%s5 + $0x30] sm:$0xff]
    %v1664 = vld [vmem:[%s5 + $0x38] sm:$0xff]
    %v1665 = vld [vmem:[%s5 + $0x40] sm:$0xff]
    %v1666 = vld [vmem:[%s5 + $0x48] sm:$0xff]
    %v1667 = vld [vmem:[%s5 + $0x50] sm:$0xff]
    %v1668 = vld [vmem:[%s5 + $0x58] sm:$0xff]
    %s1669 = sld [smem:[#allocation2 + $0x87]]
    %v1670 = vstv %s1669
    %v1671 = vmul.f32 %v1670, %v1595
    %v1672 = vmul.f32 %v1670, %v1596
    %v1673 = vmul.f32 %v1670, %v1597
    %v1674 = vmul.f32 %v1670, %v1598
    %v1675 = vmul.f32 %v1670, %v1599
    %v1676 = vmul.f32 %v1670, %v1600
    %v1677 = vmul.f32 %v1670, %v1601
    %1685 = vrot.lane.b32.xlu0 %v1671, 71
    %v1686 = vpop.permute.xlu0 %1685
    %1687 = vrot.lane.b32.xlu0 %v1672, 71
    %v1688 = vpop.permute.xlu0 %1687
    %1689 = vrot.lane.b32.xlu0 %v1673, 71
    %v1690 = vpop.permute.xlu0 %1689
    %1691 = vrot.lane.b32.xlu0 %v1674, 71
    %v1692 = vpop.permute.xlu0 %1691
    %1693 = vrot.lane.b32.xlu0 %v1675, 71
    %v1694 = vpop.permute.xlu0 %1693
    %1695 = vrot.lane.b32.xlu0 %v1676, 71
    %v1696 = vpop.permute.xlu0 %1695
    %1697 = vrot.lane.b32.xlu0 %v1677, 71
    %v1698 = vpop.permute.xlu0 %1697
    %v1699 = vsel %vm1638, %v1686, %v1688
    %v1700 = vsel %vm1638, %v1688, %v1690
    %v1701 = vsel %vm1638, %v1690, %v1692
    %v1702 = vsel %vm1638, %v1692, %v1694
    %v1703 = vsel %vm1638, %v1694, %v1696
    %v1704 = vsel %vm1638, %v1696, %v1698
    %v1711 = vadd.f32 %v1663, %v1699
    %v1712 = vadd.f32 %v1664, %v1700
    %v1713 = vadd.f32 %v1665, %v1701
    %v1714 = vadd.f32 %v1666, %v1702
    %v1715 = vadd.f32 %v1667, %v1703
    %v1716 = vadd.f32 %v1668, %v1704
    %1717 = vst [vmem:[%s5 + $0x30] sm:$0xff] %v1711
    %1718 = vst [vmem:[%s5 + $0x38] sm:$0xff] %v1712
    %1719 = vst [vmem:[%s5 + $0x40] sm:$0xff] %v1713
    %1720 = vst [vmem:[%s5 + $0x48] sm:$0xff] %v1714
    %1721 = vst [vmem:[%s5 + $0x50] sm:$0xff] %v1715
    %1722 = vst.msk [vmem:[%s5 + $0x58] sm:$0xff] %vm132, %v1716
    %v1723 = vld [vmem:[%s5 + $0x60] sm:$0xff]
    %v1724 = vld [vmem:[%s5 + $0x68] sm:$0xff]
    %v1725 = vld [vmem:[%s5 + $0x70] sm:$0xff]
    %v1726 = vld [vmem:[%s5 + $0x78] sm:$0xff]
    %v1727 = vld [vmem:[%s5 + $0x80] sm:$0xff]
    %v1728 = vld [vmem:[%s5 + $0x88] sm:$0xff]
    %s1729 = sld [smem:[#allocation2 + $0x107]]
    %v1730 = vstv %s1729
    %v1731 = vmul.f32 %v1730, %v1595
    %v1732 = vmul.f32 %v1730, %v1596
    %v1733 = vmul.f32 %v1730, %v1597
    %v1734 = vmul.f32 %v1730, %v1598
    %v1735 = vmul.f32 %v1730, %v1599
    %v1736 = vmul.f32 %v1730, %v1600
    %v1737 = vmul.f32 %v1730, %v1601
    %1745 = vrot.lane.b32.xlu0 %v1731, 71
    %v1746 = vpop.permute.xlu0 %1745
    %1747 = vrot.lane.b32.xlu0 %v1732, 71
    %v1748 = vpop.permute.xlu0 %1747
    %1749 = vrot.lane.b32.xlu0 %v1733, 71
    %v1750 = vpop.permute.xlu0 %1749
    %1751 = vrot.lane.b32.xlu0 %v1734, 71
    %v1752 = vpop.permute.xlu0 %1751
    %1753 = vrot.lane.b32.xlu0 %v1735, 71
    %v1754 = vpop.permute.xlu0 %1753
    %1755 = vrot.lane.b32.xlu0 %v1736, 71
    %v1756 = vpop.permute.xlu0 %1755
    %1757 = vrot.lane.b32.xlu0 %v1737, 71
    %v1758 = vpop.permute.xlu0 %1757
    %v1759 = vsel %vm1638, %v1746, %v1748
    %v1760 = vsel %vm1638, %v1748, %v1750
    %v1761 = vsel %vm1638, %v1750, %v1752
    %v1762 = vsel %vm1638, %v1752, %v1754
    %v1763 = vsel %vm1638, %v1754, %v1756
    %v1764 = vsel %vm1638, %v1756, %v1758
    %v1771 = vadd.f32 %v1723, %v1759
    %v1772 = vadd.f32 %v1724, %v1760
    %v1773 = vadd.f32 %v1725, %v1761
    %v1774 = vadd.f32 %v1726, %v1762
    %v1775 = vadd.f32 %v1727, %v1763
    %v1776 = vadd.f32 %v1728, %v1764
    %1777 = vst [vmem:[%s5 + $0x60] sm:$0xff] %v1771
    %1778 = vst [vmem:[%s5 + $0x68] sm:$0xff] %v1772
    %1779 = vst [vmem:[%s5 + $0x70] sm:$0xff] %v1773
    %1780 = vst [vmem:[%s5 + $0x78] sm:$0xff] %v1774
    %1781 = vst [vmem:[%s5 + $0x80] sm:$0xff] %v1775
    %1782 = vst.msk [vmem:[%s5 + $0x88] sm:$0xff] %vm132, %v1776
    %v1783 = vld [vmem:[%s5 + $0x90] sm:$0xff]
    %v1784 = vld [vmem:[%s5 + $0x98] sm:$0xff]
    %v1785 = vld [vmem:[%s5 + $0xa0] sm:$0xff]
    %v1786 = vld [vmem:[%s5 + $0xa8] sm:$0xff]
    %v1787 = vld [vmem:[%s5 + $0xb0] sm:$0xff]
    %v1788 = vld [vmem:[%s5 + $0xb8] sm:$0xff]
    %s1789 = sld [smem:[#allocation2 + $0x187]]
    %v1790 = vstv %s1789
    %v1791 = vmul.f32 %v1790, %v1595
    %v1792 = vmul.f32 %v1790, %v1596
    %v1793 = vmul.f32 %v1790, %v1597
    %v1794 = vmul.f32 %v1790, %v1598
    %v1795 = vmul.f32 %v1790, %v1599
    %v1796 = vmul.f32 %v1790, %v1600
    %v1797 = vmul.f32 %v1790, %v1601
    %1805 = vrot.lane.b32.xlu0 %v1791, 71
    %v1806 = vpop.permute.xlu0 %1805
    %1807 = vrot.lane.b32.xlu0 %v1792, 71
    %v1808 = vpop.permute.xlu0 %1807
    %1809 = vrot.lane.b32.xlu0 %v1793, 71
    %v1810 = vpop.permute.xlu0 %1809
    %1811 = vrot.lane.b32.xlu0 %v1794, 71
    %v1812 = vpop.permute.xlu0 %1811
    %1813 = vrot.lane.b32.xlu0 %v1795, 71
    %v1814 = vpop.permute.xlu0 %1813
    %1815 = vrot.lane.b32.xlu0 %v1796, 71
    %v1816 = vpop.permute.xlu0 %1815
    %1817 = vrot.lane.b32.xlu0 %v1797, 71
    %v1818 = vpop.permute.xlu0 %1817
    %v1819 = vsel %vm1638, %v1806, %v1808
    %v1820 = vsel %vm1638, %v1808, %v1810
    %v1821 = vsel %vm1638, %v1810, %v1812
    %v1822 = vsel %vm1638, %v1812, %v1814
    %v1823 = vsel %vm1638, %v1814, %v1816
    %v1824 = vsel %vm1638, %v1816, %v1818
    %v1831 = vadd.f32 %v1783, %v1819
    %v1832 = vadd.f32 %v1784, %v1820
    %v1833 = vadd.f32 %v1785, %v1821
    %v1834 = vadd.f32 %v1786, %v1822
    %v1835 = vadd.f32 %v1787, %v1823
    %v1836 = vadd.f32 %v1788, %v1824
    %1837 = vst [vmem:[%s5 + $0x90] sm:$0xff] %v1831
    %1838 = vst [vmem:[%s5 + $0x98] sm:$0xff] %v1832
    %1839 = vst [vmem:[%s5 + $0xa0] sm:$0xff] %v1833
    %1840 = vst [vmem:[%s5 + $0xa8] sm:$0xff] %v1834
    %1841 = vst [vmem:[%s5 + $0xb0] sm:$0xff] %v1835
    %1842 = vst.msk [vmem:[%s5 + $0xb8] sm:$0xff] %vm132, %v1836
    %v1843 = vld [vmem:[%s0] sm:$0xff]
    %v1844 = vld [vmem:[%s0 + $0x8] sm:$0xff]
    %v1845 = vld [vmem:[%s0 + $0x10] sm:$0xff]
    %v1846 = vld [vmem:[%s0 + $0x18] sm:$0xff]
    %v1847 = vld [vmem:[%s0 + $0x20] sm:$0xff]
    %v1848 = vld [vmem:[%s0 + $0x28] sm:$0xff]
    %v1849 = vld [vmem:[%s0 + $0x30] sm:$0xff]
    %v1850 = vld [vmem:[%s5] sm:$0xff]
    %v1851 = vld [vmem:[%s5 + $0x8] sm:$0xff]
    %v1852 = vld [vmem:[%s5 + $0x10] sm:$0xff]
    %v1853 = vld [vmem:[%s5 + $0x18] sm:$0xff]
    %v1854 = vld [vmem:[%s5 + $0x20] sm:$0xff]
    %v1855 = vld [vmem:[%s5 + $0x28] sm:$0xff]
    %s1856 = sld [smem:[#allocation2 + $0x8]]
    %v1857 = vstv %s1856
    %v1858 = vmul.f32 %v1857, %v1843
    %v1859 = vmul.f32 %v1857, %v1844
    %v1860 = vmul.f32 %v1857, %v1845
    %v1861 = vmul.f32 %v1857, %v1846
    %v1862 = vmul.f32 %v1857, %v1847
    %v1863 = vmul.f32 %v1857, %v1848
    %v1864 = vmul.f32 %v1857, %v1849
    %1872 = vrot.lane.b32.xlu0 %v1858, 70
    %v1873 = vpop.permute.xlu0 %1872
    %1874 = vrot.lane.b32.xlu0 %v1859, 70
    %v1875 = vpop.permute.xlu0 %1874
    %1876 = vrot.lane.b32.xlu0 %v1860, 70
    %v1877 = vpop.permute.xlu0 %1876
    %1878 = vrot.lane.b32.xlu0 %v1861, 70
    %v1879 = vpop.permute.xlu0 %1878
    %1880 = vrot.lane.b32.xlu0 %v1862, 70
    %v1881 = vpop.permute.xlu0 %1880
    %1882 = vrot.lane.b32.xlu0 %v1863, 70
    %v1883 = vpop.permute.xlu0 %1882
    %1884 = vrot.lane.b32.xlu0 %v1864, 70
    %v1885 = vpop.permute.xlu0 %1884
    %vm1886 = vcmask 572416
    %v1887 = vsel %vm1886, %v1873, %v1875
    %v1888 = vsel %vm1886, %v1875, %v1877
    %v1889 = vsel %vm1886, %v1877, %v1879
    %v1890 = vsel %vm1886, %v1879, %v1881
    %v1891 = vsel %vm1886, %v1881, %v1883
    %v1892 = vsel %vm1886, %v1883, %v1885
    %v1899 = vadd.f32 %v1850, %v1887
    %v1900 = vadd.f32 %v1851, %v1888
    %v1901 = vadd.f32 %v1852, %v1889
    %v1902 = vadd.f32 %v1853, %v1890
    %v1903 = vadd.f32 %v1854, %v1891
    %v1904 = vadd.f32 %v1855, %v1892
    %1905 = vst [vmem:[%s5] sm:$0xff] %v1899
    %1906 = vst [vmem:[%s5 + $0x8] sm:$0xff] %v1900
    %1907 = vst [vmem:[%s5 + $0x10] sm:$0xff] %v1901
    %1908 = vst [vmem:[%s5 + $0x18] sm:$0xff] %v1902
    %1909 = vst [vmem:[%s5 + $0x20] sm:$0xff] %v1903
    %1910 = vst.msk [vmem:[%s5 + $0x28] sm:$0xff] %vm132, %v1904
    %v1911 = vld [vmem:[%s5 + $0x30] sm:$0xff]
    %v1912 = vld [vmem:[%s5 + $0x38] sm:$0xff]
    %v1913 = vld [vmem:[%s5 + $0x40] sm:$0xff]
    %v1914 = vld [vmem:[%s5 + $0x48] sm:$0xff]
    %v1915 = vld [vmem:[%s5 + $0x50] sm:$0xff]
    %v1916 = vld [vmem:[%s5 + $0x58] sm:$0xff]
    %s1917 = sld [smem:[#allocation2 + $0x88]]
    %v1918 = vstv %s1917
    %v1919 = vmul.f32 %v1918, %v1843
    %v1920 = vmul.f32 %v1918, %v1844
    %v1921 = vmul.f32 %v1918, %v1845
    %v1922 = vmul.f32 %v1918, %v1846
    %v1923 = vmul.f32 %v1918, %v1847
    %v1924 = vmul.f32 %v1918, %v1848
    %v1925 = vmul.f32 %v1918, %v1849
    %1933 = vrot.lane.b32.xlu0 %v1919, 70
    %v1934 = vpop.permute.xlu0 %1933
    %1935 = vrot.lane.b32.xlu0 %v1920, 70
    %v1936 = vpop.permute.xlu0 %1935
    %1937 = vrot.lane.b32.xlu0 %v1921, 70
    %v1938 = vpop.permute.xlu0 %1937
    %1939 = vrot.lane.b32.xlu0 %v1922, 70
    %v1940 = vpop.permute.xlu0 %1939
    %1941 = vrot.lane.b32.xlu0 %v1923, 70
    %v1942 = vpop.permute.xlu0 %1941
    %1943 = vrot.lane.b32.xlu0 %v1924, 70
    %v1944 = vpop.permute.xlu0 %1943
    %1945 = vrot.lane.b32.xlu0 %v1925, 70
    %v1946 = vpop.permute.xlu0 %1945
    %v1947 = vsel %vm1886, %v1934, %v1936
    %v1948 = vsel %vm1886, %v1936, %v1938
    %v1949 = vsel %vm1886, %v1938, %v1940
    %v1950 = vsel %vm1886, %v1940, %v1942
    %v1951 = vsel %vm1886, %v1942, %v1944
    %v1952 = vsel %vm1886, %v1944, %v1946
    %v1959 = vadd.f32 %v1911, %v1947
    %v1960 = vadd.f32 %v1912, %v1948
    %v1961 = vadd.f32 %v1913, %v1949
    %v1962 = vadd.f32 %v1914, %v1950
    %v1963 = vadd.f32 %v1915, %v1951
    %v1964 = vadd.f32 %v1916, %v1952
    %1965 = vst [vmem:[%s5 + $0x30] sm:$0xff] %v1959
    %1966 = vst [vmem:[%s5 + $0x38] sm:$0xff] %v1960
    %1967 = vst [vmem:[%s5 + $0x40] sm:$0xff] %v1961
    %1968 = vst [vmem:[%s5 + $0x48] sm:$0xff] %v1962
    %1969 = vst [vmem:[%s5 + $0x50] sm:$0xff] %v1963
    %1970 = vst.msk [vmem:[%s5 + $0x58] sm:$0xff] %vm132, %v1964
    %v1971 = vld [vmem:[%s5 + $0x60] sm:$0xff]
    %v1972 = vld [vmem:[%s5 + $0x68] sm:$0xff]
    %v1973 = vld [vmem:[%s5 + $0x70] sm:$0xff]
    %v1974 = vld [vmem:[%s5 + $0x78] sm:$0xff]
    %v1975 = vld [vmem:[%s5 + $0x80] sm:$0xff]
    %v1976 = vld [vmem:[%s5 + $0x88] sm:$0xff]
    %s1977 = sld [smem:[#allocation2 + $0x108]]
    %v1978 = vstv %s1977
    %v1979 = vmul.f32 %v1978, %v1843
    %v1980 = vmul.f32 %v1978, %v1844
    %v1981 = vmul.f32 %v1978, %v1845
    %v1982 = vmul.f32 %v1978, %v1846
    %v1983 = vmul.f32 %v1978, %v1847
    %v1984 = vmul.f32 %v1978, %v1848
    %v1985 = vmul.f32 %v1978, %v1849
    %1993 = vrot.lane.b32.xlu0 %v1979, 70
    %v1994 = vpop.permute.xlu0 %1993
    %1995 = vrot.lane.b32.xlu0 %v1980, 70
    %v1996 = vpop.permute.xlu0 %1995
    %1997 = vrot.lane.b32.xlu0 %v1981, 70
    %v1998 = vpop.permute.xlu0 %1997
    %1999 = vrot.lane.b32.xlu0 %v1982, 70
    %v2000 = vpop.permute.xlu0 %1999
    %2001 = vrot.lane.b32.xlu0 %v1983, 70
    %v2002 = vpop.permute.xlu0 %2001
    %2003 = vrot.lane.b32.xlu0 %v1984, 70
    %v2004 = vpop.permute.xlu0 %2003
    %2005 = vrot.lane.b32.xlu0 %v1985, 70
    %v2006 = vpop.permute.xlu0 %2005
    %v2007 = vsel %vm1886, %v1994, %v1996
    %v2008 = vsel %vm1886, %v1996, %v1998
    %v2009 = vsel %vm1886, %v1998, %v2000
    %v2010 = vsel %vm1886, %v2000, %v2002
    %v2011 = vsel %vm1886, %v2002, %v2004
    %v2012 = vsel %vm1886, %v2004, %v2006
    %v2019 = vadd.f32 %v1971, %v2007
    %v2020 = vadd.f32 %v1972, %v2008
    %v2021 = vadd.f32 %v1973, %v2009
    %v2022 = vadd.f32 %v1974, %v2010
    %v2023 = vadd.f32 %v1975, %v2011
    %v2024 = vadd.f32 %v1976, %v2012
    %2025 = vst [vmem:[%s5 + $0x60] sm:$0xff] %v2019
    %2026 = vst [vmem:[%s5 + $0x68] sm:$0xff] %v2020
    %2027 = vst [vmem:[%s5 + $0x70] sm:$0xff] %v2021
    %2028 = vst [vmem:[%s5 + $0x78] sm:$0xff] %v2022
    %2029 = vst [vmem:[%s5 + $0x80] sm:$0xff] %v2023
    %2030 = vst.msk [vmem:[%s5 + $0x88] sm:$0xff] %vm132, %v2024
    %v2031 = vld [vmem:[%s5 + $0x90] sm:$0xff]
    %v2032 = vld [vmem:[%s5 + $0x98] sm:$0xff]
    %v2033 = vld [vmem:[%s5 + $0xa0] sm:$0xff]
    %v2034 = vld [vmem:[%s5 + $0xa8] sm:$0xff]
    %v2035 = vld [vmem:[%s5 + $0xb0] sm:$0xff]
    %v2036 = vld [vmem:[%s5 + $0xb8] sm:$0xff]
    %s2037 = sld [smem:[#allocation2 + $0x188]]
    %v2038 = vstv %s2037
    %v2039 = vmul.f32 %v2038, %v1843
    %v2040 = vmul.f32 %v2038, %v1844
    %v2041 = vmul.f32 %v2038, %v1845
    %v2042 = vmul.f32 %v2038, %v1846
    %v2043 = vmul.f32 %v2038, %v1847
    %v2044 = vmul.f32 %v2038, %v1848
    %v2045 = vmul.f32 %v2038, %v1849
    %2053 = vrot.lane.b32.xlu0 %v2039, 70
    %v2054 = vpop.permute.xlu0 %2053
    %2055 = vrot.lane.b32.xlu0 %v2040, 70
    %v2056 = vpop.permute.xlu0 %2055
    %2057 = vrot.lane.b32.xlu0 %v2041, 70
    %v2058 = vpop.permute.xlu0 %2057
    %2059 = vrot.lane.b32.xlu0 %v2042, 70
    %v2060 = vpop.permute.xlu0 %2059
    %2061 = vrot.lane.b32.xlu0 %v2043, 70
    %v2062 = vpop.permute.xlu0 %2061
    %2063 = vrot.lane.b32.xlu0 %v2044, 70
    %v2064 = vpop.permute.xlu0 %2063
    %2065 = vrot.lane.b32.xlu0 %v2045, 70
    %v2066 = vpop.permute.xlu0 %2065
    %v2067 = vsel %vm1886, %v2054, %v2056
    %v2068 = vsel %vm1886, %v2056, %v2058
    %v2069 = vsel %vm1886, %v2058, %v2060
    %v2070 = vsel %vm1886, %v2060, %v2062
    %v2071 = vsel %vm1886, %v2062, %v2064
    %v2072 = vsel %vm1886, %v2064, %v2066
    %v2079 = vadd.f32 %v2031, %v2067
    %v2080 = vadd.f32 %v2032, %v2068
    %v2081 = vadd.f32 %v2033, %v2069
    %v2082 = vadd.f32 %v2034, %v2070
    %v2083 = vadd.f32 %v2035, %v2071
    %v2084 = vadd.f32 %v2036, %v2072
    %2085 = vst [vmem:[%s5 + $0x90] sm:$0xff] %v2079
    %2086 = vst [vmem:[%s5 + $0x98] sm:$0xff] %v2080
    %2087 = vst [vmem:[%s5 + $0xa0] sm:$0xff] %v2081
    %2088 = vst [vmem:[%s5 + $0xa8] sm:$0xff] %v2082
    %2089 = vst [vmem:[%s5 + $0xb0] sm:$0xff] %v2083
    %2090 = vst.msk [vmem:[%s5 + $0xb8] sm:$0xff] %vm132, %v2084
    %v2091 = vld [vmem:[#allocation8] sm:$0x1]
    %v2093 = vlaneseq
    %v2094 = vshrl.u32 %v2093, 7
    %v2095 = vsub.s32 0, %v2094
    %v2096 = vrot.slane %v2091, %v2095
    %v2098 = vadd.f32 %v2096, 0.0
    %2099 = vst [vmem:[%s6] sm:$0xff] %v2098
    %v2100 = vld [vmem:[%s5] sm:$0xff]
    %v2101 = vld [vmem:[%s5 + $0x8] sm:$0xff]
    %v2102 = vld [vmem:[%s5 + $0x10] sm:$0xff]
    %v2103 = vld [vmem:[%s5 + $0x18] sm:$0xff]
    %v2104 = vld [vmem:[%s5 + $0x20] sm:$0xff]
    %v2105 = vld [vmem:[%s5 + $0x28] sm:$0xff]
    %v2106 = vmax.f32 %v2100, 0.0
    %v2107 = vmax.f32 %v2101, 0.0
    %v2108 = vmax.f32 %v2102, 0.0
    %v2109 = vmax.f32 %v2103, 0.0
    %v2110 = vmax.f32 %v2104, 0.0
    %v2111 = vmax.f32 %v2105, 0.0
    %v2112 = vld [vmem:[%s6] sm:$0xff]
    %v2113 = vld [vmem:[#allocation7] sm:$0xff]
    %v2114 = vld [vmem:[#allocation7 + $0x8] sm:$0xff]
    %v2115 = vld [vmem:[#allocation7 + $0x10] sm:$0xff]
    %v2116 = vld [vmem:[#allocation7 + $0x18] sm:$0xff]
    %v2117 = vld [vmem:[#allocation7 + $0x20] sm:$0xff]
    %v2118 = vld [vmem:[#allocation7 + $0x28] sm:$0xff]
    %v2119 = vld [vmem:[#allocation7 + $0x30] sm:$0xff]
    %v2120 = vld [vmem:[#allocation7 + $0x38] sm:$0xff]
    %v2121 = vld [vmem:[#allocation7 + $0x40] sm:$0xff]
    %v2122 = vld [vmem:[#allocation7 + $0x48] sm:$0xff]
    %v2123 = vld [vmem:[#allocation7 + $0x50] sm:$0xff]
    %v2124 = vld [vmem:[#allocation7 + $0x58] sm:$0xff]
    %v2125 = vld [vmem:[#allocation7 + $0x60] sm:$0xff]
    %v2126 = vld [vmem:[#allocation7 + $0x68] sm:$0xff]
    %v2127 = vld [vmem:[#allocation7 + $0x70] sm:$0xff]
    %v2128 = vld [vmem:[#allocation7 + $0x78] sm:$0xff]
    %v2129 = vld [vmem:[#allocation7 + $0x80] sm:$0xff]
    %v2130 = vld [vmem:[#allocation7 + $0x88] sm:$0xff]
    %v2131 = vld [vmem:[#allocation7 + $0x90] sm:$0xff]
    %v2132 = vld [vmem:[#allocation7 + $0x98] sm:$0xff]
    %v2133 = vld [vmem:[#allocation7 + $0xa0] sm:$0xff]
    %v2134 = vld [vmem:[#allocation7 + $0xa8] sm:$0xff]
    %v2135 = vld [vmem:[#allocation7 + $0xb0] sm:$0xff]
    %v2136 = vld [vmem:[#allocation7 + $0xb8] sm:$0xff]
    %v2137 = vld [vmem:[#allocation7 + $0xc0] sm:$0xff]
    %v2138 = vld [vmem:[#allocation7 + $0xc8] sm:$0xff]
    %v2139 = vld [vmem:[#allocation7 + $0xd0] sm:$0xff]
    %v2140 = vld [vmem:[#allocation7 + $0xd8] sm:$0xff]
    %v2141 = vld [vmem:[#allocation7 + $0xe0] sm:$0xff]
    %v2142 = vld [vmem:[#allocation7 + $0xe8] sm:$0xff]
    %v2143 = vld [vmem:[#allocation7 + $0xf0] sm:$0xff]
    %v2144 = vld [vmem:[#allocation7 + $0xf8] sm:$0xff]
    %v2145 = vld [vmem:[#allocation7 + $0x100] sm:$0xff]
    %v2146 = vld [vmem:[#allocation7 + $0x108] sm:$0xff]
    %v2147 = vld [vmem:[#allocation7 + $0x110] sm:$0xff]
    %v2148 = vld [vmem:[#allocation7 + $0x118] sm:$0xff]
    %v2149 = vld [vmem:[#allocation7 + $0x120] sm:$0xff]
    %v2150 = vld [vmem:[#allocation7 + $0x128] sm:$0xff]
    %v2151 = vld [vmem:[#allocation7 + $0x130] sm:$0xff]
    %v2152 = vld [vmem:[#allocation7 + $0x138] sm:$0xff]
    %v2153 = vld [vmem:[#allocation7 + $0x140] sm:$0xff]
    %v2154 = vld [vmem:[#allocation7 + $0x148] sm:$0xff]
    %v2155 = vld [vmem:[#allocation7 + $0x150] sm:$0xff]
    %v2156 = vld [vmem:[#allocation7 + $0x158] sm:$0xff]
    %v2157 = vld [vmem:[#allocation7 + $0x160] sm:$0xff]
    %v2158 = vld [vmem:[#allocation7 + $0x168] sm:$0xff]
    %v2159 = vld [vmem:[#allocation7 + $0x170] sm:$0xff]
    %v2160 = vld [vmem:[#allocation7 + $0x178] sm:$0xff]
    %v2161 = vld [vmem:[#allocation7 + $0x180] sm:$0xff]
    %v2162 = vld [vmem:[#allocation7 + $0x188] sm:$0xff]
    %v2163 = vld [vmem:[#allocation7 + $0x190] sm:$0xff]
    %v2164 = vld [vmem:[#allocation7 + $0x198] sm:$0xff]
    %v2165 = vld [vmem:[#allocation7 + $0x1a0] sm:$0xff]
    %v2166 = vld [vmem:[#allocation7 + $0x1a8] sm:$0xff]
    %v2167 = vld [vmem:[#allocation7 + $0x1b0] sm:$0xff]
    %v2168 = vld [vmem:[#allocation7 + $0x1b8] sm:$0xff]
    %v2169 = vld [vmem:[#allocation7 + $0x1c0] sm:$0xff]
    %v2170 = vld [vmem:[#allocation7 + $0x1c8] sm:$0xff]
    %v2171 = vld [vmem:[#allocation7 + $0x1d0] sm:$0xff]
    %v2172 = vld [vmem:[#allocation7 + $0x1d8] sm:$0xff]
    %v2173 = vld [vmem:[#allocation7 + $0x1e0] sm:$0xff]
    %v2174 = vld [vmem:[#allocation7 + $0x1e8] sm:$0xff]
    %v2175 = vld [vmem:[#allocation7 + $0x1f0] sm:$0xff]
    %v2176 = vld [vmem:[#allocation7 + $0x1f8] sm:$0xff]
    %v2177 = vld [vmem:[#allocation7 + $0x200] sm:$0xff]
    %v2178 = vld [vmem:[#allocation7 + $0x208] sm:$0xff]
    %v2179 = vld [vmem:[#allocation7 + $0x210] sm:$0xff]
    %v2180 = vld [vmem:[#allocation7 + $0x218] sm:$0xff]
    %v2181 = vld [vmem:[#allocation7 + $0x220] sm:$0xff]
    %v2182 = vld [vmem:[#allocation7 + $0x228] sm:$0xff]
    %v2183 = vld [vmem:[#allocation7 + $0x230] sm:$0xff]
    %v2184 = vld [vmem:[#allocation7 + $0x238] sm:$0xff]
    %v2185 = vld [vmem:[#allocation7 + $0x240] sm:$0xff]
    %v2186 = vld [vmem:[#allocation7 + $0x248] sm:$0xff]
    %v2187 = vld [vmem:[#allocation7 + $0x250] sm:$0xff]
    %v2188 = vld [vmem:[#allocation7 + $0x258] sm:$0xff]
    %v2189 = vld [vmem:[#allocation7 + $0x260] sm:$0xff]
    %v2190 = vld [vmem:[#allocation7 + $0x268] sm:$0xff]
    %v2191 = vld [vmem:[#allocation7 + $0x270] sm:$0xff]
    %v2192 = vld [vmem:[#allocation7 + $0x278] sm:$0xff]
    %v2193 = vld [vmem:[#allocation7 + $0x280] sm:$0xff]
    %v2194 = vld [vmem:[#allocation7 + $0x288] sm:$0xff]
    %v2195 = vld [vmem:[#allocation7 + $0x290] sm:$0xff]
    %v2196 = vld [vmem:[#allocation7 + $0x298] sm:$0xff]
    %v2197 = vld [vmem:[#allocation7 + $0x2a0] sm:$0xff]
    %v2198 = vld [vmem:[#allocation7 + $0x2a8] sm:$0xff]
    %v2199 = vld [vmem:[#allocation7 + $0x2b0] sm:$0xff]
    %v2200 = vld [vmem:[#allocation7 + $0x2b8] sm:$0xff]
    %v2201 = vld [vmem:[#allocation7 + $0x2c0] sm:$0xff]
    %v2202 = vld [vmem:[#allocation7 + $0x2c8] sm:$0xff]
    %v2203 = vld [vmem:[#allocation7 + $0x2d0] sm:$0xff]
    %v2205 = vsel %vm132, %v2111, 0
    %2207 = vmatprep.subr.mxu0 0.0
    %2208 = vmatpush1.msra.mxu0 %v2113
    %2209 = vmatprep.subr.mxu0 0.0
    %2210 = vmatpush1.msra.mxu0 %v2114
    %2211 = vmatprep.subr.mxu0 0.0
    %2212 = vmatpush1.msra.mxu0 %v2115
    %2213 = vmatprep.subr.mxu0 0.0
    %2214 = vmatpush1.msra.mxu0 %v2116
    %2215 = vmatprep.subr.mxu0 0.0
    %2216 = vmatpush1.msra.mxu0 %v2117
    %2217 = vmatprep.subr.mxu0 0.0
    %2218 = vmatpush1.msra.mxu0 %v2118
    %2219 = vmatprep.subr.mxu0 0.0
    %2220 = vmatpush1.msra.mxu0 %v2119
    %2221 = vmatprep.subr.mxu0 0.0
    %2222 = vmatpush1.msra.mxu0 %v2120
    %2223 = vmatprep.subr.mxu0 0.0
    %2224 = vmatpush1.msra.mxu0 %v2121
    %2225 = vmatprep.subr.mxu0 0.0
    %2226 = vmatpush1.msra.mxu0 %v2122
    %2227 = vmatprep.subr.mxu0 0.0
    %2228 = vmatpush1.msra.mxu0 %v2123
    %2229 = vmatprep.subr.mxu0 0.0
    %2230 = vmatpush1.msra.mxu0 %v2124
    %2231 = vmatprep.subr.mxu0 0.0
    %2232 = vmatpush1.msra.mxu0 %v2125
    %2233 = vmatprep.subr.mxu0 0.0
    %2234 = vmatpush1.msra.mxu0 %v2126
    %2235 = vmatprep.subr.mxu0 0.0
    %2236 = vmatpush1.msra.mxu0 %v2127
    %2237 = vmatprep.subr.mxu0 0.0
    %2238 = vmatpush1.msra.mxu0 %v2128
    %2239 = vmatprep.subr.mxu0 0.0
    %2240 = vmatpush1.msra.mxu0 %v2129
    %2241 = vmatprep.subr.mxu0 0.0
    %2242 = vmatpush1.msra.mxu0 %v2130
    %2243 = vmatprep.subr.mxu0 0.0
    %2244 = vmatpush1.msra.mxu0 %v2131
    %2245 = vmatprep.subr.mxu0 0.0
    %2246 = vmatpush1.msra.mxu0 %v2132
    %2247 = vmatprep.subr.mxu0 0.0
    %2248 = vmatpush1.msra.mxu0 %v2133
    %2249 = vmatprep.subr.mxu0 0.0
    %2250 = vmatpush1.msra.mxu0 %v2134
    %2251 = vmatprep.subr.mxu0 0.0
    %2252 = vmatpush1.msra.mxu0 %v2135
    %2253 = vmatprep.subr.mxu0 0.0
    %2254 = vmatpush1.msra.mxu0 %v2136
    %2255 = vmatprep.subr.mxu0 0.0
    %2256 = vmatpush1.msra.mxu0 %v2137
    %2257 = vmatprep.subr.mxu0 0.0
    %2258 = vmatpush1.msra.mxu0 %v2138
    %2259 = vmatprep.subr.mxu0 0.0
    %2260 = vmatpush1.msra.mxu0 %v2139
    %2261 = vmatprep.subr.mxu0 0.0
    %2262 = vmatpush1.msra.mxu0 %v2140
    %2263 = vmatprep.subr.mxu0 0.0
    %2264 = vmatpush1.msra.mxu0 %v2141
    %2265 = vmatprep.subr.mxu0 0.0
    %2266 = vmatpush1.msra.mxu0 %v2142
    %2267 = vmatprep.subr.mxu0 0.0
    %2268 = vmatpush1.msra.mxu0 %v2143
    %2269 = vmatprep.subr.mxu0 0.0
    %2270 = vmatpush1.msra.mxu0 %v2144
    %2271 = vmatprep.mubr.f32.mxu0 %v2107
    %2272 = vmatmul.mubr.f32.gmra.mrb[0].mxu0 %v2106
    %v2273 = vpop.f32.mrb[0].mxu0
    %v2274 = vadd.f32 0.0, %v2273
    %v2275 = vpop.f32.mrb[0].mxu0
    %2276 = vdwg.mxu0
    %2277 = vmatprep.subr.mxu0 0.0
    %2278 = vmatpush1.msra.mxu0 %v2145
    %2279 = vmatprep.subr.mxu0 0.0
    %2280 = vmatpush1.msra.mxu0 %v2146
    %2281 = vmatprep.subr.mxu0 0.0
    %2282 = vmatpush1.msra.mxu0 %v2147
    %2283 = vmatprep.subr.mxu0 0.0
    %2284 = vmatpush1.msra.mxu0 %v2148
    %2285 = vmatprep.subr.mxu0 0.0
    %2286 = vmatpush1.msra.mxu0 %v2149
    %2287 = vmatprep.subr.mxu0 0.0
    %2288 = vmatpush1.msra.mxu0 %v2150
    %2289 = vmatprep.subr.mxu0 0.0
    %2290 = vmatpush1.msra.mxu0 %v2151
    %2291 = vmatprep.subr.mxu0 0.0
    %2292 = vmatpush1.msra.mxu0 %v2152
    %2293 = vmatprep.subr.mxu0 0.0
    %2294 = vmatpush1.msra.mxu0 %v2153
    %2295 = vmatprep.subr.mxu0 0.0
    %2296 = vmatpush1.msra.mxu0 %v2154
    %2297 = vmatprep.subr.mxu0 0.0
    %2298 = vmatpush1.msra.mxu0 %v2155
    %2299 = vmatprep.subr.mxu0 0.0
    %2300 = vmatpush1.msra.mxu0 %v2156
    %2301 = vmatprep.subr.mxu0 0.0
    %2302 = vmatpush1.msra.mxu0 %v2157
    %2303 = vmatprep.subr.mxu0 0.0
    %2304 = vmatpush1.msra.mxu0 %v2158
    %2305 = vmatprep.subr.mxu0 0.0
    %2306 = vmatpush1.msra.mxu0 %v2159
    %2307 = vmatprep.subr.mxu0 0.0
    %2308 = vmatpush1.msra.mxu0 %v2160
    %2309 = vmatprep.subr.mxu0 0.0
    %2310 = vmatpush1.msra.mxu0 %v2161
    %2311 = vmatprep.subr.mxu0 0.0
    %2312 = vmatpush1.msra.mxu0 %v2162
    %2313 = vmatprep.subr.mxu0 0.0
    %2314 = vmatpush1.msra.mxu0 %v2163
    %2315 = vmatprep.subr.mxu0 0.0
    %2316 = vmatpush1.msra.mxu0 %v2164
    %2317 = vmatprep.subr.mxu0 0.0
    %2318 = vmatpush1.msra.mxu0 %v2165
    %2319 = vmatprep.subr.mxu0 0.0
    %2320 = vmatpush1.msra.mxu0 %v2166
    %2321 = vmatprep.subr.mxu0 0.0
    %2322 = vmatpush1.msra.mxu0 %v2167
    %2323 = vmatprep.subr.mxu0 0.0
    %2324 = vmatpush1.msra.mxu0 %v2168
    %2325 = vmatprep.subr.mxu0 0.0
    %2326 = vmatpush1.msra.mxu0 %v2169
    %2327 = vmatprep.subr.mxu0 0.0
    %2328 = vmatpush1.msra.mxu0 %v2170
    %2329 = vmatprep.subr.mxu0 0.0
    %2330 = vmatpush1.msra.mxu0 %v2171
    %2331 = vmatprep.subr.mxu0 0.0
    %2332 = vmatpush1.msra.mxu0 %v2172
    %2333 = vmatprep.subr.mxu0 0.0
    %2334 = vmatpush1.msra.mxu0 %v2173
    %2335 = vmatprep.subr.mxu0 0.0
    %2336 = vmatpush1.msra.mxu0 %v2174
    %2337 = vmatprep.subr.mxu0 0.0
    %2338 = vmatpush1.msra.mxu0 %v2175
    %2339 = vmatprep.subr.mxu0 0.0
    %2340 = vmatpush1.msra.mxu0 %v2176
    %2341 = vmatprep.mubr.f32.mxu0 %v2109
    %2342 = vmatmul.mubr.f32.gmra.mrb[0].mxu0 %v2108
    %v2343 = vpop.f32.mrb[0].mxu0
    %v2344 = vadd.f32 %v2274, %v2343
    %v2345 = vpop.f32.mrb[0].mxu0
    %2346 = vdwg.mxu0
    %2347 = vmatprep.subr.mxu0 0.0
    %2348 = vmatpush1.msra.mxu0 %v2177
    %2349 = vmatprep.subr.mxu0 0.0
    %2350 = vmatpush1.msra.mxu0 %v2178
    %2351 = vmatprep.subr.mxu0 0.0
    %2352 = vmatpush1.msra.mxu0 %v2179
    %2353 = vmatprep.subr.mxu0 0.0
    %2354 = vmatpush1.msra.mxu0 %v2180
    %2355 = vmatprep.subr.mxu0 0.0
    %2356 = vmatpush1.msra.mxu0 %v2181
    %2357 = vmatprep.subr.mxu0 0.0
    %2358 = vmatpush1.msra.mxu0 %v2182
    %2359 = vmatprep.subr.mxu0 0.0
    %2360 = vmatpush1.msra.mxu0 %v2183
    %2361 = vmatprep.subr.mxu0 0.0
    %2362 = vmatpush1.msra.mxu0 %v2184
    %2363 = vmatprep.subr.mxu0 0.0
    %2364 = vmatpush1.msra.mxu0 %v2185
    %2365 = vmatprep.subr.mxu0 0.0
    %2366 = vmatpush1.msra.mxu0 %v2186
    %2367 = vmatprep.subr.mxu0 0.0
    %2368 = vmatpush1.msra.mxu0 %v2187
    %2369 = vmatprep.subr.mxu0 0.0
    %2370 = vmatpush1.msra.mxu0 %v2188
    %2371 = vmatprep.subr.mxu0 0.0
    %2372 = vmatpush1.msra.mxu0 %v2189
    %2373 = vmatprep.subr.mxu0 0.0
    %2374 = vmatpush1.msra.mxu0 %v2190
    %2375 = vmatprep.subr.mxu0 0.0
    %2376 = vmatpush1.msra.mxu0 %v2191
    %2377 = vmatprep.subr.mxu0 0.0
    %2378 = vmatpush1.msra.mxu0 %v2192
    %2379 = vmatprep.subr.mxu0 0.0
    %2380 = vmatpush1.msra.mxu0 %v2193
    %2381 = vmatprep.subr.mxu0 0.0
    %2382 = vmatpush1.msra.mxu0 %v2194
    %2383 = vmatprep.subr.mxu0 0.0
    %2384 = vmatpush1.msra.mxu0 %v2195
    %2385 = vmatprep.subr.mxu0 0.0
    %2386 = vmatpush1.msra.mxu0 %v2196
    %2387 = vmatprep.subr.mxu0 0.0
    %2388 = vmatpush1.msra.mxu0 %v2197
    %2389 = vmatprep.subr.mxu0 0.0
    %2390 = vmatpush1.msra.mxu0 %v2198
    %2391 = vmatprep.subr.mxu0 0.0
    %2392 = vmatpush1.msra.mxu0 %v2199
    %2393 = vmatprep.subr.mxu0 0.0
    %2394 = vmatpush1.msra.mxu0 %v2200
    %2395 = vmatprep.subr.mxu0 0.0
    %2396 = vmatpush1.msra.mxu0 %v2201
    %2397 = vmatprep.subr.mxu0 0.0
    %2398 = vmatpush1.msra.mxu0 %v2202
    %2399 = vmatprep.subr.mxu0 0.0
    %2400 = vmatpush1.msra.mxu0 %v2203
    %2401 = vmatprep.subr.mxu0 0.0
    %2402 = vmatpush1.msra.mxu0 0.0
    %2403 = vmatprep.subr.mxu0 0.0
    %2404 = vmatpush1.msra.mxu0 0.0
    %2405 = vmatprep.subr.mxu0 0.0
    %2406 = vmatpush1.msra.mxu0 0.0
    %2407 = vmatprep.subr.mxu0 0.0
    %2408 = vmatpush1.msra.mxu0 0.0
    %2409 = vmatprep.subr.mxu0 0.0
    %2410 = vmatpush1.msra.mxu0 0.0
    %2411 = vmatprep.mubr.f32.mxu0 %v2205
    %2412 = vmatmul.mubr.f32.gmra.mrb[0].mxu0 %v2110
    %v2413 = vpop.f32.mrb[0].mxu0
    %v2414 = vadd.f32 %v2344, %v2413
    %v2415 = vpop.f32.mrb[0].mxu0
    %2416 = vdwg.mxu0
    %v2417 = vadd.f32 %v2112, %v2414
    %2418 = vst [vmem:[%s6] sm:$0xff] %v2417
    %v2419 = vld [vmem:[%s5 + $0x30] sm:$0xff]
    %v2420 = vld [vmem:[%s5 + $0x38] sm:$0xff]
    %v2421 = vld [vmem:[%s5 + $0x40] sm:$0xff]
    %v2422 = vld [vmem:[%s5 + $0x48] sm:$0xff]
    %v2423 = vld [vmem:[%s5 + $0x50] sm:$0xff]
    %v2424 = vld [vmem:[%s5 + $0x58] sm:$0xff]
    %v2425 = vmax.f32 %v2419, 0.0
    %v2426 = vmax.f32 %v2420, 0.0
    %v2427 = vmax.f32 %v2421, 0.0
    %v2428 = vmax.f32 %v2422, 0.0
    %v2429 = vmax.f32 %v2423, 0.0
    %v2430 = vmax.f32 %v2424, 0.0
    %v2431 = vld [vmem:[%s6] sm:$0xff]
    %s2432 = scalar_lea.vmem [#allocation7], 728
    %v2433 = vld [vmem:[%s2432] sm:$0xff]
    %v2434 = vld [vmem:[%s2432 + $0x8] sm:$0xff]
    %v2435 = vld [vmem:[%s2432 + $0x10] sm:$0xff]
    %v2436 = vld [vmem:[%s2432 + $0x18] sm:$0xff]
    %v2437 = vld [vmem:[%s2432 + $0x20] sm:$0xff]
    %v2438 = vld [vmem:[%s2432 + $0x28] sm:$0xff]
    %v2439 = vld [vmem:[%s2432 + $0x30] sm:$0xff]
    %v2440 = vld [vmem:[%s2432 + $0x38] sm:$0xff]
    %v2441 = vld [vmem:[%s2432 + $0x40] sm:$0xff]
    %v2442 = vld [vmem:[%s2432 + $0x48] sm:$0xff]
    %v2443 = vld [vmem:[%s2432 + $0x50] sm:$0xff]
    %v2444 = vld [vmem:[%s2432 + $0x58] sm:$0xff]
    %v2445 = vld [vmem:[%s2432 + $0x60] sm:$0xff]
    %v2446 = vld [vmem:[%s2432 + $0x68] sm:$0xff]
    %v2447 = vld [vmem:[%s2432 + $0x70] sm:$0xff]
    %v2448 = vld [vmem:[%s2432 + $0x78] sm:$0xff]
    %v2449 = vld [vmem:[%s2432 + $0x80] sm:$0xff]
    %v2450 = vld [vmem:[%s2432 + $0x88] sm:$0xff]
    %v2451 = vld [vmem:[%s2432 + $0x90] sm:$0xff]
    %v2452 = vld [vmem:[%s2432 + $0x98] sm:$0xff]
    %v2453 = vld [vmem:[%s2432 + $0xa0] sm:$0xff]
    %v2454 = vld [vmem:[%s2432 + $0xa8] sm:$0xff]
    %v2455 = vld [vmem:[%s2432 + $0xb0] sm:$0xff]
    %v2456 = vld [vmem:[%s2432 + $0xb8] sm:$0xff]
    %v2457 = vld [vmem:[%s2432 + $0xc0] sm:$0xff]
    %v2458 = vld [vmem:[%s2432 + $0xc8] sm:$0xff]
    %v2459 = vld [vmem:[%s2432 + $0xd0] sm:$0xff]
    %v2460 = vld [vmem:[%s2432 + $0xd8] sm:$0xff]
    %v2461 = vld [vmem:[%s2432 + $0xe0] sm:$0xff]
    %v2462 = vld [vmem:[%s2432 + $0xe8] sm:$0xff]
    %v2463 = vld [vmem:[%s2432 + $0xf0] sm:$0xff]
    %v2464 = vld [vmem:[%s2432 + $0xf8] sm:$0xff]
    %v2465 = vld [vmem:[%s2432 + $0x100] sm:$0xff]
    %v2466 = vld [vmem:[%s2432 + $0x108] sm:$0xff]
    %v2467 = vld [vmem:[%s2432 + $0x110] sm:$0xff]
    %v2468 = vld [vmem:[%s2432 + $0x118] sm:$0xff]
    %v2469 = vld [vmem:[%s2432 + $0x120] sm:$0xff]
    %v2470 = vld [vmem:[%s2432 + $0x128] sm:$0xff]
    %v2471 = vld [vmem:[%s2432 + $0x130] sm:$0xff]
    %v2472 = vld [vmem:[%s2432 + $0x138] sm:$0xff]
    %v2473 = vld [vmem:[%s2432 + $0x140] sm:$0xff]
    %v2474 = vld [vmem:[%s2432 + $0x148] sm:$0xff]
    %v2475 = vld [vmem:[%s2432 + $0x150] sm:$0xff]
    %v2476 = vld [vmem:[%s2432 + $0x158] sm:$0xff]
    %v2477 = vld [vmem:[%s2432 + $0x160] sm:$0xff]
    %v2478 = vld [vmem:[%s2432 + $0x168] sm:$0xff]
    %v2479 = vld [vmem:[%s2432 + $0x170] sm:$0xff]
    %v2480 = vld [vmem:[%s2432 + $0x178] sm:$0xff]
    %v2481 = vld [vmem:[%s2432 + $0x180] sm:$0xff]
    %v2482 = vld [vmem:[%s2432 + $0x188] sm:$0xff]
    %v2483 = vld [vmem:[%s2432 + $0x190] sm:$0xff]
    %v2484 = vld [vmem:[%s2432 + $0x198] sm:$0xff]
    %v2485 = vld [vmem:[%s2432 + $0x1a0] sm:$0xff]
    %v2486 = vld [vmem:[%s2432 + $0x1a8] sm:$0xff]
    %v2487 = vld [vmem:[%s2432 + $0x1b0] sm:$0xff]
    %v2488 = vld [vmem:[%s2432 + $0x1b8] sm:$0xff]
    %v2489 = vld [vmem:[%s2432 + $0x1c0] sm:$0xff]
    %v2490 = vld [vmem:[%s2432 + $0x1c8] sm:$0xff]
    %v2491 = vld [vmem:[%s2432 + $0x1d0] sm:$0xff]
    %v2492 = vld [vmem:[%s2432 + $0x1d8] sm:$0xff]
    %v2493 = vld [vmem:[%s2432 + $0x1e0] sm:$0xff]
    %v2494 = vld [vmem:[%s2432 + $0x1e8] sm:$0xff]
    %v2495 = vld [vmem:[%s2432 + $0x1f0] sm:$0xff]
    %v2496 = vld [vmem:[%s2432 + $0x1f8] sm:$0xff]
    %v2497 = vld [vmem:[%s2432 + $0x200] sm:$0xff]
    %v2498 = vld [vmem:[%s2432 + $0x208] sm:$0xff]
    %v2499 = vld [vmem:[%s2432 + $0x210] sm:$0xff]
    %v2500 = vld [vmem:[%s2432 + $0x218] sm:$0xff]
    %v2501 = vld [vmem:[%s2432 + $0x220] sm:$0xff]
    %v2502 = vld [vmem:[%s2432 + $0x228] sm:$0xff]
    %v2503 = vld [vmem:[%s2432 + $0x230] sm:$0xff]
    %v2504 = vld [vmem:[%s2432 + $0x238] sm:$0xff]
    %v2505 = vld [vmem:[%s2432 + $0x240] sm:$0xff]
    %v2506 = vld [vmem:[%s2432 + $0x248] sm:$0xff]
    %v2507 = vld [vmem:[%s2432 + $0x250] sm:$0xff]
    %v2508 = vld [vmem:[%s2432 + $0x258] sm:$0xff]
    %v2509 = vld [vmem:[%s2432 + $0x260] sm:$0xff]
    %v2510 = vld [vmem:[%s2432 + $0x268] sm:$0xff]
    %v2511 = vld [vmem:[%s2432 + $0x270] sm:$0xff]
    %v2512 = vld [vmem:[%s2432 + $0x278] sm:$0xff]
    %v2513 = vld [vmem:[%s2432 + $0x280] sm:$0xff]
    %v2514 = vld [vmem:[%s2432 + $0x288] sm:$0xff]
    %v2515 = vld [vmem:[%s2432 + $0x290] sm:$0xff]
    %v2516 = vld [vmem:[%s2432 + $0x298] sm:$0xff]
    %v2517 = vld [vmem:[%s2432 + $0x2a0] sm:$0xff]
    %v2518 = vld [vmem:[%s2432 + $0x2a8] sm:$0xff]
    %v2519 = vld [vmem:[%s2432 + $0x2b0] sm:$0xff]
    %v2520 = vld [vmem:[%s2432 + $0x2b8] sm:$0xff]
    %v2521 = vld [vmem:[%s2432 + $0x2c0] sm:$0xff]
    %v2522 = vld [vmem:[%s2432 + $0x2c8] sm:$0xff]
    %v2523 = vld [vmem:[%s2432 + $0x2d0] sm:$0xff]
    %v2525 = vsel %vm132, %v2430, 0
    %2527 = vmatprep.subr.mxu0 0.0
    %2528 = vmatpush1.msra.mxu0 %v2433
    %2529 = vmatprep.subr.mxu0 0.0
    %2530 = vmatpush1.msra.mxu0 %v2434
    %2531 = vmatprep.subr.mxu0 0.0
    %2532 = vmatpush1.msra.mxu0 %v2435
    %2533 = vmatprep.subr.mxu0 0.0
    %2534 = vmatpush1.msra.mxu0 %v2436
    %2535 = vmatprep.subr.mxu0 0.0
    %2536 = vmatpush1.msra.mxu0 %v2437
    %2537 = vmatprep.subr.mxu0 0.0
    %2538 = vmatpush1.msra.mxu0 %v2438
    %2539 = vmatprep.subr.mxu0 0.0
    %2540 = vmatpush1.msra.mxu0 %v2439
    %2541 = vmatprep.subr.mxu0 0.0
    %2542 = vmatpush1.msra.mxu0 %v2440
    %2543 = vmatprep.subr.mxu0 0.0
    %2544 = vmatpush1.msra.mxu0 %v2441
    %2545 = vmatprep.subr.mxu0 0.0
    %2546 = vmatpush1.msra.mxu0 %v2442
    %2547 = vmatprep.subr.mxu0 0.0
    %2548 = vmatpush1.msra.mxu0 %v2443
    %2549 = vmatprep.subr.mxu0 0.0
    %2550 = vmatpush1.msra.mxu0 %v2444
    %2551 = vmatprep.subr.mxu0 0.0
    %2552 = vmatpush1.msra.mxu0 %v2445
    %2553 = vmatprep.subr.mxu0 0.0
    %2554 = vmatpush1.msra.mxu0 %v2446
    %2555 = vmatprep.subr.mxu0 0.0
    %2556 = vmatpush1.msra.mxu0 %v2447
    %2557 = vmatprep.subr.mxu0 0.0
    %2558 = vmatpush1.msra.mxu0 %v2448
    %2559 = vmatprep.subr.mxu0 0.0
    %2560 = vmatpush1.msra.mxu0 %v2449
    %2561 = vmatprep.subr.mxu0 0.0
    %2562 = vmatpush1.msra.mxu0 %v2450
    %2563 = vmatprep.subr.mxu0 0.0
    %2564 = vmatpush1.msra.mxu0 %v2451
    %2565 = vmatprep.subr.mxu0 0.0
    %2566 = vmatpush1.msra.mxu0 %v2452
    %2567 = vmatprep.subr.mxu0 0.0
    %2568 = vmatpush1.msra.mxu0 %v2453
    %2569 = vmatprep.subr.mxu0 0.0
    %2570 = vmatpush1.msra.mxu0 %v2454
    %2571 = vmatprep.subr.mxu0 0.0
    %2572 = vmatpush1.msra.mxu0 %v2455
    %2573 = vmatprep.subr.mxu0 0.0
    %2574 = vmatpush1.msra.mxu0 %v2456
    %2575 = vmatprep.subr.mxu0 0.0
    %2576 = vmatpush1.msra.mxu0 %v2457
    %2577 = vmatprep.subr.mxu0 0.0
    %2578 = vmatpush1.msra.mxu0 %v2458
    %2579 = vmatprep.subr.mxu0 0.0
    %2580 = vmatpush1.msra.mxu0 %v2459
    %2581 = vmatprep.subr.mxu0 0.0
    %2582 = vmatpush1.msra.mxu0 %v2460
    %2583 = vmatprep.subr.mxu0 0.0
    %2584 = vmatpush1.msra.mxu0 %v2461
    %2585 = vmatprep.subr.mxu0 0.0
    %2586 = vmatpush1.msra.mxu0 %v2462
    %2587 = vmatprep.subr.mxu0 0.0
    %2588 = vmatpush1.msra.mxu0 %v2463
    %2589 = vmatprep.subr.mxu0 0.0
    %2590 = vmatpush1.msra.mxu0 %v2464
    %2591 = vmatprep.mubr.f32.mxu0 %v2426
    %2592 = vmatmul.mubr.f32.gmra.mrb[0].mxu0 %v2425
    %v2593 = vpop.f32.mrb[0].mxu0
    %v2594 = vadd.f32 0.0, %v2593
    %v2595 = vpop.f32.mrb[0].mxu0
    %2596 = vdwg.mxu0
    %2597 = vmatprep.subr.mxu0 0.0
    %2598 = vmatpush1.msra.mxu0 %v2465
    %2599 = vmatprep.subr.mxu0 0.0
    %2600 = vmatpush1.msra.mxu0 %v2466
    %2601 = vmatprep.subr.mxu0 0.0
    %2602 = vmatpush1.msra.mxu0 %v2467
    %2603 = vmatprep.subr.mxu0 0.0
    %2604 = vmatpush1.msra.mxu0 %v2468
    %2605 = vmatprep.subr.mxu0 0.0
    %2606 = vmatpush1.msra.mxu0 %v2469
    %2607 = vmatprep.subr.mxu0 0.0
    %2608 = vmatpush1.msra.mxu0 %v2470
    %2609 = vmatprep.subr.mxu0 0.0
    %2610 = vmatpush1.msra.mxu0 %v2471
    %2611 = vmatprep.subr.mxu0 0.0
    %2612 = vmatpush1.msra.mxu0 %v2472
    %2613 = vmatprep.subr.mxu0 0.0
    %2614 = vmatpush1.msra.mxu0 %v2473
    %2615 = vmatprep.subr.mxu0 0.0
    %2616 = vmatpush1.msra.mxu0 %v2474
    %2617 = vmatprep.subr.mxu0 0.0
    %2618 = vmatpush1.msra.mxu0 %v2475
    %2619 = vmatprep.subr.mxu0 0.0
    %2620 = vmatpush1.msra.mxu0 %v2476
    %2621 = vmatprep.subr.mxu0 0.0
    %2622 = vmatpush1.msra.mxu0 %v2477
    %2623 = vmatprep.subr.mxu0 0.0
    %2624 = vmatpush1.msra.mxu0 %v2478
    %2625 = vmatprep.subr.mxu0 0.0
    %2626 = vmatpush1.msra.mxu0 %v2479
    %2627 = vmatprep.subr.mxu0 0.0
    %2628 = vmatpush1.msra.mxu0 %v2480
    %2629 = vmatprep.subr.mxu0 0.0
    %2630 = vmatpush1.msra.mxu0 %v2481
    %2631 = vmatprep.subr.mxu0 0.0
    %2632 = vmatpush1.msra.mxu0 %v2482
    %2633 = vmatprep.subr.mxu0 0.0
    %2634 = vmatpush1.msra.mxu0 %v2483
    %2635 = vmatprep.subr.mxu0 0.0
    %2636 = vmatpush1.msra.mxu0 %v2484
    %2637 = vmatprep.subr.mxu0 0.0
    %2638 = vmatpush1.msra.mxu0 %v2485
    %2639 = vmatprep.subr.mxu0 0.0
    %2640 = vmatpush1.msra.mxu0 %v2486
    %2641 = vmatprep.subr.mxu0 0.0
    %2642 = vmatpush1.msra.mxu0 %v2487
    %2643 = vmatprep.subr.mxu0 0.0
    %2644 = vmatpush1.msra.mxu0 %v2488
    %2645 = vmatprep.subr.mxu0 0.0
    %2646 = vmatpush1.msra.mxu0 %v2489
    %2647 = vmatprep.subr.mxu0 0.0
    %2648 = vmatpush1.msra.mxu0 %v2490
    %2649 = vmatprep.subr.mxu0 0.0
    %2650 = vmatpush1.msra.mxu0 %v2491
    %2651 = vmatprep.subr.mxu0 0.0
    %2652 = vmatpush1.msra.mxu0 %v2492
    %2653 = vmatprep.subr.mxu0 0.0
    %2654 = vmatpush1.msra.mxu0 %v2493
    %2655 = vmatprep.subr.mxu0 0.0
    %2656 = vmatpush1.msra.mxu0 %v2494
    %2657 = vmatprep.subr.mxu0 0.0
    %2658 = vmatpush1.msra.mxu0 %v2495
    %2659 = vmatprep.subr.mxu0 0.0
    %2660 = vmatpush1.msra.mxu0 %v2496
    %2661 = vmatprep.mubr.f32.mxu0 %v2428
    %2662 = vmatmul.mubr.f32.gmra.mrb[0].mxu0 %v2427
    %v2663 = vpop.f32.mrb[0].mxu0
    %v2664 = vadd.f32 %v2594, %v2663
    %v2665 = vpop.f32.mrb[0].mxu0
    %2666 = vdwg.mxu0
    %2667 = vmatprep.subr.mxu0 0.0
    %2668 = vmatpush1.msra.mxu0 %v2497
    %2669 = vmatprep.subr.mxu0 0.0
    %2670 = vmatpush1.msra.mxu0 %v2498
    %2671 = vmatprep.subr.mxu0 0.0
    %2672 = vmatpush1.msra.mxu0 %v2499
    %2673 = vmatprep.subr.mxu0 0.0
    %2674 = vmatpush1.msra.mxu0 %v2500
    %2675 = vmatprep.subr.mxu0 0.0
    %2676 = vmatpush1.msra.mxu0 %v2501
    %2677 = vmatprep.subr.mxu0 0.0
    %2678 = vmatpush1.msra.mxu0 %v2502
    %2679 = vmatprep.subr.mxu0 0.0
    %2680 = vmatpush1.msra.mxu0 %v2503
    %2681 = vmatprep.subr.mxu0 0.0
    %2682 = vmatpush1.msra.mxu0 %v2504
    %2683 = vmatprep.subr.mxu0 0.0
    %2684 = vmatpush1.msra.mxu0 %v2505
    %2685 = vmatprep.subr.mxu0 0.0
    %2686 = vmatpush1.msra.mxu0 %v2506
    %2687 = vmatprep.subr.mxu0 0.0
    %2688 = vmatpush1.msra.mxu0 %v2507
    %2689 = vmatprep.subr.mxu0 0.0
    %2690 = vmatpush1.msra.mxu0 %v2508
    %2691 = vmatprep.subr.mxu0 0.0
    %2692 = vmatpush1.msra.mxu0 %v2509
    %2693 = vmatprep.subr.mxu0 0.0
    %2694 = vmatpush1.msra.mxu0 %v2510
    %2695 = vmatprep.subr.mxu0 0.0
    %2696 = vmatpush1.msra.mxu0 %v2511
    %2697 = vmatprep.subr.mxu0 0.0
    %2698 = vmatpush1.msra.mxu0 %v2512
    %2699 = vmatprep.subr.mxu0 0.0
    %2700 = vmatpush1.msra.mxu0 %v2513
    %2701 = vmatprep.subr.mxu0 0.0
    %2702 = vmatpush1.msra.mxu0 %v2514
    %2703 = vmatprep.subr.mxu0 0.0
    %2704 = vmatpush1.msra.mxu0 %v2515
    %2705 = vmatprep.subr.mxu0 0.0
    %2706 = vmatpush1.msra.mxu0 %v2516
    %2707 = vmatprep.subr.mxu0 0.0
    %2708 = vmatpush1.msra.mxu0 %v2517
    %2709 = vmatprep.subr.mxu0 0.0
    %2710 = vmatpush1.msra.mxu0 %v2518
    %2711 = vmatprep.subr.mxu0 0.0
    %2712 = vmatpush1.msra.mxu0 %v2519
    %2713 = vmatprep.subr.mxu0 0.0
    %2714 = vmatpush1.msra.mxu0 %v2520
    %2715 = vmatprep.subr.mxu0 0.0
    %2716 = vmatpush1.msra.mxu0 %v2521
    %2717 = vmatprep.subr.mxu0 0.0
    %2718 = vmatpush1.msra.mxu0 %v2522
    %2719 = vmatprep.subr.mxu0 0.0
    %2720 = vmatpush1.msra.mxu0 %v2523
    %2721 = vmatprep.subr.mxu0 0.0
    %2722 = vmatpush1.msra.mxu0 0.0
    %2723 = vmatprep.subr.mxu0 0.0
    %2724 = vmatpush1.msra.mxu0 0.0
    %2725 = vmatprep.subr.mxu0 0.0
    %2726 = vmatpush1.msra.mxu0 0.0
    %2727 = vmatprep.subr.mxu0 0.0
    %2728 = vmatpush1.msra.mxu0 0.0
    %2729 = vmatprep.subr.mxu0 0.0
    %2730 = vmatpush1.msra.mxu0 0.0
    %2731 = vmatprep.mubr.f32.mxu0 %v2525
    %2732 = vmatmul.mubr.f32.gmra.mrb[0].mxu0 %v2429
    %v2733 = vpop.f32.mrb[0].mxu0
    %v2734 = vadd.f32 %v2664, %v2733
    %v2735 = vpop.f32.mrb[0].mxu0
    %2736 = vdwg.mxu0
    %v2737 = vadd.f32 %v2431, %v2734
    %2738 = vst [vmem:[%s6] sm:$0xff] %v2737
    %v2739 = vld [vmem:[%s5 + $0x60] sm:$0xff]
    %v2740 = vld [vmem:[%s5 + $0x68] sm:$0xff]
    %v2741 = vld [vmem:[%s5 + $0x70] sm:$0xff]
    %v2742 = vld [vmem:[%s5 + $0x78] sm:$0xff]
    %v2743 = vld [vmem:[%s5 + $0x80] sm:$0xff]
    %v2744 = vld [vmem:[%s5 + $0x88] sm:$0xff]
    %v2745 = vmax.f32 %v2739, 0.0
    %v2746 = vmax.f32 %v2740, 0.0
    %v2747 = vmax.f32 %v2741, 0.0
    %v2748 = vmax.f32 %v2742, 0.0
    %v2749 = vmax.f32 %v2743, 0.0
    %v2750 = vmax.f32 %v2744, 0.0
    %v2751 = vld [vmem:[%s6] sm:$0xff]
    %s2752 = scalar_lea.vmem [#allocation7], 1456
    %v2753 = vld [vmem:[%s2752] sm:$0xff]
    %v2754 = vld [vmem:[%s2752 + $0x8] sm:$0xff]
    %v2755 = vld [vmem:[%s2752 + $0x10] sm:$0xff]
    %v2756 = vld [vmem:[%s2752 + $0x18] sm:$0xff]
    %v2757 = vld [vmem:[%s2752 + $0x20] sm:$0xff]
    %v2758 = vld [vmem:[%s2752 + $0x28] sm:$0xff]
    %v2759 = vld [vmem:[%s2752 + $0x30] sm:$0xff]
    %v2760 = vld [vmem:[%s2752 + $0x38] sm:$0xff]
    %v2761 = vld [vmem:[%s2752 + $0x40] sm:$0xff]
    %v2762 = vld [vmem:[%s2752 + $0x48] sm:$0xff]
    %v2763 = vld [vmem:[%s2752 + $0x50] sm:$0xff]
    %v2764 = vld [vmem:[%s2752 + $0x58] sm:$0xff]
    %v2765 = vld [vmem:[%s2752 + $0x60] sm:$0xff]
    %v2766 = vld [vmem:[%s2752 + $0x68] sm:$0xff]
    %v2767 = vld [vmem:[%s2752 + $0x70] sm:$0xff]
    %v2768 = vld [vmem:[%s2752 + $0x78] sm:$0xff]
    %v2769 = vld [vmem:[%s2752 + $0x80] sm:$0xff]
    %v2770 = vld [vmem:[%s2752 + $0x88] sm:$0xff]
    %v2771 = vld [vmem:[%s2752 + $0x90] sm:$0xff]
    %v2772 = vld [vmem:[%s2752 + $0x98] sm:$0xff]
    %v2773 = vld [vmem:[%s2752 + $0xa0] sm:$0xff]
    %v2774 = vld [vmem:[%s2752 + $0xa8] sm:$0xff]
    %v2775 = vld [vmem:[%s2752 + $0xb0] sm:$0xff]
    %v2776 = vld [vmem:[%s2752 + $0xb8] sm:$0xff]
    %v2777 = vld [vmem:[%s2752 + $0xc0] sm:$0xff]
    %v2778 = vld [vmem:[%s2752 + $0xc8] sm:$0xff]
    %v2779 = vld [vmem:[%s2752 + $0xd0] sm:$0xff]
    %v2780 = vld [vmem:[%s2752 + $0xd8] sm:$0xff]
    %v2781 = vld [vmem:[%s2752 + $0xe0] sm:$0xff]
    %v2782 = vld [vmem:[%s2752 + $0xe8] sm:$0xff]
    %v2783 = vld [vmem:[%s2752 + $0xf0] sm:$0xff]
    %v2784 = vld [vmem:[%s2752 + $0xf8] sm:$0xff]
    %v2785 = vld [vmem:[%s2752 + $0x100] sm:$0xff]
    %v2786 = vld [vmem:[%s2752 + $0x108] sm:$0xff]
    %v2787 = vld [vmem:[%s2752 + $0x110] sm:$0xff]
    %v2788 = vld [vmem:[%s2752 + $0x118] sm:$0xff]
    %v2789 = vld [vmem:[%s2752 + $0x120] sm:$0xff]
    %v2790 = vld [vmem:[%s2752 + $0x128] sm:$0xff]
    %v2791 = vld [vmem:[%s2752 + $0x130] sm:$0xff]
    %v2792 = vld [vmem:[%s2752 + $0x138] sm:$0xff]
    %v2793 = vld [vmem:[%s2752 + $0x140] sm:$0xff]
    %v2794 = vld [vmem:[%s2752 + $0x148] sm:$0xff]
    %v2795 = vld [vmem:[%s2752 + $0x150] sm:$0xff]
    %v2796 = vld [vmem:[%s2752 + $0x158] sm:$0xff]
    %v2797 = vld [vmem:[%s2752 + $0x160] sm:$0xff]
    %v2798 = vld [vmem:[%s2752 + $0x168] sm:$0xff]
    %v2799 = vld [vmem:[%s2752 + $0x170] sm:$0xff]
    %v2800 = vld [vmem:[%s2752 + $0x178] sm:$0xff]
    %v2801 = vld [vmem:[%s2752 + $0x180] sm:$0xff]
    %v2802 = vld [vmem:[%s2752 + $0x188] sm:$0xff]
    %v2803 = vld [vmem:[%s2752 + $0x190] sm:$0xff]
    %v2804 = vld [vmem:[%s2752 + $0x198] sm:$0xff]
    %v2805 = vld [vmem:[%s2752 + $0x1a0] sm:$0xff]
    %v2806 = vld [vmem:[%s2752 + $0x1a8] sm:$0xff]
    %v2807 = vld [vmem:[%s2752 + $0x1b0] sm:$0xff]
    %v2808 = vld [vmem:[%s2752 + $0x1b8] sm:$0xff]
    %v2809 = vld [vmem:[%s2752 + $0x1c0] sm:$0xff]
    %v2810 = vld [vmem:[%s2752 + $0x1c8] sm:$0xff]
    %v2811 = vld [vmem:[%s2752 + $0x1d0] sm:$0xff]
    %v2812 = vld [vmem:[%s2752 + $0x1d8] sm:$0xff]
    %v2813 = vld [vmem:[%s2752 + $0x1e0] sm:$0xff]
    %v2814 = vld [vmem:[%s2752 + $0x1e8] sm:$0xff]
    %v2815 = vld [vmem:[%s2752 + $0x1f0] sm:$0xff]
    %v2816 = vld [vmem:[%s2752 + $0x1f8] sm:$0xff]
    %v2817 = vld [vmem:[%s2752 + $0x200] sm:$0xff]
    %v2818 = vld [vmem:[%s2752 + $0x208] sm:$0xff]
    %v2819 = vld [vmem:[%s2752 + $0x210] sm:$0xff]
    %v2820 = vld [vmem:[%s2752 + $0x218] sm:$0xff]
    %v2821 = vld [vmem:[%s2752 + $0x220] sm:$0xff]
    %v2822 = vld [vmem:[%s2752 + $0x228] sm:$0xff]
    %v2823 = vld [vmem:[%s2752 + $0x230] sm:$0xff]
    %v2824 = vld [vmem:[%s2752 + $0x238] sm:$0xff]
    %v2825 = vld [vmem:[%s2752 + $0x240] sm:$0xff]
    %v2826 = vld [vmem:[%s2752 + $0x248] sm:$0xff]
    %v2827 = vld [vmem:[%s2752 + $0x250] sm:$0xff]
    %v2828 = vld [vmem:[%s2752 + $0x258] sm:$0xff]
    %v2829 = vld [vmem:[%s2752 + $0x260] sm:$0xff]
    %v2830 = vld [vmem:[%s2752 + $0x268] sm:$0xff]
    %v2831 = vld [vmem:[%s2752 + $0x270] sm:$0xff]
    %v2832 = vld [vmem:[%s2752 + $0x278] sm:$0xff]
    %v2833 = vld [vmem:[%s2752 + $0x280] sm:$0xff]
    %v2834 = vld [vmem:[%s2752 + $0x288] sm:$0xff]
    %v2835 = vld [vmem:[%s2752 + $0x290] sm:$0xff]
    %v2836 = vld [vmem:[%s2752 + $0x298] sm:$0xff]
    %v2837 = vld [vmem:[%s2752 + $0x2a0] sm:$0xff]
    %v2838 = vld [vmem:[%s2752 + $0x2a8] sm:$0xff]
    %v2839 = vld [vmem:[%s2752 + $0x2b0] sm:$0xff]
    %v2840 = vld [vmem:[%s2752 + $0x2b8] sm:$0xff]
    %v2841 = vld [vmem:[%s2752 + $0x2c0] sm:$0xff]
    %v2842 = vld [vmem:[%s2752 + $0x2c8] sm:$0xff]
    %v2843 = vld [vmem:[%s2752 + $0x2d0] sm:$0xff]
    %v2845 = vsel %vm132, %v2750, 0
    %2847 = vmatprep.subr.mxu0 0.0
    %2848 = vmatpush1.msra.mxu0 %v2753
    %2849 = vmatprep.subr.mxu0 0.0
    %2850 = vmatpush1.msra.mxu0 %v2754
    %2851 = vmatprep.subr.mxu0 0.0
    %2852 = vmatpush1.msra.mxu0 %v2755
    %2853 = vmatprep.subr.mxu0 0.0
    %2854 = vmatpush1.msra.mxu0 %v2756
    %2855 = vmatprep.subr.mxu0 0.0
    %2856 = vmatpush1.msra.mxu0 %v2757
    %2857 = vmatprep.subr.mxu0 0.0
    %2858 = vmatpush1.msra.mxu0 %v2758
    %2859 = vmatprep.subr.mxu0 0.0
    %2860 = vmatpush1.msra.mxu0 %v2759
    %2861 = vmatprep.subr.mxu0 0.0
    %2862 = vmatpush1.msra.mxu0 %v2760
    %2863 = vmatprep.subr.mxu0 0.0
    %2864 = vmatpush1.msra.mxu0 %v2761
    %2865 = vmatprep.subr.mxu0 0.0
    %2866 = vmatpush1.msra.mxu0 %v2762
    %2867 = vmatprep.subr.mxu0 0.0
    %2868 = vmatpush1.msra.mxu0 %v2763
    %2869 = vmatprep.subr.mxu0 0.0
    %2870 = vmatpush1.msra.mxu0 %v2764
    %2871 = vmatprep.subr.mxu0 0.0
    %2872 = vmatpush1.msra.mxu0 %v2765
    %2873 = vmatprep.subr.mxu0 0.0
    %2874 = vmatpush1.msra.mxu0 %v2766
    %2875 = vmatprep.subr.mxu0 0.0
    %2876 = vmatpush1.msra.mxu0 %v2767
    %2877 = vmatprep.subr.mxu0 0.0
    %2878 = vmatpush1.msra.mxu0 %v2768
    %2879 = vmatprep.subr.mxu0 0.0
    %2880 = vmatpush1.msra.mxu0 %v2769
    %2881 = vmatprep.subr.mxu0 0.0
    %2882 = vmatpush1.msra.mxu0 %v2770
    %2883 = vmatprep.subr.mxu0 0.0
    %2884 = vmatpush1.msra.mxu0 %v2771
    %2885 = vmatprep.subr.mxu0 0.0
    %2886 = vmatpush1.msra.mxu0 %v2772
    %2887 = vmatprep.subr.mxu0 0.0
    %2888 = vmatpush1.msra.mxu0 %v2773
    %2889 = vmatprep.subr.mxu0 0.0
    %2890 = vmatpush1.msra.mxu0 %v2774
    %2891 = vmatprep.subr.mxu0 0.0
    %2892 = vmatpush1.msra.mxu0 %v2775
    %2893 = vmatprep.subr.mxu0 0.0
    %2894 = vmatpush1.msra.mxu0 %v2776
    %2895 = vmatprep.subr.mxu0 0.0
    %2896 = vmatpush1.msra.mxu0 %v2777
    %2897 = vmatprep.subr.mxu0 0.0
    %2898 = vmatpush1.msra.mxu0 %v2778
    %2899 = vmatprep.subr.mxu0 0.0
    %2900 = vmatpush1.msra.mxu0 %v2779
    %2901 = vmatprep.subr.mxu0 0.0
    %2902 = vmatpush1.msra.mxu0 %v2780
    %2903 = vmatprep.subr.mxu0 0.0
    %2904 = vmatpush1.msra.mxu0 %v2781
    %2905 = vmatprep.subr.mxu0 0.0
    %2906 = vmatpush1.msra.mxu0 %v2782
    %2907 = vmatprep.subr.mxu0 0.0
    %2908 = vmatpush1.msra.mxu0 %v2783
    %2909 = vmatprep.subr.mxu0 0.0
    %2910 = vmatpush1.msra.mxu0 %v2784
    %2911 = vmatprep.mubr.f32.mxu0 %v2746
    %2912 = vmatmul.mubr.f32.gmra.mrb[0].mxu0 %v2745
    %v2913 = vpop.f32.mrb[0].mxu0
    %v2914 = vadd.f32 0.0, %v2913
    %v2915 = vpop.f32.mrb[0].mxu0
    %2916 = vdwg.mxu0
    %2917 = vmatprep.subr.mxu0 0.0
    %2918 = vmatpush1.msra.mxu0 %v2785
    %2919 = vmatprep.subr.mxu0 0.0
    %2920 = vmatpush1.msra.mxu0 %v2786
    %2921 = vmatprep.subr.mxu0 0.0
    %2922 = vmatpush1.msra.mxu0 %v2787
    %2923 = vmatprep.subr.mxu0 0.0
    %2924 = vmatpush1.msra.mxu0 %v2788
    %2925 = vmatprep.subr.mxu0 0.0
    %2926 = vmatpush1.msra.mxu0 %v2789
    %2927 = vmatprep.subr.mxu0 0.0
    %2928 = vmatpush1.msra.mxu0 %v2790
    %2929 = vmatprep.subr.mxu0 0.0
    %2930 = vmatpush1.msra.mxu0 %v2791
    %2931 = vmatprep.subr.mxu0 0.0
    %2932 = vmatpush1.msra.mxu0 %v2792
    %2933 = vmatprep.subr.mxu0 0.0
    %2934 = vmatpush1.msra.mxu0 %v2793
    %2935 = vmatprep.subr.mxu0 0.0
    %2936 = vmatpush1.msra.mxu0 %v2794
    %2937 = vmatprep.subr.mxu0 0.0
    %2938 = vmatpush1.msra.mxu0 %v2795
    %2939 = vmatprep.subr.mxu0 0.0
    %2940 = vmatpush1.msra.mxu0 %v2796
    %2941 = vmatprep.subr.mxu0 0.0
    %2942 = vmatpush1.msra.mxu0 %v2797
    %2943 = vmatprep.subr.mxu0 0.0
    %2944 = vmatpush1.msra.mxu0 %v2798
    %2945 = vmatprep.subr.mxu0 0.0
    %2946 = vmatpush1.msra.mxu0 %v2799
    %2947 = vmatprep.subr.mxu0 0.0
    %2948 = vmatpush1.msra.mxu0 %v2800
    %2949 = vmatprep.subr.mxu0 0.0
    %2950 = vmatpush1.msra.mxu0 %v2801
    %2951 = vmatprep.subr.mxu0 0.0
    %2952 = vmatpush1.msra.mxu0 %v2802
    %2953 = vmatprep.subr.mxu0 0.0
    %2954 = vmatpush1.msra.mxu0 %v2803
    %2955 = vmatprep.subr.mxu0 0.0
    %2956 = vmatpush1.msra.mxu0 %v2804
    %2957 = vmatprep.subr.mxu0 0.0
    %2958 = vmatpush1.msra.mxu0 %v2805
    %2959 = vmatprep.subr.mxu0 0.0
    %2960 = vmatpush1.msra.mxu0 %v2806
    %2961 = vmatprep.subr.mxu0 0.0
    %2962 = vmatpush1.msra.mxu0 %v2807
    %2963 = vmatprep.subr.mxu0 0.0
    %2964 = vmatpush1.msra.mxu0 %v2808
    %2965 = vmatprep.subr.mxu0 0.0
    %2966 = vmatpush1.msra.mxu0 %v2809
    %2967 = vmatprep.subr.mxu0 0.0
    %2968 = vmatpush1.msra.mxu0 %v2810
    %2969 = vmatprep.subr.mxu0 0.0
    %2970 = vmatpush1.msra.mxu0 %v2811
    %2971 = vmatprep.subr.mxu0 0.0
    %2972 = vmatpush1.msra.mxu0 %v2812
    %2973 = vmatprep.subr.mxu0 0.0
    %2974 = vmatpush1.msra.mxu0 %v2813
    %2975 = vmatprep.subr.mxu0 0.0
    %2976 = vmatpush1.msra.mxu0 %v2814
    %2977 = vmatprep.subr.mxu0 0.0
    %2978 = vmatpush1.msra.mxu0 %v2815
    %2979 = vmatprep.subr.mxu0 0.0
    %2980 = vmatpush1.msra.mxu0 %v2816
    %2981 = vmatprep.mubr.f32.mxu0 %v2748
    %2982 = vmatmul.mubr.f32.gmra.mrb[0].mxu0 %v2747
    %v2983 = vpop.f32.mrb[0].mxu0
    %v2984 = vadd.f32 %v2914, %v2983
    %v2985 = vpop.f32.mrb[0].mxu0
    %2986 = vdwg.mxu0
    %2987 = vmatprep.subr.mxu0 0.0
    %2988 = vmatpush1.msra.mxu0 %v2817
    %2989 = vmatprep.subr.mxu0 0.0
    %2990 = vmatpush1.msra.mxu0 %v2818
    %2991 = vmatprep.subr.mxu0 0.0
    %2992 = vmatpush1.msra.mxu0 %v2819
    %2993 = vmatprep.subr.mxu0 0.0
    %2994 = vmatpush1.msra.mxu0 %v2820
    %2995 = vmatprep.subr.mxu0 0.0
    %2996 = vmatpush1.msra.mxu0 %v2821
    %2997 = vmatprep.subr.mxu0 0.0
    %2998 = vmatpush1.msra.mxu0 %v2822
    %2999 = vmatprep.subr.mxu0 0.0
    %3000 = vmatpush1.msra.mxu0 %v2823
    %3001 = vmatprep.subr.mxu0 0.0
    %3002 = vmatpush1.msra.mxu0 %v2824
    %3003 = vmatprep.subr.mxu0 0.0
    %3004 = vmatpush1.msra.mxu0 %v2825
    %3005 = vmatprep.subr.mxu0 0.0
    %3006 = vmatpush1.msra.mxu0 %v2826
    %3007 = vmatprep.subr.mxu0 0.0
    %3008 = vmatpush1.msra.mxu0 %v2827
    %3009 = vmatprep.subr.mxu0 0.0
    %3010 = vmatpush1.msra.mxu0 %v2828
    %3011 = vmatprep.subr.mxu0 0.0
    %3012 = vmatpush1.msra.mxu0 %v2829
    %3013 = vmatprep.subr.mxu0 0.0
    %3014 = vmatpush1.msra.mxu0 %v2830
    %3015 = vmatprep.subr.mxu0 0.0
    %3016 = vmatpush1.msra.mxu0 %v2831
    %3017 = vmatprep.subr.mxu0 0.0
    %3018 = vmatpush1.msra.mxu0 %v2832
    %3019 = vmatprep.subr.mxu0 0.0
    %3020 = vmatpush1.msra.mxu0 %v2833
    %3021 = vmatprep.subr.mxu0 0.0
    %3022 = vmatpush1.msra.mxu0 %v2834
    %3023 = vmatprep.subr.mxu0 0.0
    %3024 = vmatpush1.msra.mxu0 %v2835
    %3025 = vmatprep.subr.mxu0 0.0
    %3026 = vmatpush1.msra.mxu0 %v2836
    %3027 = vmatprep.subr.mxu0 0.0
    %3028 = vmatpush1.msra.mxu0 %v2837
    %3029 = vmatprep.subr.mxu0 0.0
    %3030 = vmatpush1.msra.mxu0 %v2838
    %3031 = vmatprep.subr.mxu0 0.0
    %3032 = vmatpush1.msra.mxu0 %v2839
    %3033 = vmatprep.subr.mxu0 0.0
    %3034 = vmatpush1.msra.mxu0 %v2840
    %3035 = vmatprep.subr.mxu0 0.0
    %3036 = vmatpush1.msra.mxu0 %v2841
    %3037 = vmatprep.subr.mxu0 0.0
    %3038 = vmatpush1.msra.mxu0 %v2842
    %3039 = vmatprep.subr.mxu0 0.0
    %3040 = vmatpush1.msra.mxu0 %v2843
    %3041 = vmatprep.subr.mxu0 0.0
    %3042 = vmatpush1.msra.mxu0 0.0
    %3043 = vmatprep.subr.mxu0 0.0
    %3044 = vmatpush1.msra.mxu0 0.0
    %3045 = vmatprep.subr.mxu0 0.0
    %3046 = vmatpush1.msra.mxu0 0.0
    %3047 = vmatprep.subr.mxu0 0.0
    %3048 = vmatpush1.msra.mxu0 0.0
    %3049 = vmatprep.subr.mxu0 0.0
    %3050 = vmatpush1.msra.mxu0 0.0
    %3051 = vmatprep.mubr.f32.mxu0 %v2845
    %3052 = vmatmul.mubr.f32.gmra.mrb[0].mxu0 %v2749
    %v3053 = vpop.f32.mrb[0].mxu0
    %v3054 = vadd.f32 %v2984, %v3053
    %v3055 = vpop.f32.mrb[0].mxu0
    %3056 = vdwg.mxu0
    %v3057 = vadd.f32 %v2751, %v3054
    %3058 = vst [vmem:[%s6] sm:$0xff] %v3057
    %v3059 = vld [vmem:[%s5 + $0x90] sm:$0xff]
    %v3060 = vld [vmem:[%s5 + $0x98] sm:$0xff]
    %v3061 = vld [vmem:[%s5 + $0xa0] sm:$0xff]
    %v3062 = vld [vmem:[%s5 + $0xa8] sm:$0xff]
    %v3063 = vld [vmem:[%s5 + $0xb0] sm:$0xff]
    %v3064 = vld [vmem:[%s5 + $0xb8] sm:$0xff]
    %v3065 = vmax.f32 %v3059, 0.0
    %v3066 = vmax.f32 %v3060, 0.0
    %v3067 = vmax.f32 %v3061, 0.0
    %v3068 = vmax.f32 %v3062, 0.0
    %v3069 = vmax.f32 %v3063, 0.0
    %v3070 = vmax.f32 %v3064, 0.0
    %v3071 = vld [vmem:[%s6] sm:$0xff]
    %s3072 = scalar_lea.vmem [#allocation7], 2184
    %v3073 = vld [vmem:[%s3072] sm:$0xff]
    %v3074 = vld [vmem:[%s3072 + $0x8] sm:$0xff]
    %v3075 = vld [vmem:[%s3072 + $0x10] sm:$0xff]
    %v3076 = vld [vmem:[%s3072 + $0x18] sm:$0xff]
    %v3077 = vld [vmem:[%s3072 + $0x20] sm:$0xff]
    %v3078 = vld [vmem:[%s3072 + $0x28] sm:$0xff]
    %v3079 = vld [vmem:[%s3072 + $0x30] sm:$0xff]
    %v3080 = vld [vmem:[%s3072 + $0x38] sm:$0xff]
    %v3081 = vld [vmem:[%s3072 + $0x40] sm:$0xff]
    %v3082 = vld [vmem:[%s3072 + $0x48] sm:$0xff]
    %v3083 = vld [vmem:[%s3072 + $0x50] sm:$0xff]
    %v3084 = vld [vmem:[%s3072 + $0x58] sm:$0xff]
    %v3085 = vld [vmem:[%s3072 + $0x60] sm:$0xff]
    %v3086 = vld [vmem:[%s3072 + $0x68] sm:$0xff]
    %v3087 = vld [vmem:[%s3072 + $0x70] sm:$0xff]
    %v3088 = vld [vmem:[%s3072 + $0x78] sm:$0xff]
    %v3089 = vld [vmem:[%s3072 + $0x80] sm:$0xff]
    %v3090 = vld [vmem:[%s3072 + $0x88] sm:$0xff]
    %v3091 = vld [vmem:[%s3072 + $0x90] sm:$0xff]
    %v3092 = vld [vmem:[%s3072 + $0x98] sm:$0xff]
    %v3093 = vld [vmem:[%s3072 + $0xa0] sm:$0xff]
    %v3094 = vld [vmem:[%s3072 + $0xa8] sm:$0xff]
    %v3095 = vld [vmem:[%s3072 + $0xb0] sm:$0xff]
    %v3096 = vld [vmem:[%s3072 + $0xb8] sm:$0xff]
    %v3097 = vld [vmem:[%s3072 + $0xc0] sm:$0xff]
    %v3098 = vld [vmem:[%s3072 + $0xc8] sm:$0xff]
    %v3099 = vld [vmem:[%s3072 + $0xd0] sm:$0xff]
    %v3100 = vld [vmem:[%s3072 + $0xd8] sm:$0xff]
    %v3101 = vld [vmem:[%s3072 + $0xe0] sm:$0xff]
    %v3102 = vld [vmem:[%s3072 + $0xe8] sm:$0xff]
    %v3103 = vld [vmem:[%s3072 + $0xf0] sm:$0xff]
    %v3104 = vld [vmem:[%s3072 + $0xf8] sm:$0xff]
    %v3105 = vld [vmem:[%s3072 + $0x100] sm:$0xff]
    %v3106 = vld [vmem:[%s3072 + $0x108] sm:$0xff]
    %v3107 = vld [vmem:[%s3072 + $0x110] sm:$0xff]
    %v3108 = vld [vmem:[%s3072 + $0x118] sm:$0xff]
    %v3109 = vld [vmem:[%s3072 + $0x120] sm:$0xff]
    %v3110 = vld [vmem:[%s3072 + $0x128] sm:$0xff]
    %v3111 = vld [vmem:[%s3072 + $0x130] sm:$0xff]
    %v3112 = vld [vmem:[%s3072 + $0x138] sm:$0xff]
    %v3113 = vld [vmem:[%s3072 + $0x140] sm:$0xff]
    %v3114 = vld [vmem:[%s3072 + $0x148] sm:$0xff]
    %v3115 = vld [vmem:[%s3072 + $0x150] sm:$0xff]
    %v3116 = vld [vmem:[%s3072 + $0x158] sm:$0xff]
    %v3117 = vld [vmem:[%s3072 + $0x160] sm:$0xff]
    %v3118 = vld [vmem:[%s3072 + $0x168] sm:$0xff]
    %v3119 = vld [vmem:[%s3072 + $0x170] sm:$0xff]
    %v3120 = vld [vmem:[%s3072 + $0x178] sm:$0xff]
    %v3121 = vld [vmem:[%s3072 + $0x180] sm:$0xff]
    %v3122 = vld [vmem:[%s3072 + $0x188] sm:$0xff]
    %v3123 = vld [vmem:[%s3072 + $0x190] sm:$0xff]
    %v3124 = vld [vmem:[%s3072 + $0x198] sm:$0xff]
    %v3125 = vld [vmem:[%s3072 + $0x1a0] sm:$0xff]
    %v3126 = vld [vmem:[%s3072 + $0x1a8] sm:$0xff]
    %v3127 = vld [vmem:[%s3072 + $0x1b0] sm:$0xff]
    %v3128 = vld [vmem:[%s3072 + $0x1b8] sm:$0xff]
    %v3129 = vld [vmem:[%s3072 + $0x1c0] sm:$0xff]
    %v3130 = vld [vmem:[%s3072 + $0x1c8] sm:$0xff]
    %v3131 = vld [vmem:[%s3072 + $0x1d0] sm:$0xff]
    %v3132 = vld [vmem:[%s3072 + $0x1d8] sm:$0xff]
    %v3133 = vld [vmem:[%s3072 + $0x1e0] sm:$0xff]
    %v3134 = vld [vmem:[%s3072 + $0x1e8] sm:$0xff]
    %v3135 = vld [vmem:[%s3072 + $0x1f0] sm:$0xff]
    %v3136 = vld [vmem:[%s3072 + $0x1f8] sm:$0xff]
    %v3137 = vld [vmem:[%s3072 + $0x200] sm:$0xff]
    %v3138 = vld [vmem:[%s3072 + $0x208] sm:$0xff]
    %v3139 = vld [vmem:[%s3072 + $0x210] sm:$0xff]
    %v3140 = vld [vmem:[%s3072 + $0x218] sm:$0xff]
    %v3141 = vld [vmem:[%s3072 + $0x220] sm:$0xff]
    %v3142 = vld [vmem:[%s3072 + $0x228] sm:$0xff]
    %v3143 = vld [vmem:[%s3072 + $0x230] sm:$0xff]
    %v3144 = vld [vmem:[%s3072 + $0x238] sm:$0xff]
    %v3145 = vld [vmem:[%s3072 + $0x240] sm:$0xff]
    %v3146 = vld [vmem:[%s3072 + $0x248] sm:$0xff]
    %v3147 = vld [vmem:[%s3072 + $0x250] sm:$0xff]
    %v3148 = vld [vmem:[%s3072 + $0x258] sm:$0xff]
    %v3149 = vld [vmem:[%s3072 + $0x260] sm:$0xff]
    %v3150 = vld [vmem:[%s3072 + $0x268] sm:$0xff]
    %v3151 = vld [vmem:[%s3072 + $0x270] sm:$0xff]
    %v3152 = vld [vmem:[%s3072 + $0x278] sm:$0xff]
    %v3153 = vld [vmem:[%s3072 + $0x280] sm:$0xff]
    %v3154 = vld [vmem:[%s3072 + $0x288] sm:$0xff]
    %v3155 = vld [vmem:[%s3072 + $0x290] sm:$0xff]
    %v3156 = vld [vmem:[%s3072 + $0x298] sm:$0xff]
    %v3157 = vld [vmem:[%s3072 + $0x2a0] sm:$0xff]
    %v3158 = vld [vmem:[%s3072 + $0x2a8] sm:$0xff]
    %v3159 = vld [vmem:[%s3072 + $0x2b0] sm:$0xff]
    %v3160 = vld [vmem:[%s3072 + $0x2b8] sm:$0xff]
    %v3161 = vld [vmem:[%s3072 + $0x2c0] sm:$0xff]
    %v3162 = vld [vmem:[%s3072 + $0x2c8] sm:$0xff]
    %v3163 = vld [vmem:[%s3072 + $0x2d0] sm:$0xff]
    %v3165 = vsel %vm132, %v3070, 0
    %3167 = vmatprep.subr.mxu0 0.0
    %3168 = vmatpush1.msra.mxu0 %v3073
    %3169 = vmatprep.subr.mxu0 0.0
    %3170 = vmatpush1.msra.mxu0 %v3074
    %3171 = vmatprep.subr.mxu0 0.0
    %3172 = vmatpush1.msra.mxu0 %v3075
    %3173 = vmatprep.subr.mxu0 0.0
    %3174 = vmatpush1.msra.mxu0 %v3076
    %3175 = vmatprep.subr.mxu0 0.0
    %3176 = vmatpush1.msra.mxu0 %v3077
    %3177 = vmatprep.subr.mxu0 0.0
    %3178 = vmatpush1.msra.mxu0 %v3078
    %3179 = vmatprep.subr.mxu0 0.0
    %3180 = vmatpush1.msra.mxu0 %v3079
    %3181 = vmatprep.subr.mxu0 0.0
    %3182 = vmatpush1.msra.mxu0 %v3080
    %3183 = vmatprep.subr.mxu0 0.0
    %3184 = vmatpush1.msra.mxu0 %v3081
    %3185 = vmatprep.subr.mxu0 0.0
    %3186 = vmatpush1.msra.mxu0 %v3082
    %3187 = vmatprep.subr.mxu0 0.0
    %3188 = vmatpush1.msra.mxu0 %v3083
    %3189 = vmatprep.subr.mxu0 0.0
    %3190 = vmatpush1.msra.mxu0 %v3084
    %3191 = vmatprep.subr.mxu0 0.0
    %3192 = vmatpush1.msra.mxu0 %v3085
    %3193 = vmatprep.subr.mxu0 0.0
    %3194 = vmatpush1.msra.mxu0 %v3086
    %3195 = vmatprep.subr.mxu0 0.0
    %3196 = vmatpush1.msra.mxu0 %v3087
    %3197 = vmatprep.subr.mxu0 0.0
    %3198 = vmatpush1.msra.mxu0 %v3088
    %3199 = vmatprep.subr.mxu0 0.0
    %3200 = vmatpush1.msra.mxu0 %v3089
    %3201 = vmatprep.subr.mxu0 0.0
    %3202 = vmatpush1.msra.mxu0 %v3090
    %3203 = vmatprep.subr.mxu0 0.0
    %3204 = vmatpush1.msra.mxu0 %v3091
    %3205 = vmatprep.subr.mxu0 0.0
    %3206 = vmatpush1.msra.mxu0 %v3092
    %3207 = vmatprep.subr.mxu0 0.0
    %3208 = vmatpush1.msra.mxu0 %v3093
    %3209 = vmatprep.subr.mxu0 0.0
    %3210 = vmatpush1.msra.mxu0 %v3094
    %3211 = vmatprep.subr.mxu0 0.0
    %3212 = vmatpush1.msra.mxu0 %v3095
    %3213 = vmatprep.subr.mxu0 0.0
    %3214 = vmatpush1.msra.mxu0 %v3096
    %3215 = vmatprep.subr.mxu0 0.0
    %3216 = vmatpush1.msra.mxu0 %v3097
    %3217 = vmatprep.subr.mxu0 0.0
    %3218 = vmatpush1.msra.mxu0 %v3098
    %3219 = vmatprep.subr.mxu0 0.0
    %3220 = vmatpush1.msra.mxu0 %v3099
    %3221 = vmatprep.subr.mxu0 0.0
    %3222 = vmatpush1.msra.mxu0 %v3100
    %3223 = vmatprep.subr.mxu0 0.0
    %3224 = vmatpush1.msra.mxu0 %v3101
    %3225 = vmatprep.subr.mxu0 0.0
    %3226 = vmatpush1.msra.mxu0 %v3102
    %3227 = vmatprep.subr.mxu0 0.0
    %3228 = vmatpush1.msra.mxu0 %v3103
    %3229 = vmatprep.subr.mxu0 0.0
    %3230 = vmatpush1.msra.mxu0 %v3104
    %3231 = vmatprep.mubr.f32.mxu0 %v3066
    %3232 = vmatmul.mubr.f32.gmra.mrb[0].mxu0 %v3065
    %v3233 = vpop.f32.mrb[0].mxu0
    %v3234 = vadd.f32 0.0, %v3233
    %v3235 = vpop.f32.mrb[0].mxu0
    %3236 = vdwg.mxu0
    %3237 = vmatprep.subr.mxu0 0.0
    %3238 = vmatpush1.msra.mxu0 %v3105
    %3239 = vmatprep.subr.mxu0 0.0
    %3240 = vmatpush1.msra.mxu0 %v3106
    %3241 = vmatprep.subr.mxu0 0.0
    %3242 = vmatpush1.msra.mxu0 %v3107
    %3243 = vmatprep.subr.mxu0 0.0
    %3244 = vmatpush1.msra.mxu0 %v3108
    %3245 = vmatprep.subr.mxu0 0.0
    %3246 = vmatpush1.msra.mxu0 %v3109
    %3247 = vmatprep.subr.mxu0 0.0
    %3248 = vmatpush1.msra.mxu0 %v3110
    %3249 = vmatprep.subr.mxu0 0.0
    %3250 = vmatpush1.msra.mxu0 %v3111
    %3251 = vmatprep.subr.mxu0 0.0
    %3252 = vmatpush1.msra.mxu0 %v3112
    %3253 = vmatprep.subr.mxu0 0.0
    %3254 = vmatpush1.msra.mxu0 %v3113
    %3255 = vmatprep.subr.mxu0 0.0
    %3256 = vmatpush1.msra.mxu0 %v3114
    %3257 = vmatprep.subr.mxu0 0.0
    %3258 = vmatpush1.msra.mxu0 %v3115
    %3259 = vmatprep.subr.mxu0 0.0
    %3260 = vmatpush1.msra.mxu0 %v3116
    %3261 = vmatprep.subr.mxu0 0.0
    %3262 = vmatpush1.msra.mxu0 %v3117
    %3263 = vmatprep.subr.mxu0 0.0
    %3264 = vmatpush1.msra.mxu0 %v3118
    %3265 = vmatprep.subr.mxu0 0.0
    %3266 = vmatpush1.msra.mxu0 %v3119
    %3267 = vmatprep.subr.mxu0 0.0
    %3268 = vmatpush1.msra.mxu0 %v3120
    %3269 = vmatprep.subr.mxu0 0.0
    %3270 = vmatpush1.msra.mxu0 %v3121
    %3271 = vmatprep.subr.mxu0 0.0
    %3272 = vmatpush1.msra.mxu0 %v3122
    %3273 = vmatprep.subr.mxu0 0.0
    %3274 = vmatpush1.msra.mxu0 %v3123
    %3275 = vmatprep.subr.mxu0 0.0
    %3276 = vmatpush1.msra.mxu0 %v3124
    %3277 = vmatprep.subr.mxu0 0.0
    %3278 = vmatpush1.msra.mxu0 %v3125
    %3279 = vmatprep.subr.mxu0 0.0
    %3280 = vmatpush1.msra.mxu0 %v3126
    %3281 = vmatprep.subr.mxu0 0.0
    %3282 = vmatpush1.msra.mxu0 %v3127
    %3283 = vmatprep.subr.mxu0 0.0
    %3284 = vmatpush1.msra.mxu0 %v3128
    %3285 = vmatprep.subr.mxu0 0.0
    %3286 = vmatpush1.msra.mxu0 %v3129
    %3287 = vmatprep.subr.mxu0 0.0
    %3288 = vmatpush1.msra.mxu0 %v3130
    %3289 = vmatprep.subr.mxu0 0.0
    %3290 = vmatpush1.msra.mxu0 %v3131
    %3291 = vmatprep.subr.mxu0 0.0
    %3292 = vmatpush1.msra.mxu0 %v3132
    %3293 = vmatprep.subr.mxu0 0.0
    %3294 = vmatpush1.msra.mxu0 %v3133
    %3295 = vmatprep.subr.mxu0 0.0
    %3296 = vmatpush1.msra.mxu0 %v3134
    %3297 = vmatprep.subr.mxu0 0.0
    %3298 = vmatpush1.msra.mxu0 %v3135
    %3299 = vmatprep.subr.mxu0 0.0
    %3300 = vmatpush1.msra.mxu0 %v3136
    %3301 = vmatprep.mubr.f32.mxu0 %v3068
    %3302 = vmatmul.mubr.f32.gmra.mrb[0].mxu0 %v3067
    %v3303 = vpop.f32.mrb[0].mxu0
    %v3304 = vadd.f32 %v3234, %v3303
    %v3305 = vpop.f32.mrb[0].mxu0
    %3306 = vdwg.mxu0
    %3307 = vmatprep.subr.mxu0 0.0
    %3308 = vmatpush1.msra.mxu0 %v3137
    %3309 = vmatprep.subr.mxu0 0.0
    %3310 = vmatpush1.msra.mxu0 %v3138
    %3311 = vmatprep.subr.mxu0 0.0
    %3312 = vmatpush1.msra.mxu0 %v3139
    %3313 = vmatprep.subr.mxu0 0.0
    %3314 = vmatpush1.msra.mxu0 %v3140
    %3315 = vmatprep.subr.mxu0 0.0
    %3316 = vmatpush1.msra.mxu0 %v3141
    %3317 = vmatprep.subr.mxu0 0.0
    %3318 = vmatpush1.msra.mxu0 %v3142
    %3319 = vmatprep.subr.mxu0 0.0
    %3320 = vmatpush1.msra.mxu0 %v3143
    %3321 = vmatprep.subr.mxu0 0.0
    %3322 = vmatpush1.msra.mxu0 %v3144
    %3323 = vmatprep.subr.mxu0 0.0
    %3324 = vmatpush1.msra.mxu0 %v3145
    %3325 = vmatprep.subr.mxu0 0.0
    %3326 = vmatpush1.msra.mxu0 %v3146
    %3327 = vmatprep.subr.mxu0 0.0
    %3328 = vmatpush1.msra.mxu0 %v3147
    %3329 = vmatprep.subr.mxu0 0.0
    %3330 = vmatpush1.msra.mxu0 %v3148
    %3331 = vmatprep.subr.mxu0 0.0
    %3332 = vmatpush1.msra.mxu0 %v3149
    %3333 = vmatprep.subr.mxu0 0.0
    %3334 = vmatpush1.msra.mxu0 %v3150
    %3335 = vmatprep.subr.mxu0 0.0
    %3336 = vmatpush1.msra.mxu0 %v3151
    %3337 = vmatprep.subr.mxu0 0.0
    %3338 = vmatpush1.msra.mxu0 %v3152
    %3339 = vmatprep.subr.mxu0 0.0
    %3340 = vmatpush1.msra.mxu0 %v3153
    %3341 = vmatprep.subr.mxu0 0.0
    %3342 = vmatpush1.msra.mxu0 %v3154
    %3343 = vmatprep.subr.mxu0 0.0
    %3344 = vmatpush1.msra.mxu0 %v3155
    %3345 = vmatprep.subr.mxu0 0.0
    %3346 = vmatpush1.msra.mxu0 %v3156
    %3347 = vmatprep.subr.mxu0 0.0
    %3348 = vmatpush1.msra.mxu0 %v3157
    %3349 = vmatprep.subr.mxu0 0.0
    %3350 = vmatpush1.msra.mxu0 %v3158
    %3351 = vmatprep.subr.mxu0 0.0
    %3352 = vmatpush1.msra.mxu0 %v3159
    %3353 = vmatprep.subr.mxu0 0.0
    %3354 = vmatpush1.msra.mxu0 %v3160
    %3355 = vmatprep.subr.mxu0 0.0
    %3356 = vmatpush1.msra.mxu0 %v3161
    %3357 = vmatprep.subr.mxu0 0.0
    %3358 = vmatpush1.msra.mxu0 %v3162
    %3359 = vmatprep.subr.mxu0 0.0
    %3360 = vmatpush1.msra.mxu0 %v3163
    %3361 = vmatprep.subr.mxu0 0.0
    %3362 = vmatpush1.msra.mxu0 0.0
    %3363 = vmatprep.subr.mxu0 0.0
    %3364 = vmatpush1.msra.mxu0 0.0
    %3365 = vmatprep.subr.mxu0 0.0
    %3366 = vmatpush1.msra.mxu0 0.0
    %3367 = vmatprep.subr.mxu0 0.0
    %3368 = vmatpush1.msra.mxu0 0.0
    %3369 = vmatprep.subr.mxu0 0.0
    %3370 = vmatpush1.msra.mxu0 0.0
    %3371 = vmatprep.mubr.f32.mxu0 %v3165
    %3372 = vmatmul.mubr.f32.gmra.mrb[0].mxu0 %v3069
    %v3373 = vpop.f32.mrb[0].mxu0
    %v3374 = vadd.f32 %v3304, %v3373
    %v3375 = vpop.f32.mrb[0].mxu0
    %3376 = vdwg.mxu0
    %v3377 = vadd.f32 %v3071, %v3374
    %3378 = vst [vmem:[%s6] sm:$0xff] %v3377
    // Predicated region
    $region38: #{cnn_forward.1} parent=1 // pred_check
      _
    $region39: #{cnn_forward.1} parent=1 // pred_check_branch
      %3380 = sbr.rel (0) target = $region41
    $region40: #{cnn_forward.1} parent=1 // pred_region
      _
    $region41: #{cnn_forward.1} parent=1 // pred_fallthru
      _
    // Predicated region
    $region42: #{cnn_forward.1} parent=1 // pred_check
      _
    $region43: #{cnn_forward.1} parent=1 // pred_check_branch
      %3382 = sbr.rel (0) target = $region45
    $region44: #{cnn_forward.1} parent=1 // pred_region
      _
    $region45: #{cnn_forward.1} parent=1 // pred_fallthru
      _
    // Predicated region
    $region46: #{cnn_forward.1} parent=1 // pred_check
      _
    $region47: #{cnn_forward.1} parent=1 // pred_check_branch
      %3384 = sbr.rel (0) target = $region49
    $region48: #{cnn_forward.1} parent=1 // pred_region
      _
    $region49: #{cnn_forward.1} parent=1 // pred_fallthru
      _
    // Predicated region
    $region50: #{cnn_forward.1} parent=1 // pred_check
      _
    $region51: #{cnn_forward.1} parent=1 // pred_check_branch
      %3386 = sbr.rel (0) target = $region53
    $region52: #{cnn_forward.1} parent=1 // pred_region
      _
    $region53: #{cnn_forward.1} parent=1 // pred_fallthru
      _
    %3387 = vsyncpa [#allocation3], 1
    %3388 = vsyncpa [#allocation9], 1
    %3389 = vsyncpa [#allocation4], 1
    %3390 = vsyncpa [#allocation6], 1

</llo_original>
